<compile_context>
chip_gen: v7x
topology: tpu7x:2x2x1
jax: 0.10.0
libtpu: 0.0.40
codegen_flags: <defaults>
</compile_context>

<pallas_src>
import functools

import jax
import jax.numpy as jnp
from jax.experimental import pallas as pl
from jax.experimental.pallas import tpu as pltpu

IN_FEATURES = 28 * 28    # 784  (multiple of 16 -> valid bf16 sublane dim, no K padding)
HIDDEN = 1000
OUT_FEATURES = 10

HID_PAD = 1024           # 8 * 128 lanes
OUT_PAD = 128            # 1 * 128 lanes (lane-dense output stores)

_NEG_LARGE = -1e30       # baked into padded b2 columns -> masks padded logit lanes


def _round_up(n, m):
    return ((n + m - 1) // m) * m


def _pad2(a, rows, cols, value=0.0):
    return jnp.pad(a, ((0, rows - a.shape[0]), (0, cols - a.shape[1])),
                   constant_values=value)


def mynet_kernel(x_ref, w1_ref, b1_ref, w2_ref, b2_ref, o_ref):
    # fc1: (TB,784)bf16 @ (784,1024)bf16 -> f32 accumulate, + bias.
    x = x_ref[...].astype(jnp.bfloat16)          # cast in-kernel: no extra HBM pre-pass
    h = jnp.dot(x, w1_ref[...], preferred_element_type=jnp.float32) + b1_ref[...]
    # sigmoid (EUP transcendental path), back to bf16 for the second MXU pass.
    h = jax.nn.sigmoid(h).astype(jnp.bfloat16)
    # fc2: (TB,1024)bf16 @ (1024,128)bf16 -> f32 accumulate, + bias.
    # Padded w2 columns are 0 and padded b2 columns are -1e30, so padded logits are
    # already ~-inf: no iota/where mask needed in the kernel body.
    logits = jnp.dot(h, w2_ref[...], preferred_element_type=jnp.float32) + b2_ref[...]
    # Numerically stable log_softmax over the class axis.
    m = jnp.max(logits, axis=1, keepdims=True)
    z = logits - m
    lse = jnp.log(jnp.sum(jnp.exp(z), axis=1, keepdims=True))
    o_ref[...] = z - lse


def prepare_params(w1, b1, w2, b2):
    """One-time pad + bf16 cast of the parameters (hoisted out of the per-call path).

    w1: (784, 1000), b1: (1, 1000), w2: (1000, 10), b2: (1, 10).
    """
    w1p = _pad2(w1, IN_FEATURES, HID_PAD).astype(jnp.bfloat16)          # (784, 1024)
    b1p = _pad2(b1.astype(jnp.float32), 1, HID_PAD)                     # (1, 1024)
    w2p = _pad2(w2, HID_PAD, OUT_PAD).astype(jnp.bfloat16)              # (1024, 128)
    b2p = _pad2(b2.astype(jnp.float32), 1, OUT_PAD, value=_NEG_LARGE)   # (1, 128)
    return w1p, b1p, w2p, b2p


@functools.partial(jax.jit, static_argnames=("block_b",))
def mynet_forward(x, w1p, b1p, w2p, b2p, block_b=512):
    """x: (B, 784) f32; w1p/b1p/w2p/b2p: outputs of prepare_params()."""
    B = x.shape[0]
    # Batch tile: multiple of 16 (bf16 sublane packing), at most block_b, chosen as
    # ~ceil(B/2) so there are >=2 grid steps whenever B > 16 (v7x dual-TC split).
    TB = min(block_b, _round_up(max(-(-B // 2), 1), 16))
    B_pad = _round_up(B, TB)

    xp = jnp.pad(x, ((0, B_pad - B), (0, 0)))    # pad rows only; K stays at 784

    grid = (B_pad // TB,)
    out = pl.pallas_call(
        mynet_kernel,
        out_shape=jax.ShapeDtypeStruct((B_pad, OUT_PAD), jnp.float32),
        grid=grid,
        in_specs=[
            pl.BlockSpec((TB, IN_FEATURES), lambda i: (i, 0)),        # x: batch-tiled
            pl.BlockSpec((IN_FEATURES, HID_PAD), lambda i: (0, 0)),   # w1: VMEM-resident
            pl.BlockSpec((1, HID_PAD), lambda i: (0, 0)),             # b1: resident
            pl.BlockSpec((HID_PAD, OUT_PAD), lambda i: (0, 0)),       # w2: resident
            pl.BlockSpec((1, OUT_PAD), lambda i: (0, 0)),             # b2: resident
        ],
        out_specs=pl.BlockSpec((TB, OUT_PAD), lambda i: (i, 0)),
        compiler_params=pltpu.CompilerParams(
            dimension_semantics=("parallel",),    # megacore / v7x dual-TC over batch tiles
        ),
    )(xp, w1p, b1p, w2p, b2p)
    return out[:B, :OUT_FEATURES]


def init_params(key):
    """Deterministic init mimicking torch.nn.Linear's U(-1/sqrt(fan_in), +1/sqrt(fan_in))."""
    k1, k2, k3, k4 = jax.random.split(key, 4)
    bound1 = 1.0 / jnp.sqrt(IN_FEATURES)
    bound2 = 1.0 / jnp.sqrt(HIDDEN)
    # Stored "math-style" (in, out) — the transpose of PyTorch's (out, in) layout.
    w1 = jax.random.uniform(k1, (IN_FEATURES, HIDDEN), jnp.float32, -bound1, bound1)
    b1 = jax.random.uniform(k2, (1, HIDDEN), jnp.float32, -bound1, bound1)
    w2 = jax.random.uniform(k3, (HIDDEN, OUT_FEATURES), jnp.float32, -bound2, bound2)
    b2 = jax.random.uniform(k4, (1, OUT_FEATURES), jnp.float32, -bound2, bound2)
    return w1, b1, w2, b2


def reference_forward_bf16(x, w1, b1, w2, b2):
    """Reference using the same bf16-in / f32-accumulate scheme as the kernel."""
    h = jax.nn.sigmoid(
        jnp.dot(x.astype(jnp.bfloat16), w1.astype(jnp.bfloat16),
                preferred_element_type=jnp.float32) + b1)
    logits = jnp.dot(h.astype(jnp.bfloat16), w2.astype(jnp.bfloat16),
                     preferred_element_type=jnp.float32) + b2
    return jax.nn.log_softmax(logits, axis=1)


def reference_forward_f32(x, w1, b1, w2, b2):
    h = jax.nn.sigmoid(x @ w1 + b1)
    logits = h @ w2 + b2
    return jax.nn.log_softmax(logits, axis=1)


if __name__ == "__main__":
    key = jax.random.PRNGKey(0)
    kx, kp = jax.random.split(key)

    B = 8  # small batch for the demo
    x = jax.random.normal(kx, (B, IN_FEATURES), jnp.float32)
    w1, b1, w2, b2 = init_params(kp)

    # One-time parameter preparation (pad + bf16 cast), hoisted out of the forward path.
    params = prepare_params(w1, b1, w2, b2)

    out = jax.block_until_ready(mynet_forward(x, *params))

    ref_bf16 = reference_forward_bf16(x, w1, b1, w2, b2)
    ref_f32 = reference_forward_f32(x, w1, b1, w2, b2)

    assert out.shape == (B, OUT_FEATURES)
    # Tight check against a reference using the identical bf16/f32 scheme.
    assert jnp.allclose(out, ref_bf16, atol=2e-3, rtol=2e-3), "mismatch vs bf16 JAX reference"
    # Looser check against the pure-f32 math (bounds the bf16 quantization error).
    assert jnp.allclose(out, ref_f32, atol=5e-2, rtol=5e-2), "mismatch vs f32 JAX reference"
    # log_softmax rows should exponentiate-sum to ~1.
    assert jnp.allclose(jnp.sum(jnp.exp(out), axis=1), 1.0, atol=1e-3)

    print("KERNEL_OK")
</pallas_src>

<mosaic_0001>
module attributes {stable_mosaic.version = 11 : i64} {
  func.func @mynet_kernel(%arg0: i32, %arg1: memref<16x784xf32, #tpu.memory_space<vmem>>, %arg2: memref<784x1024xbf16, #tpu.memory_space<vmem>>, %arg3: memref<1x1024xf32, #tpu.memory_space<vmem>>, %arg4: memref<1024x128xbf16, #tpu.memory_space<vmem>>, %arg5: memref<1x128xf32, #tpu.memory_space<vmem>>, %arg6: memref<16x128xf32, #tpu.memory_space<vmem>>) attributes {dimension_semantics = [#tpu.dimension_semantics<parallel>], iteration_bounds = array<i64: 1>, scalar_prefetch = 0 : i64, scratch_operands = 0 : i64, tpu.core_type = #tpu.core_type<tc>, window_params = [{transform_indices = @transform_0, window_bounds = array<i64: 16, 784>}, {pipeline_mode = #tpu.pipeline_mode<synchronous>, transform_indices = @transform_1, window_bounds = array<i64: 784, 1024>}, {pipeline_mode = #tpu.pipeline_mode<synchronous>, transform_indices = @transform_2, window_bounds = array<i64: 1, 1024>}, {pipeline_mode = #tpu.pipeline_mode<synchronous>, transform_indices = @transform_3, window_bounds = array<i64: 1024, 128>}, {pipeline_mode = #tpu.pipeline_mode<synchronous>, transform_indices = @transform_4, window_bounds = array<i64: 1, 128>}, {transform_indices = @transform_5, window_bounds = array<i64: 16, 128>}]} {
    %c0 = arith.constant 0 : index
    %c0_0 = arith.constant 0 : index
    %0 = vector.load %arg1[%c0, %c0_0] : memref<16x784xf32, #tpu.memory_space<vmem>>, vector<16x784xf32>
    %1 = arith.truncf %0 : vector<16x784xf32> to vector<16x784xbf16>
    %c0_1 = arith.constant 0 : index
    %c0_2 = arith.constant 0 : index
    %2 = vector.load %arg2[%c0_1, %c0_2] : memref<784x1024xbf16, #tpu.memory_space<vmem>>, vector<784x1024xbf16>
    %cst = arith.constant dense<0.000000e+00> : vector<16x1024xf32>
    %3 = tpu.matmul %1, %2, %cst {dimension_numbers = #tpu.dot_dimension_numbers<[1], [0], [0], [1], [0, 0, 1, 1], [], []>} : vector<16x784xbf16>, vector<784x1024xbf16>, vector<16x1024xf32> -> vector<16x1024xf32>
    %c0_3 = arith.constant 0 : index
    %c0_4 = arith.constant 0 : index
    %4 = vector.load %arg3[%c0_3, %c0_4] : memref<1x1024xf32, #tpu.memory_space<vmem>>, vector<1x1024xf32>
    %5 = vector.broadcast %4 : vector<1x1024xf32> to vector<16x1024xf32>
    %6 = arith.addf %3, %5 : vector<16x1024xf32>
    %7 = arith.negf %6 : vector<16x1024xf32>
    %8 = math.exp %7 : vector<16x1024xf32>
    %cst_5 = arith.constant 1.000000e+00 : f32
    %9 = vector.broadcast %cst_5 : f32 to vector<16x1024xf32>
    %10 = arith.addf %9, %8 : vector<16x1024xf32>
    %11 = arith.divf %9, %10 : vector<16x1024xf32>
    %12 = arith.truncf %11 : vector<16x1024xf32> to vector<16x1024xbf16>
    %c0_6 = arith.constant 0 : index
    %c0_7 = arith.constant 0 : index
    %13 = vector.load %arg4[%c0_6, %c0_7] : memref<1024x128xbf16, #tpu.memory_space<vmem>>, vector<1024x128xbf16>
    %cst_8 = arith.constant dense<0.000000e+00> : vector<16x128xf32>
    %14 = tpu.matmul %12, %13, %cst_8 {dimension_numbers = #tpu.dot_dimension_numbers<[1], [0], [0], [1], [0, 0, 1, 1], [], []>} : vector<16x1024xbf16>, vector<1024x128xbf16>, vector<16x128xf32> -> vector<16x128xf32>
    %c0_9 = arith.constant 0 : index
    %c0_10 = arith.constant 0 : index
    %15 = vector.load %arg5[%c0_9, %c0_10] : memref<1x128xf32, #tpu.memory_space<vmem>>, vector<1x128xf32>
    %16 = vector.broadcast %15 : vector<1x128xf32> to vector<16x128xf32>
    %17 = arith.addf %14, %16 : vector<16x128xf32>
    %cst_11 = arith.constant dense<0xFF800000> : vector<16xf32>
    %18 = vector.multi_reduction <maximumf>, %17, %cst_11 [1] : vector<16x128xf32> to vector<16xf32>
    %19 = vector.shape_cast %18 : vector<16xf32> to vector<16x1xf32>
    %20 = vector.broadcast %19 : vector<16x1xf32> to vector<16x128xf32>
    %21 = arith.subf %17, %20 : vector<16x128xf32>
    %22 = math.exp %21 : vector<16x128xf32>
    %cst_12 = arith.constant dense<0.000000e+00> : vector<16xf32>
    %23 = vector.multi_reduction <add>, %22, %cst_12 [1] : vector<16x128xf32> to vector<16xf32>
    %24 = vector.shape_cast %23 : vector<16xf32> to vector<16x1xf32>
    %25 = math.log %24 : vector<16x1xf32>
    %26 = vector.broadcast %25 : vector<16x1xf32> to vector<16x128xf32>
    %27 = arith.subf %21, %26 : vector<16x128xf32>
    %c0_13 = arith.constant 0 : index
    %c0_14 = arith.constant 0 : index
    %28 = vector.load %arg6[%c0_13, %c0_14] : memref<16x128xf32, #tpu.memory_space<vmem>>, vector<16x128xf32>
    tpu.vector_store %arg6[%c0_13, %c0_14], %27 {strides = array<i32>} : memref<16x128xf32, #tpu.memory_space<vmem>>, vector<16x128xf32>,
    return
  }
  func.func @transform_0(%arg0: i32) -> (i32, i32) {
    %c0_i32 = arith.constant 0 : i32
    %c0_i32_0 = arith.constant 0 : i32
    return %arg0, %c0_i32 : i32, i32
  }
  func.func @transform_1(%arg0: i32) -> (i32, i32) {
    %c0_i32 = arith.constant 0 : i32
    %c0_i32_0 = arith.constant 0 : i32
    %c0_i32_1 = arith.constant 0 : i32
    return %c0_i32, %c0_i32_0 : i32, i32
  }
  func.func @transform_2(%arg0: i32) -> (i32, i32) {
    %c0_i32 = arith.constant 0 : i32
    %c0_i32_0 = arith.constant 0 : i32
    %c0_i32_1 = arith.constant 0 : i32
    return %c0_i32, %c0_i32_0 : i32, i32
  }
  func.func @transform_3(%arg0: i32) -> (i32, i32) {
    %c0_i32 = arith.constant 0 : i32
    %c0_i32_0 = arith.constant 0 : i32
    %c0_i32_1 = arith.constant 0 : i32
    return %c0_i32, %c0_i32_0 : i32, i32
  }
  func.func @transform_4(%arg0: i32) -> (i32, i32) {
    %c0_i32 = arith.constant 0 : i32
    %c0_i32_0 = arith.constant 0 : i32
    %c0_i32_1 = arith.constant 0 : i32
    return %c0_i32, %c0_i32_0 : i32, i32
  }
  func.func @transform_5(%arg0: i32) -> (i32, i32) {
    %c0_i32 = arith.constant 0 : i32
    %c0_i32_0 = arith.constant 0 : i32
    return %arg0, %c0_i32 : i32, i32
  }
}

</mosaic_0001>

<llo_original>
// kernel: mynet_forward.1
$region0: #{mynet_forward.1}
  #allocation0 [shape = 'u32[]', space=smem, size = 0x4, offset = 0x4, fixed_abs, tag = 'smem constant byte address 0x4 - core index']
  #allocation1 [shape = 'u32[144,128]{1,0:T(1,128)}', space=vmem, size = 0x12000, scoped, tag = 'internal scratch']
  %s0 = inlined_call_operand.vmem [shape: f32[16,784], index: 0, kind: input, shape index: {}]
  %s1 = inlined_call_operand.hbm [shape: bf16[784,1024], index: 1, kind: input, shape index: {}]
  %s2 = inlined_call_operand.hbm [shape: f32[1,1024], index: 2, kind: input, shape index: {}]
  %s3 = inlined_call_operand.hbm [shape: bf16[1024,128], index: 3, kind: input, shape index: {}]
  %s4 = inlined_call_operand.hbm [shape: f32[1,128], index: 4, kind: input, shape index: {}]
  %s5 = inlined_call_operand.vmem [shape: f32[16,128], index: 5, kind: output, shape index: {}]
  %s6 = sld [smem:[#allocation0]]
  $region46: #{mynet_forward.1} parent=0
    _
  %s8 = ssub.s32 1, %s6
  %s9 = scalar_select 0, %s8, %s6
  $region1: #{mynet_forward.1} parent=0
    #allocation2 [shape = 'u8[1605632]{0}', space=vmem, size = 0x188000, scoped, tag = 'input window, operand 1, single buffered']
    #allocation3 [shape = 's32[1]{0}', space=sflag, size = 0x4, scoped, tag = 'scoped memory for mynet_forward.1']
    #allocation4 [shape = 'u8[4096]{0}', space=vmem, size = 0x1000, scoped, tag = 'input window, operand 2, single buffered']
    #allocation5 [shape = 's32[1]{0}', space=sflag, size = 0x4, scoped, tag = 'scoped memory for mynet_forward.1']
    #allocation6 [shape = 'u8[262144]{0}', space=vmem, size = 0x40000, scoped, tag = 'input window, operand 3, single buffered']
    #allocation7 [shape = 'u8[512]{0}', space=vmem, size = 0x400, scoped, tag = 'input window, operand 4, single buffered']
    #allocation8 [shape = 's32[1]{0}', space=sflag, size = 0x4, scoped, tag = 'scoped memory for mynet_forward.1']
    %10 = vsyncpa [#allocation3], 0
    %11 = vsyncpa [#allocation5], 0
    %12 = vsyncpa [#allocation8], 0
    // Predicated region
    $region2: #{mynet_forward.1} parent=1 // pred_check
      _
    $region3: #{mynet_forward.1} parent=1 // pred_check_branch
      %14 = sbr.rel (0) target = $region5
    $region4: #{mynet_forward.1} parent=1 // pred_region
      _
    $region5: #{mynet_forward.1} parent=1 // pred_fallthru
      _
    // Predicated region
    $region6: #{mynet_forward.1} parent=1 // pred_check
      _
    $region7: #{mynet_forward.1} parent=1 // pred_check_branch
      %16 = sbr.rel (0) target = $region9
    $region8: #{mynet_forward.1} parent=1 // pred_region
      %s18 = ssub.s32 50176, 50176
      %19 = vsyncadd [#allocation3], %s18
      %s20 = sshll.u32 [#allocation2], 4
      %s21 = int_to_ptr.vmem [resolvable:$true] %s20
      %26 = dma.hbm_to_vmem [thread:$0]  %s1, 50176, %s21, [#allocation3], 512, 512, 32
    $region9: #{mynet_forward.1} parent=1 // pred_fallthru
      _
    // Predicated region
    $region10: #{mynet_forward.1} parent=1 // pred_check
      _
    $region11: #{mynet_forward.1} parent=1 // pred_check_branch
      %28 = sbr.rel (0) target = $region13
    $region12: #{mynet_forward.1} parent=1 // pred_region
      %s30 = ssub.s32 128, 128
      %31 = vsyncadd [#allocation5], %s30
      %s33 = sshll.u32 [#allocation4], 4
      %s34 = int_to_ptr.vmem [resolvable:$true] %s33
      %36 = dma.hbm_to_vmem [thread:$0]  %s2, 128, %s34, [#allocation5]
    $region13: #{mynet_forward.1} parent=1 // pred_fallthru
      _
    // Predicated region
    $region14: #{mynet_forward.1} parent=1 // pred_check
      _
    $region15: #{mynet_forward.1} parent=1 // pred_check_branch
      %38 = sbr.rel (0) target = $region17
    $region16: #{mynet_forward.1} parent=1 // pred_region
      %s40 = ssub.s32 8192, 8192
      %41 = vsyncadd [#allocation5], %s40
      %s42 = sshll.u32 [#allocation6], 4
      %s43 = int_to_ptr.vmem [resolvable:$true] %s42
      %48 = dma.hbm_to_vmem [thread:$0]  %s3, 8192, %s43, [#allocation5], 64, 64, 4
    $region17: #{mynet_forward.1} parent=1 // pred_fallthru
      _
    // Predicated region
    $region18: #{mynet_forward.1} parent=1 // pred_check
      _
    $region19: #{mynet_forward.1} parent=1 // pred_check_branch
      %50 = sbr.rel (0) target = $region21
    $region20: #{mynet_forward.1} parent=1 // pred_region
      %s52 = ssub.s32 16, 16
      %53 = vsyncadd [#allocation8], %s52
      %s55 = sshll.u32 [#allocation7], 4
      %s56 = int_to_ptr.vmem [resolvable:$true] %s55
      %58 = dma.hbm_to_vmem [thread:$0]  %s4, 16, %s56, [#allocation8]
    $region21: #{mynet_forward.1} parent=1 // pred_fallthru
      _
    // Predicated region
    $region22: #{mynet_forward.1} parent=1 // pred_check
      _
    $region23: #{mynet_forward.1} parent=1 // pred_check_branch
      %60 = sbr.rel (0) target = $region25
    $region24: #{mynet_forward.1} parent=1 // pred_region
      %61 = dma.done [#allocation3], 50176
    $region25: #{mynet_forward.1} parent=1 // pred_fallthru
      _
    // Predicated region
    $region26: #{mynet_forward.1} parent=1 // pred_check
      _
    $region27: #{mynet_forward.1} parent=1 // pred_check_branch
      %63 = sbr.rel (0) target = $region29
    $region28: #{mynet_forward.1} parent=1 // pred_region
      %64 = dma.done [#allocation5], 128
    $region29: #{mynet_forward.1} parent=1 // pred_fallthru
      _
    // Predicated region
    $region30: #{mynet_forward.1} parent=1 // pred_check
      _
    $region31: #{mynet_forward.1} parent=1 // pred_check_branch
      %66 = sbr.rel (0) target = $region33
    $region32: #{mynet_forward.1} parent=1 // pred_region
      %67 = dma.done [#allocation5], 8192
    $region33: #{mynet_forward.1} parent=1 // pred_fallthru
      _
    // Predicated region
    $region34: #{mynet_forward.1} parent=1 // pred_check
      _
    $region35: #{mynet_forward.1} parent=1 // pred_check_branch
      %69 = sbr.rel (0) target = $region37
    $region36: #{mynet_forward.1} parent=1 // pred_region
      %70 = dma.done [#allocation8], 16
    $region37: #{mynet_forward.1} parent=1 // pred_fallthru
      _
    %v72 = vld [vmem:[%s0] sm:$0xff]
    %v73 = vld [vmem:[%s0 + $0x8] sm:$0xff]
    %v74 = vld [vmem:[%s0 + $0x10] sm:$0xff]
    %v75 = vld [vmem:[%s0 + $0x18] sm:$0xff]
    %v76 = vld [vmem:[%s0 + $0x20] sm:$0xff]
    %v77 = vld [vmem:[%s0 + $0x28] sm:$0xff]
    %v78 = vld [vmem:[%s0 + $0x30] sm:$0xff]
    %v79 = vld [vmem:[%s0 + $0x38] sm:$0xff]
    %v80 = vld [vmem:[%s0 + $0x40] sm:$0xff]
    %v81 = vld [vmem:[%s0 + $0x48] sm:$0xff]
    %v82 = vld [vmem:[%s0 + $0x50] sm:$0xff]
    %v83 = vld [vmem:[%s0 + $0x58] sm:$0xff]
    %v84 = vld [vmem:[%s0 + $0x60] sm:$0xff]
    %v85 = vld [vmem:[%s0 + $0x68] sm:$0xff]
    %v86 = vpack.c.bf16 %v79, %v72
    %v87 = vpack.c.bf16 %v80, %v73
    %v88 = vpack.c.bf16 %v81, %v74
    %v89 = vpack.c.bf16 %v82, %v75
    %v90 = vpack.c.bf16 %v83, %v76
    %v91 = vpack.c.bf16 %v84, %v77
    %v92 = vpack.c.bf16 %v85, %v78
    %v93 = vld [vmem:[#allocation2] sm:$0xff]
    %v94 = vld [vmem:[#allocation2 + $0x8] sm:$0xff]
    %v95 = vld [vmem:[#allocation2 + $0x10] sm:$0xff]
    %v96 = vld [vmem:[#allocation2 + $0x18] sm:$0xff]
    %v97 = vld [vmem:[#allocation2 + $0x20] sm:$0xff]
    %v98 = vld [vmem:[#allocation2 + $0x28] sm:$0xff]
    %v99 = vld [vmem:[#allocation2 + $0x30] sm:$0xff]
    %v100 = vld [vmem:[#allocation2 + $0x38] sm:$0xff]
    %v101 = vld [vmem:[#allocation2 + $0x40] sm:$0xff]
    %v102 = vld [vmem:[#allocation2 + $0x48] sm:$0xff]
    %v103 = vld [vmem:[#allocation2 + $0x50] sm:$0xff]
    %v104 = vld [vmem:[#allocation2 + $0x58] sm:$0xff]
    %v105 = vld [vmem:[#allocation2 + $0x60] sm:$0xff]
    %v106 = vld [vmem:[#allocation2 + $0x68] sm:$0xff]
    %v107 = vld [vmem:[#allocation2 + $0x70] sm:$0xff]
    %v108 = vld [vmem:[#allocation2 + $0x78] sm:$0xff]
    %v109 = vld [vmem:[#allocation2 + $0x80] sm:$0xff]
    %v110 = vld [vmem:[#allocation2 + $0x88] sm:$0xff]
    %v111 = vld [vmem:[#allocation2 + $0x90] sm:$0xff]
    %v112 = vld [vmem:[#allocation2 + $0x98] sm:$0xff]
    %v113 = vld [vmem:[#allocation2 + $0xa0] sm:$0xff]
    %v114 = vld [vmem:[#allocation2 + $0xa8] sm:$0xff]
    %v115 = vld [vmem:[#allocation2 + $0xb0] sm:$0xff]
    %v116 = vld [vmem:[#allocation2 + $0xb8] sm:$0xff]
    %v117 = vld [vmem:[#allocation2 + $0xc0] sm:$0xff]
    %v118 = vld [vmem:[#allocation2 + $0xc8] sm:$0xff]
    %v119 = vld [vmem:[#allocation2 + $0xd0] sm:$0xff]
    %v120 = vld [vmem:[#allocation2 + $0xd8] sm:$0xff]
    %v121 = vld [vmem:[#allocation2 + $0xe0] sm:$0xff]
    %v122 = vld [vmem:[#allocation2 + $0xe8] sm:$0xff]
    %v123 = vld [vmem:[#allocation2 + $0xf0] sm:$0xff]
    %v124 = vld [vmem:[#allocation2 + $0xf8] sm:$0xff]
    %v125 = vld [vmem:[#allocation2 + $0x100] sm:$0xff]
    %v126 = vld [vmem:[#allocation2 + $0x108] sm:$0xff]
    %v127 = vld [vmem:[#allocation2 + $0x110] sm:$0xff]
    %v128 = vld [vmem:[#allocation2 + $0x118] sm:$0xff]
    %v129 = vld [vmem:[#allocation2 + $0x120] sm:$0xff]
    %v130 = vld [vmem:[#allocation2 + $0x128] sm:$0xff]
    %v131 = vld [vmem:[#allocation2 + $0x130] sm:$0xff]
    %v132 = vld [vmem:[#allocation2 + $0x138] sm:$0xff]
    %v133 = vld [vmem:[#allocation2 + $0x140] sm:$0xff]
    %v134 = vld [vmem:[#allocation2 + $0x148] sm:$0xff]
    %v135 = vld [vmem:[#allocation2 + $0x150] sm:$0xff]
    %v136 = vld [vmem:[#allocation2 + $0x158] sm:$0xff]
    %v137 = vld [vmem:[#allocation2 + $0x160] sm:$0xff]
    %v138 = vld [vmem:[#allocation2 + $0x168] sm:$0xff]
    %v139 = vld [vmem:[#allocation2 + $0x170] sm:$0xff]
    %v140 = vld [vmem:[#allocation2 + $0x178] sm:$0xff]
    %v141 = vld [vmem:[#allocation2 + $0x180] sm:$0xff]
    %v142 = vld [vmem:[#allocation2 + $0x188] sm:$0xff]
    %v143 = vld [vmem:[#allocation2 + $0x190] sm:$0xff]
    %v144 = vld [vmem:[#allocation2 + $0x198] sm:$0xff]
    %v145 = vld [vmem:[#allocation2 + $0x1a0] sm:$0xff]
    %v146 = vld [vmem:[#allocation2 + $0x1a8] sm:$0xff]
    %v147 = vld [vmem:[#allocation2 + $0x1b0] sm:$0xff]
    %v148 = vld [vmem:[#allocation2 + $0x1b8] sm:$0xff]
    %v149 = vld [vmem:[#allocation2 + $0x1c0] sm:$0xff]
    %v150 = vld [vmem:[#allocation2 + $0x1c8] sm:$0xff]
    %v151 = vld [vmem:[#allocation2 + $0x1d0] sm:$0xff]
    %v152 = vld [vmem:[#allocation2 + $0x1d8] sm:$0xff]
    %v153 = vld [vmem:[#allocation2 + $0x1e0] sm:$0xff]
    %v154 = vld [vmem:[#allocation2 + $0x1e8] sm:$0xff]
    %v155 = vld [vmem:[#allocation2 + $0x1f0] sm:$0xff]
    %v156 = vld [vmem:[#allocation2 + $0x1f8] sm:$0xff]
    %v157 = vld [vmem:[#allocation2 + $0x200] sm:$0xff]
    %v158 = vld [vmem:[#allocation2 + $0x208] sm:$0xff]
    %v159 = vld [vmem:[#allocation2 + $0x210] sm:$0xff]
    %v160 = vld [vmem:[#allocation2 + $0x218] sm:$0xff]
    %v161 = vld [vmem:[#allocation2 + $0x220] sm:$0xff]
    %v162 = vld [vmem:[#allocation2 + $0x228] sm:$0xff]
    %v163 = vld [vmem:[#allocation2 + $0x230] sm:$0xff]
    %v164 = vld [vmem:[#allocation2 + $0x238] sm:$0xff]
    %v165 = vld [vmem:[#allocation2 + $0x240] sm:$0xff]
    %v166 = vld [vmem:[#allocation2 + $0x248] sm:$0xff]
    %v167 = vld [vmem:[#allocation2 + $0x250] sm:$0xff]
    %v168 = vld [vmem:[#allocation2 + $0x258] sm:$0xff]
    %v169 = vld [vmem:[#allocation2 + $0x260] sm:$0xff]
    %v170 = vld [vmem:[#allocation2 + $0x268] sm:$0xff]
    %v171 = vld [vmem:[#allocation2 + $0x270] sm:$0xff]
    %v172 = vld [vmem:[#allocation2 + $0x278] sm:$0xff]
    %v173 = vld [vmem:[#allocation2 + $0x280] sm:$0xff]
    %v174 = vld [vmem:[#allocation2 + $0x288] sm:$0xff]
    %v175 = vld [vmem:[#allocation2 + $0x290] sm:$0xff]
    %v176 = vld [vmem:[#allocation2 + $0x298] sm:$0xff]
    %v177 = vld [vmem:[#allocation2 + $0x2a0] sm:$0xff]
    %v178 = vld [vmem:[#allocation2 + $0x2a8] sm:$0xff]
    %v179 = vld [vmem:[#allocation2 + $0x2b0] sm:$0xff]
    %v180 = vld [vmem:[#allocation2 + $0x2b8] sm:$0xff]
    %v181 = vld [vmem:[#allocation2 + $0x2c0] sm:$0xff]
    %v182 = vld [vmem:[#allocation2 + $0x2c8] sm:$0xff]
    %v183 = vld [vmem:[#allocation2 + $0x2d0] sm:$0xff]
    %v184 = vld [vmem:[#allocation2 + $0x2d8] sm:$0xff]
    %v185 = vld [vmem:[#allocation2 + $0x2e0] sm:$0xff]
    %v186 = vld [vmem:[#allocation2 + $0x2e8] sm:$0xff]
    %v187 = vld [vmem:[#allocation2 + $0x2f0] sm:$0xff]
    %v188 = vld [vmem:[#allocation2 + $0x2f8] sm:$0xff]
    %v189 = vld [vmem:[#allocation2 + $0x300] sm:$0xff]
    %v190 = vld [vmem:[#allocation2 + $0x308] sm:$0xff]
    %v191 = vld [vmem:[#allocation2 + $0x310] sm:$0xff]
    %v192 = vld [vmem:[#allocation2 + $0x318] sm:$0xff]
    %v193 = vld [vmem:[#allocation2 + $0x320] sm:$0xff]
    %v194 = vld [vmem:[#allocation2 + $0x328] sm:$0xff]
    %v195 = vld [vmem:[#allocation2 + $0x330] sm:$0xff]
    %v196 = vld [vmem:[#allocation2 + $0x338] sm:$0xff]
    %v197 = vld [vmem:[#allocation2 + $0x340] sm:$0xff]
    %v198 = vld [vmem:[#allocation2 + $0x348] sm:$0xff]
    %v199 = vld [vmem:[#allocation2 + $0x350] sm:$0xff]
    %v200 = vld [vmem:[#allocation2 + $0x358] sm:$0xff]
    %v201 = vld [vmem:[#allocation2 + $0x360] sm:$0xff]
    %v202 = vld [vmem:[#allocation2 + $0x368] sm:$0xff]
    %v203 = vld [vmem:[#allocation2 + $0x370] sm:$0xff]
    %v204 = vld [vmem:[#allocation2 + $0x378] sm:$0xff]
    %v205 = vld [vmem:[#allocation2 + $0x380] sm:$0xff]
    %v206 = vld [vmem:[#allocation2 + $0x388] sm:$0xff]
    %v207 = vld [vmem:[#allocation2 + $0x390] sm:$0xff]
    %v208 = vld [vmem:[#allocation2 + $0x398] sm:$0xff]
    %v209 = vld [vmem:[#allocation2 + $0x3a0] sm:$0xff]
    %v210 = vld [vmem:[#allocation2 + $0x3a8] sm:$0xff]
    %v211 = vld [vmem:[#allocation2 + $0x3b0] sm:$0xff]
    %v212 = vld [vmem:[#allocation2 + $0x3b8] sm:$0xff]
    %v213 = vld [vmem:[#allocation2 + $0x3c0] sm:$0xff]
    %v214 = vld [vmem:[#allocation2 + $0x3c8] sm:$0xff]
    %v215 = vld [vmem:[#allocation2 + $0x3d0] sm:$0xff]
    %v216 = vld [vmem:[#allocation2 + $0x3d8] sm:$0xff]
    %v217 = vld [vmem:[#allocation2 + $0x3e0] sm:$0xff]
    %v218 = vld [vmem:[#allocation2 + $0x3e8] sm:$0xff]
    %v219 = vld [vmem:[#allocation2 + $0x3f0] sm:$0xff]
    %v220 = vld [vmem:[#allocation2 + $0x3f8] sm:$0xff]
    %v221 = vld [vmem:[#allocation2 + $0x400] sm:$0xff]
    %v222 = vld [vmem:[#allocation2 + $0x408] sm:$0xff]
    %v223 = vld [vmem:[#allocation2 + $0x410] sm:$0xff]
    %v224 = vld [vmem:[#allocation2 + $0x418] sm:$0xff]
    %v225 = vld [vmem:[#allocation2 + $0x420] sm:$0xff]
    %v226 = vld [vmem:[#allocation2 + $0x428] sm:$0xff]
    %v227 = vld [vmem:[#allocation2 + $0x430] sm:$0xff]
    %v228 = vld [vmem:[#allocation2 + $0x438] sm:$0xff]
    %v229 = vld [vmem:[#allocation2 + $0x440] sm:$0xff]
    %v230 = vld [vmem:[#allocation2 + $0x448] sm:$0xff]
    %v231 = vld [vmem:[#allocation2 + $0x450] sm:$0xff]
    %v232 = vld [vmem:[#allocation2 + $0x458] sm:$0xff]
    %v233 = vld [vmem:[#allocation2 + $0x460] sm:$0xff]
    %v234 = vld [vmem:[#allocation2 + $0x468] sm:$0xff]
    %v235 = vld [vmem:[#allocation2 + $0x470] sm:$0xff]
    %v236 = vld [vmem:[#allocation2 + $0x478] sm:$0xff]
    %v237 = vld [vmem:[#allocation2 + $0x480] sm:$0xff]
    %v238 = vld [vmem:[#allocation2 + $0x488] sm:$0xff]
    %v239 = vld [vmem:[#allocation2 + $0x490] sm:$0xff]
    %v240 = vld [vmem:[#allocation2 + $0x498] sm:$0xff]
    %v241 = vld [vmem:[#allocation2 + $0x4a0] sm:$0xff]
    %v242 = vld [vmem:[#allocation2 + $0x4a8] sm:$0xff]
    %v243 = vld [vmem:[#allocation2 + $0x4b0] sm:$0xff]
    %v244 = vld [vmem:[#allocation2 + $0x4b8] sm:$0xff]
    %v245 = vld [vmem:[#allocation2 + $0x4c0] sm:$0xff]
    %v246 = vld [vmem:[#allocation2 + $0x4c8] sm:$0xff]
    %v247 = vld [vmem:[#allocation2 + $0x4d0] sm:$0xff]
    %v248 = vld [vmem:[#allocation2 + $0x4d8] sm:$0xff]
    %v249 = vld [vmem:[#allocation2 + $0x4e0] sm:$0xff]
    %v250 = vld [vmem:[#allocation2 + $0x4e8] sm:$0xff]
    %v251 = vld [vmem:[#allocation2 + $0x4f0] sm:$0xff]
    %v252 = vld [vmem:[#allocation2 + $0x4f8] sm:$0xff]
    %v253 = vld [vmem:[#allocation2 + $0x500] sm:$0xff]
    %v254 = vld [vmem:[#allocation2 + $0x508] sm:$0xff]
    %v255 = vld [vmem:[#allocation2 + $0x510] sm:$0xff]
    %v256 = vld [vmem:[#allocation2 + $0x518] sm:$0xff]
    %v257 = vld [vmem:[#allocation2 + $0x520] sm:$0xff]
    %v258 = vld [vmem:[#allocation2 + $0x528] sm:$0xff]
    %v259 = vld [vmem:[#allocation2 + $0x530] sm:$0xff]
    %v260 = vld [vmem:[#allocation2 + $0x538] sm:$0xff]
    %v261 = vld [vmem:[#allocation2 + $0x540] sm:$0xff]
    %v262 = vld [vmem:[#allocation2 + $0x548] sm:$0xff]
    %v263 = vld [vmem:[#allocation2 + $0x550] sm:$0xff]
    %v264 = vld [vmem:[#allocation2 + $0x558] sm:$0xff]
    %v265 = vld [vmem:[#allocation2 + $0x560] sm:$0xff]
    %v266 = vld [vmem:[#allocation2 + $0x568] sm:$0xff]
    %v267 = vld [vmem:[#allocation2 + $0x570] sm:$0xff]
    %v268 = vld [vmem:[#allocation2 + $0x578] sm:$0xff]
    %v269 = vld [vmem:[#allocation2 + $0x580] sm:$0xff]
    %v270 = vld [vmem:[#allocation2 + $0x588] sm:$0xff]
    %v271 = vld [vmem:[#allocation2 + $0x590] sm:$0xff]
    %v272 = vld [vmem:[#allocation2 + $0x598] sm:$0xff]
    %v273 = vld [vmem:[#allocation2 + $0x5a0] sm:$0xff]
    %v274 = vld [vmem:[#allocation2 + $0x5a8] sm:$0xff]
    %v275 = vld [vmem:[#allocation2 + $0x5b0] sm:$0xff]
    %v276 = vld [vmem:[#allocation2 + $0x5b8] sm:$0xff]
    %v277 = vld [vmem:[#allocation2 + $0x5c0] sm:$0xff]
    %v278 = vld [vmem:[#allocation2 + $0x5c8] sm:$0xff]
    %v279 = vld [vmem:[#allocation2 + $0x5d0] sm:$0xff]
    %v280 = vld [vmem:[#allocation2 + $0x5d8] sm:$0xff]
    %v281 = vld [vmem:[#allocation2 + $0x5e0] sm:$0xff]
    %v282 = vld [vmem:[#allocation2 + $0x5e8] sm:$0xff]
    %v283 = vld [vmem:[#allocation2 + $0x5f0] sm:$0xff]
    %v284 = vld [vmem:[#allocation2 + $0x5f8] sm:$0xff]
    %v285 = vld [vmem:[#allocation2 + $0x600] sm:$0xff]
    %v286 = vld [vmem:[#allocation2 + $0x608] sm:$0xff]
    %v287 = vld [vmem:[#allocation2 + $0x610] sm:$0xff]
    %v288 = vld [vmem:[#allocation2 + $0x618] sm:$0xff]
    %v289 = vld [vmem:[#allocation2 + $0x620] sm:$0xff]
    %v290 = vld [vmem:[#allocation2 + $0x628] sm:$0xff]
    %v291 = vld [vmem:[#allocation2 + $0x630] sm:$0xff]
    %v292 = vld [vmem:[#allocation2 + $0x638] sm:$0xff]
    %v293 = vld [vmem:[#allocation2 + $0x640] sm:$0xff]
    %v294 = vld [vmem:[#allocation2 + $0x648] sm:$0xff]
    %v295 = vld [vmem:[#allocation2 + $0x650] sm:$0xff]
    %v296 = vld [vmem:[#allocation2 + $0x658] sm:$0xff]
    %v297 = vld [vmem:[#allocation2 + $0x660] sm:$0xff]
    %v298 = vld [vmem:[#allocation2 + $0x668] sm:$0xff]
    %v299 = vld [vmem:[#allocation2 + $0x670] sm:$0xff]
    %v300 = vld [vmem:[#allocation2 + $0x678] sm:$0xff]
    %v301 = vld [vmem:[#allocation2 + $0x680] sm:$0xff]
    %v302 = vld [vmem:[#allocation2 + $0x688] sm:$0xff]
    %v303 = vld [vmem:[#allocation2 + $0x690] sm:$0xff]
    %v304 = vld [vmem:[#allocation2 + $0x698] sm:$0xff]
    %v305 = vld [vmem:[#allocation2 + $0x6a0] sm:$0xff]
    %v306 = vld [vmem:[#allocation2 + $0x6a8] sm:$0xff]
    %v307 = vld [vmem:[#allocation2 + $0x6b0] sm:$0xff]
    %v308 = vld [vmem:[#allocation2 + $0x6b8] sm:$0xff]
    %v309 = vld [vmem:[#allocation2 + $0x6c0] sm:$0xff]
    %v310 = vld [vmem:[#allocation2 + $0x6c8] sm:$0xff]
    %v311 = vld [vmem:[#allocation2 + $0x6d0] sm:$0xff]
    %v312 = vld [vmem:[#allocation2 + $0x6d8] sm:$0xff]
    %v313 = vld [vmem:[#allocation2 + $0x6e0] sm:$0xff]
    %v314 = vld [vmem:[#allocation2 + $0x6e8] sm:$0xff]
    %v315 = vld [vmem:[#allocation2 + $0x6f0] sm:$0xff]
    %v316 = vld [vmem:[#allocation2 + $0x6f8] sm:$0xff]
    %v317 = vld [vmem:[#allocation2 + $0x700] sm:$0xff]
    %v318 = vld [vmem:[#allocation2 + $0x708] sm:$0xff]
    %v319 = vld [vmem:[#allocation2 + $0x710] sm:$0xff]
    %v320 = vld [vmem:[#allocation2 + $0x718] sm:$0xff]
    %v321 = vld [vmem:[#allocation2 + $0x720] sm:$0xff]
    %v322 = vld [vmem:[#allocation2 + $0x728] sm:$0xff]
    %v323 = vld [vmem:[#allocation2 + $0x730] sm:$0xff]
    %v324 = vld [vmem:[#allocation2 + $0x738] sm:$0xff]
    %v325 = vld [vmem:[#allocation2 + $0x740] sm:$0xff]
    %v326 = vld [vmem:[#allocation2 + $0x748] sm:$0xff]
    %v327 = vld [vmem:[#allocation2 + $0x750] sm:$0xff]
    %v328 = vld [vmem:[#allocation2 + $0x758] sm:$0xff]
    %v329 = vld [vmem:[#allocation2 + $0x760] sm:$0xff]
    %v330 = vld [vmem:[#allocation2 + $0x768] sm:$0xff]
    %v331 = vld [vmem:[#allocation2 + $0x770] sm:$0xff]
    %v332 = vld [vmem:[#allocation2 + $0x778] sm:$0xff]
    %v333 = vld [vmem:[#allocation2 + $0x780] sm:$0xff]
    %v334 = vld [vmem:[#allocation2 + $0x788] sm:$0xff]
    %v335 = vld [vmem:[#allocation2 + $0x790] sm:$0xff]
    %v336 = vld [vmem:[#allocation2 + $0x798] sm:$0xff]
    %v337 = vld [vmem:[#allocation2 + $0x7a0] sm:$0xff]
    %v338 = vld [vmem:[#allocation2 + $0x7a8] sm:$0xff]
    %v339 = vld [vmem:[#allocation2 + $0x7b0] sm:$0xff]
    %v340 = vld [vmem:[#allocation2 + $0x7b8] sm:$0xff]
    %v341 = vld [vmem:[#allocation2 + $0x7c0] sm:$0xff]
    %v342 = vld [vmem:[#allocation2 + $0x7c8] sm:$0xff]
    %v343 = vld [vmem:[#allocation2 + $0x7d0] sm:$0xff]
    %v344 = vld [vmem:[#allocation2 + $0x7d8] sm:$0xff]
    %v345 = vld [vmem:[#allocation2 + $0x7e0] sm:$0xff]
    %v346 = vld [vmem:[#allocation2 + $0x7e8] sm:$0xff]
    %v347 = vld [vmem:[#allocation2 + $0x7f0] sm:$0xff]
    %v348 = vld [vmem:[#allocation2 + $0x7f8] sm:$0xff]
    %v349 = vld [vmem:[#allocation2 + $0x800] sm:$0xff]
    %v350 = vld [vmem:[#allocation2 + $0x808] sm:$0xff]
    %v351 = vld [vmem:[#allocation2 + $0x810] sm:$0xff]
    %v352 = vld [vmem:[#allocation2 + $0x818] sm:$0xff]
    %v353 = vld [vmem:[#allocation2 + $0x820] sm:$0xff]
    %v354 = vld [vmem:[#allocation2 + $0x828] sm:$0xff]
    %v355 = vld [vmem:[#allocation2 + $0x830] sm:$0xff]
    %v356 = vld [vmem:[#allocation2 + $0x838] sm:$0xff]
    %v357 = vld [vmem:[#allocation2 + $0x840] sm:$0xff]
    %v358 = vld [vmem:[#allocation2 + $0x848] sm:$0xff]
    %v359 = vld [vmem:[#allocation2 + $0x850] sm:$0xff]
    %v360 = vld [vmem:[#allocation2 + $0x858] sm:$0xff]
    %v361 = vld [vmem:[#allocation2 + $0x860] sm:$0xff]
    %v362 = vld [vmem:[#allocation2 + $0x868] sm:$0xff]
    %v363 = vld [vmem:[#allocation2 + $0x870] sm:$0xff]
    %v364 = vld [vmem:[#allocation2 + $0x878] sm:$0xff]
    %v365 = vld [vmem:[#allocation2 + $0x880] sm:$0xff]
    %v366 = vld [vmem:[#allocation2 + $0x888] sm:$0xff]
    %v367 = vld [vmem:[#allocation2 + $0x890] sm:$0xff]
    %v368 = vld [vmem:[#allocation2 + $0x898] sm:$0xff]
    %v369 = vld [vmem:[#allocation2 + $0x8a0] sm:$0xff]
    %v370 = vld [vmem:[#allocation2 + $0x8a8] sm:$0xff]
    %v371 = vld [vmem:[#allocation2 + $0x8b0] sm:$0xff]
    %v372 = vld [vmem:[#allocation2 + $0x8b8] sm:$0xff]
    %v373 = vld [vmem:[#allocation2 + $0x8c0] sm:$0xff]
    %v374 = vld [vmem:[#allocation2 + $0x8c8] sm:$0xff]
    %v375 = vld [vmem:[#allocation2 + $0x8d0] sm:$0xff]
    %v376 = vld [vmem:[#allocation2 + $0x8d8] sm:$0xff]
    %v377 = vld [vmem:[#allocation2 + $0x8e0] sm:$0xff]
    %v378 = vld [vmem:[#allocation2 + $0x8e8] sm:$0xff]
    %v379 = vld [vmem:[#allocation2 + $0x8f0] sm:$0xff]
    %v380 = vld [vmem:[#allocation2 + $0x8f8] sm:$0xff]
    %v381 = vld [vmem:[#allocation2 + $0x900] sm:$0xff]
    %v382 = vld [vmem:[#allocation2 + $0x908] sm:$0xff]
    %v383 = vld [vmem:[#allocation2 + $0x910] sm:$0xff]
    %v384 = vld [vmem:[#allocation2 + $0x918] sm:$0xff]
    %v385 = vld [vmem:[#allocation2 + $0x920] sm:$0xff]
    %v386 = vld [vmem:[#allocation2 + $0x928] sm:$0xff]
    %v387 = vld [vmem:[#allocation2 + $0x930] sm:$0xff]
    %v388 = vld [vmem:[#allocation2 + $0x938] sm:$0xff]
    %v389 = vld [vmem:[#allocation2 + $0x940] sm:$0xff]
    %v390 = vld [vmem:[#allocation2 + $0x948] sm:$0xff]
    %v391 = vld [vmem:[#allocation2 + $0x950] sm:$0xff]
    %v392 = vld [vmem:[#allocation2 + $0x958] sm:$0xff]
    %v393 = vld [vmem:[#allocation2 + $0x960] sm:$0xff]
    %v394 = vld [vmem:[#allocation2 + $0x968] sm:$0xff]
    %v395 = vld [vmem:[#allocation2 + $0x970] sm:$0xff]
    %v396 = vld [vmem:[#allocation2 + $0x978] sm:$0xff]
    %v397 = vld [vmem:[#allocation2 + $0x980] sm:$0xff]
    %v398 = vld [vmem:[#allocation2 + $0x988] sm:$0xff]
    %v399 = vld [vmem:[#allocation2 + $0x990] sm:$0xff]
    %v400 = vld [vmem:[#allocation2 + $0x998] sm:$0xff]
    %v401 = vld [vmem:[#allocation2 + $0x9a0] sm:$0xff]
    %v402 = vld [vmem:[#allocation2 + $0x9a8] sm:$0xff]
    %v403 = vld [vmem:[#allocation2 + $0x9b0] sm:$0xff]
    %v404 = vld [vmem:[#allocation2 + $0x9b8] sm:$0xff]
    %v405 = vld [vmem:[#allocation2 + $0x9c0] sm:$0xff]
    %v406 = vld [vmem:[#allocation2 + $0x9c8] sm:$0xff]
    %v407 = vld [vmem:[#allocation2 + $0x9d0] sm:$0xff]
    %v408 = vld [vmem:[#allocation2 + $0x9d8] sm:$0xff]
    %v409 = vld [vmem:[#allocation2 + $0x9e0] sm:$0xff]
    %v410 = vld [vmem:[#allocation2 + $0x9e8] sm:$0xff]
    %v411 = vld [vmem:[#allocation2 + $0x9f0] sm:$0xff]
    %v412 = vld [vmem:[#allocation2 + $0x9f8] sm:$0xff]
    %v413 = vld [vmem:[#allocation2 + $0xa00] sm:$0xff]
    %v414 = vld [vmem:[#allocation2 + $0xa08] sm:$0xff]
    %v415 = vld [vmem:[#allocation2 + $0xa10] sm:$0xff]
    %v416 = vld [vmem:[#allocation2 + $0xa18] sm:$0xff]
    %v417 = vld [vmem:[#allocation2 + $0xa20] sm:$0xff]
    %v418 = vld [vmem:[#allocation2 + $0xa28] sm:$0xff]
    %v419 = vld [vmem:[#allocation2 + $0xa30] sm:$0xff]
    %v420 = vld [vmem:[#allocation2 + $0xa38] sm:$0xff]
    %v421 = vld [vmem:[#allocation2 + $0xa40] sm:$0xff]
    %v422 = vld [vmem:[#allocation2 + $0xa48] sm:$0xff]
    %v423 = vld [vmem:[#allocation2 + $0xa50] sm:$0xff]
    %v424 = vld [vmem:[#allocation2 + $0xa58] sm:$0xff]
    %v425 = vld [vmem:[#allocation2 + $0xa60] sm:$0xff]
    %v426 = vld [vmem:[#allocation2 + $0xa68] sm:$0xff]
    %v427 = vld [vmem:[#allocation2 + $0xa70] sm:$0xff]
    %v428 = vld [vmem:[#allocation2 + $0xa78] sm:$0xff]
    %v429 = vld [vmem:[#allocation2 + $0xa80] sm:$0xff]
    %v430 = vld [vmem:[#allocation2 + $0xa88] sm:$0xff]
    %v431 = vld [vmem:[#allocation2 + $0xa90] sm:$0xff]
    %v432 = vld [vmem:[#allocation2 + $0xa98] sm:$0xff]
    %v433 = vld [vmem:[#allocation2 + $0xaa0] sm:$0xff]
    %v434 = vld [vmem:[#allocation2 + $0xaa8] sm:$0xff]
    %v435 = vld [vmem:[#allocation2 + $0xab0] sm:$0xff]
    %v436 = vld [vmem:[#allocation2 + $0xab8] sm:$0xff]
    %v437 = vld [vmem:[#allocation2 + $0xac0] sm:$0xff]
    %v438 = vld [vmem:[#allocation2 + $0xac8] sm:$0xff]
    %v439 = vld [vmem:[#allocation2 + $0xad0] sm:$0xff]
    %v440 = vld [vmem:[#allocation2 + $0xad8] sm:$0xff]
    %v441 = vld [vmem:[#allocation2 + $0xae0] sm:$0xff]
    %v442 = vld [vmem:[#allocation2 + $0xae8] sm:$0xff]
    %v443 = vld [vmem:[#allocation2 + $0xaf0] sm:$0xff]
    %v444 = vld [vmem:[#allocation2 + $0xaf8] sm:$0xff]
    %v445 = vld [vmem:[#allocation2 + $0xb00] sm:$0xff]
    %v446 = vld [vmem:[#allocation2 + $0xb08] sm:$0xff]
    %v447 = vld [vmem:[#allocation2 + $0xb10] sm:$0xff]
    %v448 = vld [vmem:[#allocation2 + $0xb18] sm:$0xff]
    %v449 = vld [vmem:[#allocation2 + $0xb20] sm:$0xff]
    %v450 = vld [vmem:[#allocation2 + $0xb28] sm:$0xff]
    %v451 = vld [vmem:[#allocation2 + $0xb30] sm:$0xff]
    %v452 = vld [vmem:[#allocation2 + $0xb38] sm:$0xff]
    %v453 = vld [vmem:[#allocation2 + $0xb40] sm:$0xff]
    %v454 = vld [vmem:[#allocation2 + $0xb48] sm:$0xff]
    %v455 = vld [vmem:[#allocation2 + $0xb50] sm:$0xff]
    %v456 = vld [vmem:[#allocation2 + $0xb58] sm:$0xff]
    %v457 = vld [vmem:[#allocation2 + $0xb60] sm:$0xff]
    %v458 = vld [vmem:[#allocation2 + $0xb68] sm:$0xff]
    %v459 = vld [vmem:[#allocation2 + $0xb70] sm:$0xff]
    %v460 = vld [vmem:[#allocation2 + $0xb78] sm:$0xff]
    %v461 = vld [vmem:[#allocation2 + $0xb80] sm:$0xff]
    %v462 = vld [vmem:[#allocation2 + $0xb88] sm:$0xff]
    %v463 = vld [vmem:[#allocation2 + $0xb90] sm:$0xff]
    %v464 = vld [vmem:[#allocation2 + $0xb98] sm:$0xff]
    %v465 = vld [vmem:[#allocation2 + $0xba0] sm:$0xff]
    %v466 = vld [vmem:[#allocation2 + $0xba8] sm:$0xff]
    %v467 = vld [vmem:[#allocation2 + $0xbb0] sm:$0xff]
    %v468 = vld [vmem:[#allocation2 + $0xbb8] sm:$0xff]
    %v469 = vld [vmem:[#allocation2 + $0xbc0] sm:$0xff]
    %v470 = vld [vmem:[#allocation2 + $0xbc8] sm:$0xff]
    %v471 = vld [vmem:[#allocation2 + $0xbd0] sm:$0xff]
    %v472 = vld [vmem:[#allocation2 + $0xbd8] sm:$0xff]
    %v473 = vld [vmem:[#allocation2 + $0xbe0] sm:$0xff]
    %v474 = vld [vmem:[#allocation2 + $0xbe8] sm:$0xff]
    %v475 = vld [vmem:[#allocation2 + $0xbf0] sm:$0xff]
    %v476 = vld [vmem:[#allocation2 + $0xbf8] sm:$0xff]
    %v477 = vld [vmem:[#allocation2 + $0xc00] sm:$0xff]
    %v478 = vld [vmem:[#allocation2 + $0xc08] sm:$0xff]
    %v479 = vld [vmem:[#allocation2 + $0xc10] sm:$0xff]
    %v480 = vld [vmem:[#allocation2 + $0xc18] sm:$0xff]
    %v481 = vld [vmem:[#allocation2 + $0xc20] sm:$0xff]
    %v482 = vld [vmem:[#allocation2 + $0xc28] sm:$0xff]
    %v483 = vld [vmem:[#allocation2 + $0xc30] sm:$0xff]
    %v484 = vld [vmem:[#allocation2 + $0xc38] sm:$0xff]
    %v485 = vld [vmem:[#allocation4] sm:$0xff]
    %v487 = vlaneseq
    %v488 = vshrl.u32 %v487, 7
    %v489 = vsub.s32 0, %v488
    %v490 = vrot.slane %v485, %v489
    %v491 = vlaneseq
    %v492 = vshrl.u32 %v491, 7
    %v493 = vsub.s32 1, %v492
    %v494 = vrot.slane %v485, %v493
    %v495 = vlaneseq
    %v496 = vshrl.u32 %v495, 7
    %v497 = vsub.s32 2, %v496
    %v498 = vrot.slane %v485, %v497
    %v499 = vlaneseq
    %v500 = vshrl.u32 %v499, 7
    %v501 = vsub.s32 3, %v500
    %v502 = vrot.slane %v485, %v501
    %v503 = vlaneseq
    %v504 = vshrl.u32 %v503, 7
    %v505 = vsub.s32 4, %v504
    %v506 = vrot.slane %v485, %v505
    %v507 = vlaneseq
    %v508 = vshrl.u32 %v507, 7
    %v509 = vsub.s32 5, %v508
    %v510 = vrot.slane %v485, %v509
    %v511 = vlaneseq
    %v512 = vshrl.u32 %v511, 7
    %v513 = vsub.s32 6, %v512
    %v514 = vrot.slane %v485, %v513
    %v515 = vlaneseq
    %v516 = vshrl.u32 %v515, 7
    %v517 = vsub.s32 7, %v516
    %v518 = vrot.slane %v485, %v517
    %v919 = vunpack.c.l.b16 %v93
    %v920 = vunpack.c.h.b16 %v93
    %v921 = vunpack.c.l.b16 %v94
    %v922 = vunpack.c.h.b16 %v94
    %v923 = vunpack.c.l.b16 %v95
    %v924 = vunpack.c.h.b16 %v95
    %v925 = vunpack.c.l.b16 %v96
    %v926 = vunpack.c.h.b16 %v96
    %v927 = vunpack.c.l.b16 %v97
    %v928 = vunpack.c.h.b16 %v97
    %v929 = vunpack.c.l.b16 %v98
    %v930 = vunpack.c.h.b16 %v98
    %v931 = vunpack.c.l.b16 %v99
    %v932 = vunpack.c.h.b16 %v99
    %v933 = vunpack.c.l.b16 %v100
    %v934 = vunpack.c.h.b16 %v100
    %v935 = vunpack.c.l.b16 %v101
    %v936 = vunpack.c.h.b16 %v101
    %v937 = vunpack.c.l.b16 %v102
    %v938 = vunpack.c.h.b16 %v102
    %v939 = vunpack.c.l.b16 %v103
    %v940 = vunpack.c.h.b16 %v103
    %v941 = vunpack.c.l.b16 %v104
    %v942 = vunpack.c.h.b16 %v104
    %v943 = vunpack.c.l.b16 %v105
    %v944 = vunpack.c.h.b16 %v105
    %v945 = vunpack.c.l.b16 %v106
    %v946 = vunpack.c.h.b16 %v106
    %v947 = vunpack.c.l.b16 %v107
    %v948 = vunpack.c.h.b16 %v107
    %v949 = vunpack.c.l.b16 %v108
    %v950 = vunpack.c.h.b16 %v108
    %v951 = vunpack.c.l.b16 %v109
    %v952 = vunpack.c.h.b16 %v109
    %v953 = vunpack.c.l.b16 %v110
    %v954 = vunpack.c.h.b16 %v110
    %v955 = vunpack.c.l.b16 %v111
    %v956 = vunpack.c.h.b16 %v111
    %v957 = vunpack.c.l.b16 %v112
    %v958 = vunpack.c.h.b16 %v112
    %v959 = vunpack.c.l.b16 %v113
    %v960 = vunpack.c.h.b16 %v113
    %v961 = vunpack.c.l.b16 %v114
    %v962 = vunpack.c.h.b16 %v114
    %v963 = vunpack.c.l.b16 %v115
    %v964 = vunpack.c.h.b16 %v115
    %v965 = vunpack.c.l.b16 %v116
    %v966 = vunpack.c.h.b16 %v116
    %v967 = vunpack.c.l.b16 %v117
    %v968 = vunpack.c.h.b16 %v117
    %v969 = vunpack.c.l.b16 %v118
    %v970 = vunpack.c.h.b16 %v118
    %v971 = vunpack.c.l.b16 %v119
    %v972 = vunpack.c.h.b16 %v119
    %v973 = vunpack.c.l.b16 %v120
    %v974 = vunpack.c.h.b16 %v120
    %v975 = vunpack.c.l.b16 %v121
    %v976 = vunpack.c.h.b16 %v121
    %v977 = vunpack.c.l.b16 %v122
    %v978 = vunpack.c.h.b16 %v122
    %v979 = vunpack.c.l.b16 %v123
    %v980 = vunpack.c.h.b16 %v123
    %v981 = vunpack.c.l.b16 %v124
    %v982 = vunpack.c.h.b16 %v124
    %v983 = vunpack.c.l.b16 %v125
    %v984 = vunpack.c.h.b16 %v125
    %v985 = vunpack.c.l.b16 %v126
    %v986 = vunpack.c.h.b16 %v126
    %v987 = vunpack.c.l.b16 %v127
    %v988 = vunpack.c.h.b16 %v127
    %v989 = vunpack.c.l.b16 %v128
    %v990 = vunpack.c.h.b16 %v128
    %v991 = vunpack.c.l.b16 %v129
    %v992 = vunpack.c.h.b16 %v129
    %v993 = vunpack.c.l.b16 %v130
    %v994 = vunpack.c.h.b16 %v130
    %v995 = vunpack.c.l.b16 %v131
    %v996 = vunpack.c.h.b16 %v131
    %v997 = vunpack.c.l.b16 %v132
    %v998 = vunpack.c.h.b16 %v132
    %v999 = vunpack.c.l.b16 %v133
    %v1000 = vunpack.c.h.b16 %v133
    %v1001 = vunpack.c.l.b16 %v134
    %v1002 = vunpack.c.h.b16 %v134
    %v1003 = vunpack.c.l.b16 %v135
    %v1004 = vunpack.c.h.b16 %v135
    %v1005 = vunpack.c.l.b16 %v136
    %v1006 = vunpack.c.h.b16 %v136
    %v1007 = vunpack.c.l.b16 %v137
    %v1008 = vunpack.c.h.b16 %v137
    %v1009 = vunpack.c.l.b16 %v138
    %v1010 = vunpack.c.h.b16 %v138
    %v1011 = vunpack.c.l.b16 %v139
    %v1012 = vunpack.c.h.b16 %v139
    %v1013 = vunpack.c.l.b16 %v140
    %v1014 = vunpack.c.h.b16 %v140
    %v1015 = vunpack.c.l.b16 %v141
    %v1016 = vunpack.c.h.b16 %v141
    %v1017 = vunpack.c.l.b16 %v142
    %v1018 = vunpack.c.h.b16 %v142
    %v1019 = vunpack.c.l.b16 %v143
    %v1020 = vunpack.c.h.b16 %v143
    %v1021 = vunpack.c.l.b16 %v144
    %v1022 = vunpack.c.h.b16 %v144
    %v1023 = vunpack.c.l.b16 %v145
    %v1024 = vunpack.c.h.b16 %v145
    %v1025 = vunpack.c.l.b16 %v146
    %v1026 = vunpack.c.h.b16 %v146
    %v1027 = vunpack.c.l.b16 %v147
    %v1028 = vunpack.c.h.b16 %v147
    %v1029 = vunpack.c.l.b16 %v148
    %v1030 = vunpack.c.h.b16 %v148
    %v1031 = vunpack.c.l.b16 %v149
    %v1032 = vunpack.c.h.b16 %v149
    %v1033 = vunpack.c.l.b16 %v150
    %v1034 = vunpack.c.h.b16 %v150
    %v1035 = vunpack.c.l.b16 %v151
    %v1036 = vunpack.c.h.b16 %v151
    %v1037 = vunpack.c.l.b16 %v152
    %v1038 = vunpack.c.h.b16 %v152
    %v1039 = vunpack.c.l.b16 %v153
    %v1040 = vunpack.c.h.b16 %v153
    %v1041 = vunpack.c.l.b16 %v154
    %v1042 = vunpack.c.h.b16 %v154
    %v1043 = vunpack.c.l.b16 %v155
    %v1044 = vunpack.c.h.b16 %v155
    %v1045 = vunpack.c.l.b16 %v156
    %v1046 = vunpack.c.h.b16 %v156
    %v1047 = vunpack.c.l.b16 %v157
    %v1048 = vunpack.c.h.b16 %v157
    %v1049 = vunpack.c.l.b16 %v158
    %v1050 = vunpack.c.h.b16 %v158
    %v1051 = vunpack.c.l.b16 %v159
    %v1052 = vunpack.c.h.b16 %v159
    %v1053 = vunpack.c.l.b16 %v160
    %v1054 = vunpack.c.h.b16 %v160
    %v1055 = vunpack.c.l.b16 %v161
    %v1056 = vunpack.c.h.b16 %v161
    %v1057 = vunpack.c.l.b16 %v162
    %v1058 = vunpack.c.h.b16 %v162
    %v1059 = vunpack.c.l.b16 %v163
    %v1060 = vunpack.c.h.b16 %v163
    %v1061 = vunpack.c.l.b16 %v164
    %v1062 = vunpack.c.h.b16 %v164
    %v1063 = vunpack.c.l.b16 %v165
    %v1064 = vunpack.c.h.b16 %v165
    %v1065 = vunpack.c.l.b16 %v166
    %v1066 = vunpack.c.h.b16 %v166
    %v1067 = vunpack.c.l.b16 %v167
    %v1068 = vunpack.c.h.b16 %v167
    %v1069 = vunpack.c.l.b16 %v168
    %v1070 = vunpack.c.h.b16 %v168
    %v1071 = vunpack.c.l.b16 %v169
    %v1072 = vunpack.c.h.b16 %v169
    %v1073 = vunpack.c.l.b16 %v170
    %v1074 = vunpack.c.h.b16 %v170
    %v1075 = vunpack.c.l.b16 %v171
    %v1076 = vunpack.c.h.b16 %v171
    %v1077 = vunpack.c.l.b16 %v172
    %v1078 = vunpack.c.h.b16 %v172
    %v1079 = vunpack.c.l.b16 %v173
    %v1080 = vunpack.c.h.b16 %v173
    %v1081 = vunpack.c.l.b16 %v174
    %v1082 = vunpack.c.h.b16 %v174
    %v1083 = vunpack.c.l.b16 %v175
    %v1084 = vunpack.c.h.b16 %v175
    %v1085 = vunpack.c.l.b16 %v176
    %v1086 = vunpack.c.h.b16 %v176
    %v1087 = vunpack.c.l.b16 %v177
    %v1088 = vunpack.c.h.b16 %v177
    %v1089 = vunpack.c.l.b16 %v178
    %v1090 = vunpack.c.h.b16 %v178
    %v1091 = vunpack.c.l.b16 %v179
    %v1092 = vunpack.c.h.b16 %v179
    %v1093 = vunpack.c.l.b16 %v180
    %v1094 = vunpack.c.h.b16 %v180
    %v1095 = vunpack.c.l.b16 %v181
    %v1096 = vunpack.c.h.b16 %v181
    %v1097 = vunpack.c.l.b16 %v182
    %v1098 = vunpack.c.h.b16 %v182
    %v1099 = vunpack.c.l.b16 %v183
    %v1100 = vunpack.c.h.b16 %v183
    %v1101 = vunpack.c.l.b16 %v184
    %v1102 = vunpack.c.h.b16 %v184
    %v1103 = vunpack.c.l.b16 %v185
    %v1104 = vunpack.c.h.b16 %v185
    %v1105 = vunpack.c.l.b16 %v186
    %v1106 = vunpack.c.h.b16 %v186
    %v1107 = vunpack.c.l.b16 %v187
    %v1108 = vunpack.c.h.b16 %v187
    %v1109 = vunpack.c.l.b16 %v188
    %v1110 = vunpack.c.h.b16 %v188
    %v1111 = vunpack.c.l.b16 %v189
    %v1112 = vunpack.c.h.b16 %v189
    %v1113 = vunpack.c.l.b16 %v190
    %v1114 = vunpack.c.h.b16 %v190
    %v1115 = vunpack.c.l.b16 %v191
    %v1116 = vunpack.c.h.b16 %v191
    %v1117 = vunpack.c.l.b16 %v192
    %v1118 = vunpack.c.h.b16 %v192
    %v1119 = vunpack.c.l.b16 %v193
    %v1120 = vunpack.c.h.b16 %v193
    %v1121 = vunpack.c.l.b16 %v194
    %v1122 = vunpack.c.h.b16 %v194
    %v1123 = vunpack.c.l.b16 %v195
    %v1124 = vunpack.c.h.b16 %v195
    %v1125 = vunpack.c.l.b16 %v196
    %v1126 = vunpack.c.h.b16 %v196
    %v1127 = vunpack.c.l.b16 %v197
    %v1128 = vunpack.c.h.b16 %v197
    %v1129 = vunpack.c.l.b16 %v198
    %v1130 = vunpack.c.h.b16 %v198
    %v1131 = vunpack.c.l.b16 %v199
    %v1132 = vunpack.c.h.b16 %v199
    %v1133 = vunpack.c.l.b16 %v200
    %v1134 = vunpack.c.h.b16 %v200
    %v1135 = vunpack.c.l.b16 %v201
    %v1136 = vunpack.c.h.b16 %v201
    %v1137 = vunpack.c.l.b16 %v202
    %v1138 = vunpack.c.h.b16 %v202
    %v1139 = vunpack.c.l.b16 %v203
    %v1140 = vunpack.c.h.b16 %v203
    %v1141 = vunpack.c.l.b16 %v204
    %v1142 = vunpack.c.h.b16 %v204
    %v1143 = vunpack.c.l.b16 %v205
    %v1144 = vunpack.c.h.b16 %v205
    %v1145 = vunpack.c.l.b16 %v206
    %v1146 = vunpack.c.h.b16 %v206
    %v1147 = vunpack.c.l.b16 %v207
    %v1148 = vunpack.c.h.b16 %v207
    %v1149 = vunpack.c.l.b16 %v208
    %v1150 = vunpack.c.h.b16 %v208
    %v1151 = vunpack.c.l.b16 %v209
    %v1152 = vunpack.c.h.b16 %v209
    %v1153 = vunpack.c.l.b16 %v210
    %v1154 = vunpack.c.h.b16 %v210
    %v1155 = vunpack.c.l.b16 %v211
    %v1156 = vunpack.c.h.b16 %v211
    %v1157 = vunpack.c.l.b16 %v212
    %v1158 = vunpack.c.h.b16 %v212
    %v1159 = vunpack.c.l.b16 %v213
    %v1160 = vunpack.c.h.b16 %v213
    %v1161 = vunpack.c.l.b16 %v214
    %v1162 = vunpack.c.h.b16 %v214
    %v1163 = vunpack.c.l.b16 %v215
    %v1164 = vunpack.c.h.b16 %v215
    %v1165 = vunpack.c.l.b16 %v216
    %v1166 = vunpack.c.h.b16 %v216
    %v1167 = vunpack.c.l.b16 %v217
    %v1168 = vunpack.c.h.b16 %v217
    %v1169 = vunpack.c.l.b16 %v218
    %v1170 = vunpack.c.h.b16 %v218
    %v1171 = vunpack.c.l.b16 %v219
    %v1172 = vunpack.c.h.b16 %v219
    %v1173 = vunpack.c.l.b16 %v220
    %v1174 = vunpack.c.h.b16 %v220
    %v1175 = vunpack.c.l.b16 %v221
    %v1176 = vunpack.c.h.b16 %v221
    %v1177 = vunpack.c.l.b16 %v222
    %v1178 = vunpack.c.h.b16 %v222
    %v1179 = vunpack.c.l.b16 %v223
    %v1180 = vunpack.c.h.b16 %v223
    %v1181 = vunpack.c.l.b16 %v224
    %v1182 = vunpack.c.h.b16 %v224
    %v1183 = vunpack.c.l.b16 %v225
    %v1184 = vunpack.c.h.b16 %v225
    %v1185 = vunpack.c.l.b16 %v226
    %v1186 = vunpack.c.h.b16 %v226
    %v1187 = vunpack.c.l.b16 %v227
    %v1188 = vunpack.c.h.b16 %v227
    %v1189 = vunpack.c.l.b16 %v228
    %v1190 = vunpack.c.h.b16 %v228
    %v1191 = vunpack.c.l.b16 %v229
    %v1192 = vunpack.c.h.b16 %v229
    %v1193 = vunpack.c.l.b16 %v230
    %v1194 = vunpack.c.h.b16 %v230
    %v1195 = vunpack.c.l.b16 %v231
    %v1196 = vunpack.c.h.b16 %v231
    %v1197 = vunpack.c.l.b16 %v232
    %v1198 = vunpack.c.h.b16 %v232
    %v1199 = vunpack.c.l.b16 %v233
    %v1200 = vunpack.c.h.b16 %v233
    %v1201 = vunpack.c.l.b16 %v234
    %v1202 = vunpack.c.h.b16 %v234
    %v1203 = vunpack.c.l.b16 %v235
    %v1204 = vunpack.c.h.b16 %v235
    %v1205 = vunpack.c.l.b16 %v236
    %v1206 = vunpack.c.h.b16 %v236
    %v1207 = vunpack.c.l.b16 %v237
    %v1208 = vunpack.c.h.b16 %v237
    %v1209 = vunpack.c.l.b16 %v238
    %v1210 = vunpack.c.h.b16 %v238
    %v1211 = vunpack.c.l.b16 %v239
    %v1212 = vunpack.c.h.b16 %v239
    %v1213 = vunpack.c.l.b16 %v240
    %v1214 = vunpack.c.h.b16 %v240
    %v1215 = vunpack.c.l.b16 %v241
    %v1216 = vunpack.c.h.b16 %v241
    %v1217 = vunpack.c.l.b16 %v242
    %v1218 = vunpack.c.h.b16 %v242
    %v1219 = vunpack.c.l.b16 %v243
    %v1220 = vunpack.c.h.b16 %v243
    %v1221 = vunpack.c.l.b16 %v244
    %v1222 = vunpack.c.h.b16 %v244
    %v1223 = vunpack.c.l.b16 %v245
    %v1224 = vunpack.c.h.b16 %v245
    %v1225 = vunpack.c.l.b16 %v246
    %v1226 = vunpack.c.h.b16 %v246
    %v1227 = vunpack.c.l.b16 %v247
    %v1228 = vunpack.c.h.b16 %v247
    %v1229 = vunpack.c.l.b16 %v248
    %v1230 = vunpack.c.h.b16 %v248
    %v1231 = vunpack.c.l.b16 %v249
    %v1232 = vunpack.c.h.b16 %v249
    %v1233 = vunpack.c.l.b16 %v250
    %v1234 = vunpack.c.h.b16 %v250
    %v1235 = vunpack.c.l.b16 %v251
    %v1236 = vunpack.c.h.b16 %v251
    %v1237 = vunpack.c.l.b16 %v252
    %v1238 = vunpack.c.h.b16 %v252
    %v1239 = vunpack.c.l.b16 %v253
    %v1240 = vunpack.c.h.b16 %v253
    %v1241 = vunpack.c.l.b16 %v254
    %v1242 = vunpack.c.h.b16 %v254
    %v1243 = vunpack.c.l.b16 %v255
    %v1244 = vunpack.c.h.b16 %v255
    %v1245 = vunpack.c.l.b16 %v256
    %v1246 = vunpack.c.h.b16 %v256
    %v1247 = vunpack.c.l.b16 %v257
    %v1248 = vunpack.c.h.b16 %v257
    %v1249 = vunpack.c.l.b16 %v258
    %v1250 = vunpack.c.h.b16 %v258
    %v1251 = vunpack.c.l.b16 %v259
    %v1252 = vunpack.c.h.b16 %v259
    %v1253 = vunpack.c.l.b16 %v260
    %v1254 = vunpack.c.h.b16 %v260
    %v1255 = vunpack.c.l.b16 %v261
    %v1256 = vunpack.c.h.b16 %v261
    %v1257 = vunpack.c.l.b16 %v262
    %v1258 = vunpack.c.h.b16 %v262
    %v1259 = vunpack.c.l.b16 %v263
    %v1260 = vunpack.c.h.b16 %v263
    %v1261 = vunpack.c.l.b16 %v264
    %v1262 = vunpack.c.h.b16 %v264
    %v1263 = vunpack.c.l.b16 %v265
    %v1264 = vunpack.c.h.b16 %v265
    %v1265 = vunpack.c.l.b16 %v266
    %v1266 = vunpack.c.h.b16 %v266
    %v1267 = vunpack.c.l.b16 %v267
    %v1268 = vunpack.c.h.b16 %v267
    %v1269 = vunpack.c.l.b16 %v268
    %v1270 = vunpack.c.h.b16 %v268
    %v1271 = vunpack.c.l.b16 %v269
    %v1272 = vunpack.c.h.b16 %v269
    %v1273 = vunpack.c.l.b16 %v270
    %v1274 = vunpack.c.h.b16 %v270
    %v1275 = vunpack.c.l.b16 %v271
    %v1276 = vunpack.c.h.b16 %v271
    %v1277 = vunpack.c.l.b16 %v272
    %v1278 = vunpack.c.h.b16 %v272
    %v1279 = vunpack.c.l.b16 %v273
    %v1280 = vunpack.c.h.b16 %v273
    %v1281 = vunpack.c.l.b16 %v274
    %v1282 = vunpack.c.h.b16 %v274
    %v1283 = vunpack.c.l.b16 %v275
    %v1284 = vunpack.c.h.b16 %v275
    %v1285 = vunpack.c.l.b16 %v276
    %v1286 = vunpack.c.h.b16 %v276
    %v1287 = vunpack.c.l.b16 %v277
    %v1288 = vunpack.c.h.b16 %v277
    %v1289 = vunpack.c.l.b16 %v278
    %v1290 = vunpack.c.h.b16 %v278
    %v1291 = vunpack.c.l.b16 %v279
    %v1292 = vunpack.c.h.b16 %v279
    %v1293 = vunpack.c.l.b16 %v280
    %v1294 = vunpack.c.h.b16 %v280
    %v1295 = vunpack.c.l.b16 %v281
    %v1296 = vunpack.c.h.b16 %v281
    %v1297 = vunpack.c.l.b16 %v282
    %v1298 = vunpack.c.h.b16 %v282
    %v1299 = vunpack.c.l.b16 %v283
    %v1300 = vunpack.c.h.b16 %v283
    %v1301 = vunpack.c.l.b16 %v284
    %v1302 = vunpack.c.h.b16 %v284
    %v1303 = vunpack.c.l.b16 %v285
    %v1304 = vunpack.c.h.b16 %v285
    %v1305 = vunpack.c.l.b16 %v286
    %v1306 = vunpack.c.h.b16 %v286
    %v1307 = vunpack.c.l.b16 %v287
    %v1308 = vunpack.c.h.b16 %v287
    %v1309 = vunpack.c.l.b16 %v288
    %v1310 = vunpack.c.h.b16 %v288
    %v1311 = vunpack.c.l.b16 %v289
    %v1312 = vunpack.c.h.b16 %v289
    %v1313 = vunpack.c.l.b16 %v290
    %v1314 = vunpack.c.h.b16 %v290
    %v1315 = vunpack.c.l.b16 %v291
    %v1316 = vunpack.c.h.b16 %v291
    %v1317 = vunpack.c.l.b16 %v292
    %v1318 = vunpack.c.h.b16 %v292
    %v1319 = vunpack.c.l.b16 %v293
    %v1320 = vunpack.c.h.b16 %v293
    %v1321 = vunpack.c.l.b16 %v294
    %v1322 = vunpack.c.h.b16 %v294
    %v1323 = vunpack.c.l.b16 %v295
    %v1324 = vunpack.c.h.b16 %v295
    %v1325 = vunpack.c.l.b16 %v296
    %v1326 = vunpack.c.h.b16 %v296
    %v1327 = vunpack.c.l.b16 %v297
    %v1328 = vunpack.c.h.b16 %v297
    %v1329 = vunpack.c.l.b16 %v298
    %v1330 = vunpack.c.h.b16 %v298
    %v1331 = vunpack.c.l.b16 %v299
    %v1332 = vunpack.c.h.b16 %v299
    %v1333 = vunpack.c.l.b16 %v300
    %v1334 = vunpack.c.h.b16 %v300
    %v1335 = vunpack.c.l.b16 %v301
    %v1336 = vunpack.c.h.b16 %v301
    %v1337 = vunpack.c.l.b16 %v302
    %v1338 = vunpack.c.h.b16 %v302
    %v1339 = vunpack.c.l.b16 %v303
    %v1340 = vunpack.c.h.b16 %v303
    %v1341 = vunpack.c.l.b16 %v304
    %v1342 = vunpack.c.h.b16 %v304
    %v1343 = vunpack.c.l.b16 %v305
    %v1344 = vunpack.c.h.b16 %v305
    %v1345 = vunpack.c.l.b16 %v306
    %v1346 = vunpack.c.h.b16 %v306
    %v1347 = vunpack.c.l.b16 %v307
    %v1348 = vunpack.c.h.b16 %v307
    %v1349 = vunpack.c.l.b16 %v308
    %v1350 = vunpack.c.h.b16 %v308
    %v1351 = vunpack.c.l.b16 %v309
    %v1352 = vunpack.c.h.b16 %v309
    %v1353 = vunpack.c.l.b16 %v310
    %v1354 = vunpack.c.h.b16 %v310
    %v1355 = vunpack.c.l.b16 %v311
    %v1356 = vunpack.c.h.b16 %v311
    %v1357 = vunpack.c.l.b16 %v312
    %v1358 = vunpack.c.h.b16 %v312
    %v1359 = vunpack.c.l.b16 %v313
    %v1360 = vunpack.c.h.b16 %v313
    %v1361 = vunpack.c.l.b16 %v314
    %v1362 = vunpack.c.h.b16 %v314
    %v1363 = vunpack.c.l.b16 %v315
    %v1364 = vunpack.c.h.b16 %v315
    %v1365 = vunpack.c.l.b16 %v316
    %v1366 = vunpack.c.h.b16 %v316
    %v1367 = vunpack.c.l.b16 %v317
    %v1368 = vunpack.c.h.b16 %v317
    %v1369 = vunpack.c.l.b16 %v318
    %v1370 = vunpack.c.h.b16 %v318
    %v1371 = vunpack.c.l.b16 %v319
    %v1372 = vunpack.c.h.b16 %v319
    %v1373 = vunpack.c.l.b16 %v320
    %v1374 = vunpack.c.h.b16 %v320
    %v1375 = vunpack.c.l.b16 %v321
    %v1376 = vunpack.c.h.b16 %v321
    %v1377 = vunpack.c.l.b16 %v322
    %v1378 = vunpack.c.h.b16 %v322
    %v1379 = vunpack.c.l.b16 %v323
    %v1380 = vunpack.c.h.b16 %v323
    %v1381 = vunpack.c.l.b16 %v324
    %v1382 = vunpack.c.h.b16 %v324
    %v1383 = vunpack.c.l.b16 %v325
    %v1384 = vunpack.c.h.b16 %v325
    %v1385 = vunpack.c.l.b16 %v326
    %v1386 = vunpack.c.h.b16 %v326
    %v1387 = vunpack.c.l.b16 %v327
    %v1388 = vunpack.c.h.b16 %v327
    %v1389 = vunpack.c.l.b16 %v328
    %v1390 = vunpack.c.h.b16 %v328
    %v1391 = vunpack.c.l.b16 %v329
    %v1392 = vunpack.c.h.b16 %v329
    %v1393 = vunpack.c.l.b16 %v330
    %v1394 = vunpack.c.h.b16 %v330
    %v1395 = vunpack.c.l.b16 %v331
    %v1396 = vunpack.c.h.b16 %v331
    %v1397 = vunpack.c.l.b16 %v332
    %v1398 = vunpack.c.h.b16 %v332
    %v1399 = vunpack.c.l.b16 %v333
    %v1400 = vunpack.c.h.b16 %v333
    %v1401 = vunpack.c.l.b16 %v334
    %v1402 = vunpack.c.h.b16 %v334
    %v1403 = vunpack.c.l.b16 %v335
    %v1404 = vunpack.c.h.b16 %v335
    %v1405 = vunpack.c.l.b16 %v336
    %v1406 = vunpack.c.h.b16 %v336
    %v1407 = vunpack.c.l.b16 %v337
    %v1408 = vunpack.c.h.b16 %v337
    %v1409 = vunpack.c.l.b16 %v338
    %v1410 = vunpack.c.h.b16 %v338
    %v1411 = vunpack.c.l.b16 %v339
    %v1412 = vunpack.c.h.b16 %v339
    %v1413 = vunpack.c.l.b16 %v340
    %v1414 = vunpack.c.h.b16 %v340
    %v1415 = vunpack.c.l.b16 %v341
    %v1416 = vunpack.c.h.b16 %v341
    %v1417 = vunpack.c.l.b16 %v342
    %v1418 = vunpack.c.h.b16 %v342
    %v1419 = vunpack.c.l.b16 %v343
    %v1420 = vunpack.c.h.b16 %v343
    %v1421 = vunpack.c.l.b16 %v344
    %v1422 = vunpack.c.h.b16 %v344
    %v1423 = vunpack.c.l.b16 %v345
    %v1424 = vunpack.c.h.b16 %v345
    %v1425 = vunpack.c.l.b16 %v346
    %v1426 = vunpack.c.h.b16 %v346
    %v1427 = vunpack.c.l.b16 %v347
    %v1428 = vunpack.c.h.b16 %v347
    %v1429 = vunpack.c.l.b16 %v348
    %v1430 = vunpack.c.h.b16 %v348
    %v1431 = vunpack.c.l.b16 %v349
    %v1432 = vunpack.c.h.b16 %v349
    %v1433 = vunpack.c.l.b16 %v350
    %v1434 = vunpack.c.h.b16 %v350
    %v1435 = vunpack.c.l.b16 %v351
    %v1436 = vunpack.c.h.b16 %v351
    %v1437 = vunpack.c.l.b16 %v352
    %v1438 = vunpack.c.h.b16 %v352
    %v1439 = vunpack.c.l.b16 %v353
    %v1440 = vunpack.c.h.b16 %v353
    %v1441 = vunpack.c.l.b16 %v354
    %v1442 = vunpack.c.h.b16 %v354
    %v1443 = vunpack.c.l.b16 %v355
    %v1444 = vunpack.c.h.b16 %v355
    %v1445 = vunpack.c.l.b16 %v356
    %v1446 = vunpack.c.h.b16 %v356
    %v1447 = vunpack.c.l.b16 %v357
    %v1448 = vunpack.c.h.b16 %v357
    %v1449 = vunpack.c.l.b16 %v358
    %v1450 = vunpack.c.h.b16 %v358
    %v1451 = vunpack.c.l.b16 %v359
    %v1452 = vunpack.c.h.b16 %v359
    %v1453 = vunpack.c.l.b16 %v360
    %v1454 = vunpack.c.h.b16 %v360
    %v1455 = vunpack.c.l.b16 %v361
    %v1456 = vunpack.c.h.b16 %v361
    %v1457 = vunpack.c.l.b16 %v362
    %v1458 = vunpack.c.h.b16 %v362
    %v1459 = vunpack.c.l.b16 %v363
    %v1460 = vunpack.c.h.b16 %v363
    %v1461 = vunpack.c.l.b16 %v364
    %v1462 = vunpack.c.h.b16 %v364
    %v1463 = vunpack.c.l.b16 %v365
    %v1464 = vunpack.c.h.b16 %v365
    %v1465 = vunpack.c.l.b16 %v366
    %v1466 = vunpack.c.h.b16 %v366
    %v1467 = vunpack.c.l.b16 %v367
    %v1468 = vunpack.c.h.b16 %v367
    %v1469 = vunpack.c.l.b16 %v368
    %v1470 = vunpack.c.h.b16 %v368
    %v1471 = vunpack.c.l.b16 %v369
    %v1472 = vunpack.c.h.b16 %v369
    %v1473 = vunpack.c.l.b16 %v370
    %v1474 = vunpack.c.h.b16 %v370
    %v1475 = vunpack.c.l.b16 %v371
    %v1476 = vunpack.c.h.b16 %v371
    %v1477 = vunpack.c.l.b16 %v372
    %v1478 = vunpack.c.h.b16 %v372
    %v1479 = vunpack.c.l.b16 %v373
    %v1480 = vunpack.c.h.b16 %v373
    %v1481 = vunpack.c.l.b16 %v374
    %v1482 = vunpack.c.h.b16 %v374
    %v1483 = vunpack.c.l.b16 %v375
    %v1484 = vunpack.c.h.b16 %v375
    %v1485 = vunpack.c.l.b16 %v376
    %v1486 = vunpack.c.h.b16 %v376
    %v1487 = vunpack.c.l.b16 %v377
    %v1488 = vunpack.c.h.b16 %v377
    %v1489 = vunpack.c.l.b16 %v378
    %v1490 = vunpack.c.h.b16 %v378
    %v1491 = vunpack.c.l.b16 %v379
    %v1492 = vunpack.c.h.b16 %v379
    %v1493 = vunpack.c.l.b16 %v380
    %v1494 = vunpack.c.h.b16 %v380
    %v1495 = vunpack.c.l.b16 %v381
    %v1496 = vunpack.c.h.b16 %v381
    %v1497 = vunpack.c.l.b16 %v382
    %v1498 = vunpack.c.h.b16 %v382
    %v1499 = vunpack.c.l.b16 %v383
    %v1500 = vunpack.c.h.b16 %v383
    %v1501 = vunpack.c.l.b16 %v384
    %v1502 = vunpack.c.h.b16 %v384
    %v1503 = vunpack.c.l.b16 %v385
    %v1504 = vunpack.c.h.b16 %v385
    %v1505 = vunpack.c.l.b16 %v386
    %v1506 = vunpack.c.h.b16 %v386
    %v1507 = vunpack.c.l.b16 %v387
    %v1508 = vunpack.c.h.b16 %v387
    %v1509 = vunpack.c.l.b16 %v388
    %v1510 = vunpack.c.h.b16 %v388
    %v1511 = vunpack.c.l.b16 %v389
    %v1512 = vunpack.c.h.b16 %v389
    %v1513 = vunpack.c.l.b16 %v390
    %v1514 = vunpack.c.h.b16 %v390
    %v1515 = vunpack.c.l.b16 %v391
    %v1516 = vunpack.c.h.b16 %v391
    %v1517 = vunpack.c.l.b16 %v392
    %v1518 = vunpack.c.h.b16 %v392
    %v1519 = vunpack.c.l.b16 %v393
    %v1520 = vunpack.c.h.b16 %v393
    %v1521 = vunpack.c.l.b16 %v394
    %v1522 = vunpack.c.h.b16 %v394
    %v1523 = vunpack.c.l.b16 %v395
    %v1524 = vunpack.c.h.b16 %v395
    %v1525 = vunpack.c.l.b16 %v396
    %v1526 = vunpack.c.h.b16 %v396
    %v1527 = vunpack.c.l.b16 %v397
    %v1528 = vunpack.c.h.b16 %v397
    %v1529 = vunpack.c.l.b16 %v398
    %v1530 = vunpack.c.h.b16 %v398
    %v1531 = vunpack.c.l.b16 %v399
    %v1532 = vunpack.c.h.b16 %v399
    %v1533 = vunpack.c.l.b16 %v400
    %v1534 = vunpack.c.h.b16 %v400
    %v1535 = vunpack.c.l.b16 %v401
    %v1536 = vunpack.c.h.b16 %v401
    %v1537 = vunpack.c.l.b16 %v402
    %v1538 = vunpack.c.h.b16 %v402
    %v1539 = vunpack.c.l.b16 %v403
    %v1540 = vunpack.c.h.b16 %v403
    %v1541 = vunpack.c.l.b16 %v404
    %v1542 = vunpack.c.h.b16 %v404
    %v1543 = vunpack.c.l.b16 %v405
    %v1544 = vunpack.c.h.b16 %v405
    %v1545 = vunpack.c.l.b16 %v406
    %v1546 = vunpack.c.h.b16 %v406
    %v1547 = vunpack.c.l.b16 %v407
    %v1548 = vunpack.c.h.b16 %v407
    %v1549 = vunpack.c.l.b16 %v408
    %v1550 = vunpack.c.h.b16 %v408
    %v1551 = vunpack.c.l.b16 %v409
    %v1552 = vunpack.c.h.b16 %v409
    %v1553 = vunpack.c.l.b16 %v410
    %v1554 = vunpack.c.h.b16 %v410
    %v1555 = vunpack.c.l.b16 %v411
    %v1556 = vunpack.c.h.b16 %v411
    %v1557 = vunpack.c.l.b16 %v412
    %v1558 = vunpack.c.h.b16 %v412
    %v1559 = vunpack.c.l.b16 %v413
    %v1560 = vunpack.c.h.b16 %v413
    %v1561 = vunpack.c.l.b16 %v414
    %v1562 = vunpack.c.h.b16 %v414
    %v1563 = vunpack.c.l.b16 %v415
    %v1564 = vunpack.c.h.b16 %v415
    %v1565 = vunpack.c.l.b16 %v416
    %v1566 = vunpack.c.h.b16 %v416
    %v1567 = vunpack.c.l.b16 %v417
    %v1568 = vunpack.c.h.b16 %v417
    %v1569 = vunpack.c.l.b16 %v418
    %v1570 = vunpack.c.h.b16 %v418
    %v1571 = vunpack.c.l.b16 %v419
    %v1572 = vunpack.c.h.b16 %v419
    %v1573 = vunpack.c.l.b16 %v420
    %v1574 = vunpack.c.h.b16 %v420
    %v1575 = vunpack.c.l.b16 %v421
    %v1576 = vunpack.c.h.b16 %v421
    %v1577 = vunpack.c.l.b16 %v422
    %v1578 = vunpack.c.h.b16 %v422
    %v1579 = vunpack.c.l.b16 %v423
    %v1580 = vunpack.c.h.b16 %v423
    %v1581 = vunpack.c.l.b16 %v424
    %v1582 = vunpack.c.h.b16 %v424
    %v1583 = vunpack.c.l.b16 %v425
    %v1584 = vunpack.c.h.b16 %v425
    %v1585 = vunpack.c.l.b16 %v426
    %v1586 = vunpack.c.h.b16 %v426
    %v1587 = vunpack.c.l.b16 %v427
    %v1588 = vunpack.c.h.b16 %v427
    %v1589 = vunpack.c.l.b16 %v428
    %v1590 = vunpack.c.h.b16 %v428
    %v1591 = vunpack.c.l.b16 %v429
    %v1592 = vunpack.c.h.b16 %v429
    %v1593 = vunpack.c.l.b16 %v430
    %v1594 = vunpack.c.h.b16 %v430
    %v1595 = vunpack.c.l.b16 %v431
    %v1596 = vunpack.c.h.b16 %v431
    %v1597 = vunpack.c.l.b16 %v432
    %v1598 = vunpack.c.h.b16 %v432
    %v1599 = vunpack.c.l.b16 %v433
    %v1600 = vunpack.c.h.b16 %v433
    %v1601 = vunpack.c.l.b16 %v434
    %v1602 = vunpack.c.h.b16 %v434
    %v1603 = vunpack.c.l.b16 %v435
    %v1604 = vunpack.c.h.b16 %v435
    %v1605 = vunpack.c.l.b16 %v436
    %v1606 = vunpack.c.h.b16 %v436
    %v1607 = vunpack.c.l.b16 %v437
    %v1608 = vunpack.c.h.b16 %v437
    %v1609 = vunpack.c.l.b16 %v438
    %v1610 = vunpack.c.h.b16 %v438
    %v1611 = vunpack.c.l.b16 %v439
    %v1612 = vunpack.c.h.b16 %v439
    %v1613 = vunpack.c.l.b16 %v440
    %v1614 = vunpack.c.h.b16 %v440
    %v1615 = vunpack.c.l.b16 %v441
    %v1616 = vunpack.c.h.b16 %v441
    %v1617 = vunpack.c.l.b16 %v442
    %v1618 = vunpack.c.h.b16 %v442
    %v1619 = vunpack.c.l.b16 %v443
    %v1620 = vunpack.c.h.b16 %v443
    %v1621 = vunpack.c.l.b16 %v444
    %v1622 = vunpack.c.h.b16 %v444
    %v1623 = vunpack.c.l.b16 %v445
    %v1624 = vunpack.c.h.b16 %v445
    %v1625 = vunpack.c.l.b16 %v446
    %v1626 = vunpack.c.h.b16 %v446
    %v1627 = vunpack.c.l.b16 %v447
    %v1628 = vunpack.c.h.b16 %v447
    %v1629 = vunpack.c.l.b16 %v448
    %v1630 = vunpack.c.h.b16 %v448
    %v1631 = vunpack.c.l.b16 %v449
    %v1632 = vunpack.c.h.b16 %v449
    %v1633 = vunpack.c.l.b16 %v450
    %v1634 = vunpack.c.h.b16 %v450
    %v1635 = vunpack.c.l.b16 %v451
    %v1636 = vunpack.c.h.b16 %v451
    %v1637 = vunpack.c.l.b16 %v452
    %v1638 = vunpack.c.h.b16 %v452
    %v1639 = vunpack.c.l.b16 %v453
    %v1640 = vunpack.c.h.b16 %v453
    %v1641 = vunpack.c.l.b16 %v454
    %v1642 = vunpack.c.h.b16 %v454
    %v1643 = vunpack.c.l.b16 %v455
    %v1644 = vunpack.c.h.b16 %v455
    %v1645 = vunpack.c.l.b16 %v456
    %v1646 = vunpack.c.h.b16 %v456
    %v1647 = vunpack.c.l.b16 %v457
    %v1648 = vunpack.c.h.b16 %v457
    %v1649 = vunpack.c.l.b16 %v458
    %v1650 = vunpack.c.h.b16 %v458
    %v1651 = vunpack.c.l.b16 %v459
    %v1652 = vunpack.c.h.b16 %v459
    %v1653 = vunpack.c.l.b16 %v460
    %v1654 = vunpack.c.h.b16 %v460
    %v1655 = vunpack.c.l.b16 %v461
    %v1656 = vunpack.c.h.b16 %v461
    %v1657 = vunpack.c.l.b16 %v462
    %v1658 = vunpack.c.h.b16 %v462
    %v1659 = vunpack.c.l.b16 %v463
    %v1660 = vunpack.c.h.b16 %v463
    %v1661 = vunpack.c.l.b16 %v464
    %v1662 = vunpack.c.h.b16 %v464
    %v1663 = vunpack.c.l.b16 %v465
    %v1664 = vunpack.c.h.b16 %v465
    %v1665 = vunpack.c.l.b16 %v466
    %v1666 = vunpack.c.h.b16 %v466
    %v1667 = vunpack.c.l.b16 %v467
    %v1668 = vunpack.c.h.b16 %v467
    %v1669 = vunpack.c.l.b16 %v468
    %v1670 = vunpack.c.h.b16 %v468
    %v1671 = vunpack.c.l.b16 %v469
    %v1672 = vunpack.c.h.b16 %v469
    %v1673 = vunpack.c.l.b16 %v470
    %v1674 = vunpack.c.h.b16 %v470
    %v1675 = vunpack.c.l.b16 %v471
    %v1676 = vunpack.c.h.b16 %v471
    %v1677 = vunpack.c.l.b16 %v472
    %v1678 = vunpack.c.h.b16 %v472
    %v1679 = vunpack.c.l.b16 %v473
    %v1680 = vunpack.c.h.b16 %v473
    %v1681 = vunpack.c.l.b16 %v474
    %v1682 = vunpack.c.h.b16 %v474
    %v1683 = vunpack.c.l.b16 %v475
    %v1684 = vunpack.c.h.b16 %v475
    %v1685 = vunpack.c.l.b16 %v476
    %v1686 = vunpack.c.h.b16 %v476
    %v1687 = vunpack.c.l.b16 %v477
    %v1688 = vunpack.c.h.b16 %v477
    %v1689 = vunpack.c.l.b16 %v478
    %v1690 = vunpack.c.h.b16 %v478
    %v1691 = vunpack.c.l.b16 %v479
    %v1692 = vunpack.c.h.b16 %v479
    %v1693 = vunpack.c.l.b16 %v480
    %v1694 = vunpack.c.h.b16 %v480
    %v1695 = vunpack.c.l.b16 %v481
    %v1696 = vunpack.c.h.b16 %v481
    %v1697 = vunpack.c.l.b16 %v482
    %v1698 = vunpack.c.h.b16 %v482
    %v1699 = vunpack.c.l.b16 %v483
    %v1700 = vunpack.c.h.b16 %v483
    %v1701 = vunpack.c.l.b16 %v484
    %v1702 = vunpack.c.h.b16 %v484
    %v1703 = vpack.c.b16 %v927, %v919
    %v1704 = vpack.c.b16 %v928, %v920
    %v1705 = vpack.c.b16 %v929, %v921
    %v1706 = vpack.c.b16 %v930, %v922
    %v1707 = vpack.c.b16 %v931, %v923
    %v1708 = vpack.c.b16 %v932, %v924
    %v1709 = vpack.c.b16 %v933, %v925
    %v1710 = vpack.c.b16 %v934, %v926
    %v1711 = vpack.c.b16 %v943, %v935
    %v1712 = vpack.c.b16 %v944, %v936
    %v1713 = vpack.c.b16 %v945, %v937
    %v1714 = vpack.c.b16 %v946, %v938
    %v1715 = vpack.c.b16 %v947, %v939
    %v1716 = vpack.c.b16 %v948, %v940
    %v1717 = vpack.c.b16 %v949, %v941
    %v1718 = vpack.c.b16 %v950, %v942
    %v1719 = vpack.c.b16 %v959, %v951
    %v1720 = vpack.c.b16 %v960, %v952
    %v1721 = vpack.c.b16 %v961, %v953
    %v1722 = vpack.c.b16 %v962, %v954
    %v1723 = vpack.c.b16 %v963, %v955
    %v1724 = vpack.c.b16 %v964, %v956
    %v1725 = vpack.c.b16 %v965, %v957
    %v1726 = vpack.c.b16 %v966, %v958
    %v1727 = vpack.c.b16 %v975, %v967
    %v1728 = vpack.c.b16 %v976, %v968
    %v1729 = vpack.c.b16 %v977, %v969
    %v1730 = vpack.c.b16 %v978, %v970
    %v1731 = vpack.c.b16 %v979, %v971
    %v1732 = vpack.c.b16 %v980, %v972
    %v1733 = vpack.c.b16 %v981, %v973
    %v1734 = vpack.c.b16 %v982, %v974
    %v1735 = vpack.c.b16 %v991, %v983
    %v1736 = vpack.c.b16 %v992, %v984
    %v1737 = vpack.c.b16 %v993, %v985
    %v1738 = vpack.c.b16 %v994, %v986
    %v1739 = vpack.c.b16 %v995, %v987
    %v1740 = vpack.c.b16 %v996, %v988
    %v1741 = vpack.c.b16 %v997, %v989
    %v1742 = vpack.c.b16 %v998, %v990
    %v1743 = vpack.c.b16 %v1007, %v999
    %v1744 = vpack.c.b16 %v1008, %v1000
    %v1745 = vpack.c.b16 %v1009, %v1001
    %v1746 = vpack.c.b16 %v1010, %v1002
    %v1747 = vpack.c.b16 %v1011, %v1003
    %v1748 = vpack.c.b16 %v1012, %v1004
    %v1749 = vpack.c.b16 %v1013, %v1005
    %v1750 = vpack.c.b16 %v1014, %v1006
    %v1751 = vpack.c.b16 %v1023, %v1015
    %v1752 = vpack.c.b16 %v1024, %v1016
    %v1753 = vpack.c.b16 %v1025, %v1017
    %v1754 = vpack.c.b16 %v1026, %v1018
    %v1755 = vpack.c.b16 %v1027, %v1019
    %v1756 = vpack.c.b16 %v1028, %v1020
    %v1757 = vpack.c.b16 %v1029, %v1021
    %v1758 = vpack.c.b16 %v1030, %v1022
    %v1759 = vpack.c.b16 %v1039, %v1031
    %v1760 = vpack.c.b16 %v1040, %v1032
    %v1761 = vpack.c.b16 %v1041, %v1033
    %v1762 = vpack.c.b16 %v1042, %v1034
    %v1763 = vpack.c.b16 %v1043, %v1035
    %v1764 = vpack.c.b16 %v1044, %v1036
    %v1765 = vpack.c.b16 %v1045, %v1037
    %v1766 = vpack.c.b16 %v1046, %v1038
    %v1767 = vpack.c.b16 %v1055, %v1047
    %v1768 = vpack.c.b16 %v1056, %v1048
    %v1769 = vpack.c.b16 %v1057, %v1049
    %v1770 = vpack.c.b16 %v1058, %v1050
    %v1771 = vpack.c.b16 %v1059, %v1051
    %v1772 = vpack.c.b16 %v1060, %v1052
    %v1773 = vpack.c.b16 %v1061, %v1053
    %v1774 = vpack.c.b16 %v1062, %v1054
    %v1775 = vpack.c.b16 %v1071, %v1063
    %v1776 = vpack.c.b16 %v1072, %v1064
    %v1777 = vpack.c.b16 %v1073, %v1065
    %v1778 = vpack.c.b16 %v1074, %v1066
    %v1779 = vpack.c.b16 %v1075, %v1067
    %v1780 = vpack.c.b16 %v1076, %v1068
    %v1781 = vpack.c.b16 %v1077, %v1069
    %v1782 = vpack.c.b16 %v1078, %v1070
    %v1783 = vpack.c.b16 %v1087, %v1079
    %v1784 = vpack.c.b16 %v1088, %v1080
    %v1785 = vpack.c.b16 %v1089, %v1081
    %v1786 = vpack.c.b16 %v1090, %v1082
    %v1787 = vpack.c.b16 %v1091, %v1083
    %v1788 = vpack.c.b16 %v1092, %v1084
    %v1789 = vpack.c.b16 %v1093, %v1085
    %v1790 = vpack.c.b16 %v1094, %v1086
    %v1791 = vpack.c.b16 %v1103, %v1095
    %v1792 = vpack.c.b16 %v1104, %v1096
    %v1793 = vpack.c.b16 %v1105, %v1097
    %v1794 = vpack.c.b16 %v1106, %v1098
    %v1795 = vpack.c.b16 %v1107, %v1099
    %v1796 = vpack.c.b16 %v1108, %v1100
    %v1797 = vpack.c.b16 %v1109, %v1101
    %v1798 = vpack.c.b16 %v1110, %v1102
    %v1799 = vpack.c.b16 %v1119, %v1111
    %v1800 = vpack.c.b16 %v1120, %v1112
    %v1801 = vpack.c.b16 %v1121, %v1113
    %v1802 = vpack.c.b16 %v1122, %v1114
    %v1803 = vpack.c.b16 %v1123, %v1115
    %v1804 = vpack.c.b16 %v1124, %v1116
    %v1805 = vpack.c.b16 %v1125, %v1117
    %v1806 = vpack.c.b16 %v1126, %v1118
    %v1807 = vpack.c.b16 %v1135, %v1127
    %v1808 = vpack.c.b16 %v1136, %v1128
    %v1809 = vpack.c.b16 %v1137, %v1129
    %v1810 = vpack.c.b16 %v1138, %v1130
    %v1811 = vpack.c.b16 %v1139, %v1131
    %v1812 = vpack.c.b16 %v1140, %v1132
    %v1813 = vpack.c.b16 %v1141, %v1133
    %v1814 = vpack.c.b16 %v1142, %v1134
    %v1815 = vpack.c.b16 %v1151, %v1143
    %v1816 = vpack.c.b16 %v1152, %v1144
    %v1817 = vpack.c.b16 %v1153, %v1145
    %v1818 = vpack.c.b16 %v1154, %v1146
    %v1819 = vpack.c.b16 %v1155, %v1147
    %v1820 = vpack.c.b16 %v1156, %v1148
    %v1821 = vpack.c.b16 %v1157, %v1149
    %v1822 = vpack.c.b16 %v1158, %v1150
    %v1823 = vpack.c.b16 %v1167, %v1159
    %v1824 = vpack.c.b16 %v1168, %v1160
    %v1825 = vpack.c.b16 %v1169, %v1161
    %v1826 = vpack.c.b16 %v1170, %v1162
    %v1827 = vpack.c.b16 %v1171, %v1163
    %v1828 = vpack.c.b16 %v1172, %v1164
    %v1829 = vpack.c.b16 %v1173, %v1165
    %v1830 = vpack.c.b16 %v1174, %v1166
    %v1831 = vpack.c.b16 %v1183, %v1175
    %v1832 = vpack.c.b16 %v1184, %v1176
    %v1833 = vpack.c.b16 %v1185, %v1177
    %v1834 = vpack.c.b16 %v1186, %v1178
    %v1835 = vpack.c.b16 %v1187, %v1179
    %v1836 = vpack.c.b16 %v1188, %v1180
    %v1837 = vpack.c.b16 %v1189, %v1181
    %v1838 = vpack.c.b16 %v1190, %v1182
    %v1839 = vpack.c.b16 %v1199, %v1191
    %v1840 = vpack.c.b16 %v1200, %v1192
    %v1841 = vpack.c.b16 %v1201, %v1193
    %v1842 = vpack.c.b16 %v1202, %v1194
    %v1843 = vpack.c.b16 %v1203, %v1195
    %v1844 = vpack.c.b16 %v1204, %v1196
    %v1845 = vpack.c.b16 %v1205, %v1197
    %v1846 = vpack.c.b16 %v1206, %v1198
    %v1847 = vpack.c.b16 %v1215, %v1207
    %v1848 = vpack.c.b16 %v1216, %v1208
    %v1849 = vpack.c.b16 %v1217, %v1209
    %v1850 = vpack.c.b16 %v1218, %v1210
    %v1851 = vpack.c.b16 %v1219, %v1211
    %v1852 = vpack.c.b16 %v1220, %v1212
    %v1853 = vpack.c.b16 %v1221, %v1213
    %v1854 = vpack.c.b16 %v1222, %v1214
    %v1855 = vpack.c.b16 %v1231, %v1223
    %v1856 = vpack.c.b16 %v1232, %v1224
    %v1857 = vpack.c.b16 %v1233, %v1225
    %v1858 = vpack.c.b16 %v1234, %v1226
    %v1859 = vpack.c.b16 %v1235, %v1227
    %v1860 = vpack.c.b16 %v1236, %v1228
    %v1861 = vpack.c.b16 %v1237, %v1229
    %v1862 = vpack.c.b16 %v1238, %v1230
    %v1863 = vpack.c.b16 %v1247, %v1239
    %v1864 = vpack.c.b16 %v1248, %v1240
    %v1865 = vpack.c.b16 %v1249, %v1241
    %v1866 = vpack.c.b16 %v1250, %v1242
    %v1867 = vpack.c.b16 %v1251, %v1243
    %v1868 = vpack.c.b16 %v1252, %v1244
    %v1869 = vpack.c.b16 %v1253, %v1245
    %v1870 = vpack.c.b16 %v1254, %v1246
    %v1871 = vpack.c.b16 %v1263, %v1255
    %v1872 = vpack.c.b16 %v1264, %v1256
    %v1873 = vpack.c.b16 %v1265, %v1257
    %v1874 = vpack.c.b16 %v1266, %v1258
    %v1875 = vpack.c.b16 %v1267, %v1259
    %v1876 = vpack.c.b16 %v1268, %v1260
    %v1877 = vpack.c.b16 %v1269, %v1261
    %v1878 = vpack.c.b16 %v1270, %v1262
    %v1879 = vpack.c.b16 %v1279, %v1271
    %v1880 = vpack.c.b16 %v1280, %v1272
    %v1881 = vpack.c.b16 %v1281, %v1273
    %v1882 = vpack.c.b16 %v1282, %v1274
    %v1883 = vpack.c.b16 %v1283, %v1275
    %v1884 = vpack.c.b16 %v1284, %v1276
    %v1885 = vpack.c.b16 %v1285, %v1277
    %v1886 = vpack.c.b16 %v1286, %v1278
    %v1887 = vpack.c.b16 %v1295, %v1287
    %v1888 = vpack.c.b16 %v1296, %v1288
    %v1889 = vpack.c.b16 %v1297, %v1289
    %v1890 = vpack.c.b16 %v1298, %v1290
    %v1891 = vpack.c.b16 %v1299, %v1291
    %v1892 = vpack.c.b16 %v1300, %v1292
    %v1893 = vpack.c.b16 %v1301, %v1293
    %v1894 = vpack.c.b16 %v1302, %v1294
    %v1895 = vpack.c.b16 %v1311, %v1303
    %v1896 = vpack.c.b16 %v1312, %v1304
    %v1897 = vpack.c.b16 %v1313, %v1305
    %v1898 = vpack.c.b16 %v1314, %v1306
    %v1899 = vpack.c.b16 %v1315, %v1307
    %v1900 = vpack.c.b16 %v1316, %v1308
    %v1901 = vpack.c.b16 %v1317, %v1309
    %v1902 = vpack.c.b16 %v1318, %v1310
    %v1903 = vpack.c.b16 %v1327, %v1319
    %v1904 = vpack.c.b16 %v1328, %v1320
    %v1905 = vpack.c.b16 %v1329, %v1321
    %v1906 = vpack.c.b16 %v1330, %v1322
    %v1907 = vpack.c.b16 %v1331, %v1323
    %v1908 = vpack.c.b16 %v1332, %v1324
    %v1909 = vpack.c.b16 %v1333, %v1325
    %v1910 = vpack.c.b16 %v1334, %v1326
    %v1911 = vpack.c.b16 %v1343, %v1335
    %v1912 = vpack.c.b16 %v1344, %v1336
    %v1913 = vpack.c.b16 %v1345, %v1337
    %v1914 = vpack.c.b16 %v1346, %v1338
    %v1915 = vpack.c.b16 %v1347, %v1339
    %v1916 = vpack.c.b16 %v1348, %v1340
    %v1917 = vpack.c.b16 %v1349, %v1341
    %v1918 = vpack.c.b16 %v1350, %v1342
    %v1919 = vpack.c.b16 %v1359, %v1351
    %v1920 = vpack.c.b16 %v1360, %v1352
    %v1921 = vpack.c.b16 %v1361, %v1353
    %v1922 = vpack.c.b16 %v1362, %v1354
    %v1923 = vpack.c.b16 %v1363, %v1355
    %v1924 = vpack.c.b16 %v1364, %v1356
    %v1925 = vpack.c.b16 %v1365, %v1357
    %v1926 = vpack.c.b16 %v1366, %v1358
    %v1927 = vpack.c.b16 %v1375, %v1367
    %v1928 = vpack.c.b16 %v1376, %v1368
    %v1929 = vpack.c.b16 %v1377, %v1369
    %v1930 = vpack.c.b16 %v1378, %v1370
    %v1931 = vpack.c.b16 %v1379, %v1371
    %v1932 = vpack.c.b16 %v1380, %v1372
    %v1933 = vpack.c.b16 %v1381, %v1373
    %v1934 = vpack.c.b16 %v1382, %v1374
    %v1935 = vpack.c.b16 %v1391, %v1383
    %v1936 = vpack.c.b16 %v1392, %v1384
    %v1937 = vpack.c.b16 %v1393, %v1385
    %v1938 = vpack.c.b16 %v1394, %v1386
    %v1939 = vpack.c.b16 %v1395, %v1387
    %v1940 = vpack.c.b16 %v1396, %v1388
    %v1941 = vpack.c.b16 %v1397, %v1389
    %v1942 = vpack.c.b16 %v1398, %v1390
    %v1943 = vpack.c.b16 %v1407, %v1399
    %v1944 = vpack.c.b16 %v1408, %v1400
    %v1945 = vpack.c.b16 %v1409, %v1401
    %v1946 = vpack.c.b16 %v1410, %v1402
    %v1947 = vpack.c.b16 %v1411, %v1403
    %v1948 = vpack.c.b16 %v1412, %v1404
    %v1949 = vpack.c.b16 %v1413, %v1405
    %v1950 = vpack.c.b16 %v1414, %v1406
    %v1951 = vpack.c.b16 %v1423, %v1415
    %v1952 = vpack.c.b16 %v1424, %v1416
    %v1953 = vpack.c.b16 %v1425, %v1417
    %v1954 = vpack.c.b16 %v1426, %v1418
    %v1955 = vpack.c.b16 %v1427, %v1419
    %v1956 = vpack.c.b16 %v1428, %v1420
    %v1957 = vpack.c.b16 %v1429, %v1421
    %v1958 = vpack.c.b16 %v1430, %v1422
    %v1959 = vpack.c.b16 %v1439, %v1431
    %v1960 = vpack.c.b16 %v1440, %v1432
    %v1961 = vpack.c.b16 %v1441, %v1433
    %v1962 = vpack.c.b16 %v1442, %v1434
    %v1963 = vpack.c.b16 %v1443, %v1435
    %v1964 = vpack.c.b16 %v1444, %v1436
    %v1965 = vpack.c.b16 %v1445, %v1437
    %v1966 = vpack.c.b16 %v1446, %v1438
    %v1967 = vpack.c.b16 %v1455, %v1447
    %v1968 = vpack.c.b16 %v1456, %v1448
    %v1969 = vpack.c.b16 %v1457, %v1449
    %v1970 = vpack.c.b16 %v1458, %v1450
    %v1971 = vpack.c.b16 %v1459, %v1451
    %v1972 = vpack.c.b16 %v1460, %v1452
    %v1973 = vpack.c.b16 %v1461, %v1453
    %v1974 = vpack.c.b16 %v1462, %v1454
    %v1975 = vpack.c.b16 %v1471, %v1463
    %v1976 = vpack.c.b16 %v1472, %v1464
    %v1977 = vpack.c.b16 %v1473, %v1465
    %v1978 = vpack.c.b16 %v1474, %v1466
    %v1979 = vpack.c.b16 %v1475, %v1467
    %v1980 = vpack.c.b16 %v1476, %v1468
    %v1981 = vpack.c.b16 %v1477, %v1469
    %v1982 = vpack.c.b16 %v1478, %v1470
    %v1983 = vpack.c.b16 %v1487, %v1479
    %v1984 = vpack.c.b16 %v1488, %v1480
    %v1985 = vpack.c.b16 %v1489, %v1481
    %v1986 = vpack.c.b16 %v1490, %v1482
    %v1987 = vpack.c.b16 %v1491, %v1483
    %v1988 = vpack.c.b16 %v1492, %v1484
    %v1989 = vpack.c.b16 %v1493, %v1485
    %v1990 = vpack.c.b16 %v1494, %v1486
    %v1991 = vpack.c.b16 %v1503, %v1495
    %v1992 = vpack.c.b16 %v1504, %v1496
    %v1993 = vpack.c.b16 %v1505, %v1497
    %v1994 = vpack.c.b16 %v1506, %v1498
    %v1995 = vpack.c.b16 %v1507, %v1499
    %v1996 = vpack.c.b16 %v1508, %v1500
    %v1997 = vpack.c.b16 %v1509, %v1501
    %v1998 = vpack.c.b16 %v1510, %v1502
    %v1999 = vpack.c.b16 %v1519, %v1511
    %v2000 = vpack.c.b16 %v1520, %v1512
    %v2001 = vpack.c.b16 %v1521, %v1513
    %v2002 = vpack.c.b16 %v1522, %v1514
    %v2003 = vpack.c.b16 %v1523, %v1515
    %v2004 = vpack.c.b16 %v1524, %v1516
    %v2005 = vpack.c.b16 %v1525, %v1517
    %v2006 = vpack.c.b16 %v1526, %v1518
    %v2007 = vpack.c.b16 %v1535, %v1527
    %v2008 = vpack.c.b16 %v1536, %v1528
    %v2009 = vpack.c.b16 %v1537, %v1529
    %v2010 = vpack.c.b16 %v1538, %v1530
    %v2011 = vpack.c.b16 %v1539, %v1531
    %v2012 = vpack.c.b16 %v1540, %v1532
    %v2013 = vpack.c.b16 %v1541, %v1533
    %v2014 = vpack.c.b16 %v1542, %v1534
    %v2015 = vpack.c.b16 %v1551, %v1543
    %v2016 = vpack.c.b16 %v1552, %v1544
    %v2017 = vpack.c.b16 %v1553, %v1545
    %v2018 = vpack.c.b16 %v1554, %v1546
    %v2019 = vpack.c.b16 %v1555, %v1547
    %v2020 = vpack.c.b16 %v1556, %v1548
    %v2021 = vpack.c.b16 %v1557, %v1549
    %v2022 = vpack.c.b16 %v1558, %v1550
    %v2023 = vpack.c.b16 %v1567, %v1559
    %v2024 = vpack.c.b16 %v1568, %v1560
    %v2025 = vpack.c.b16 %v1569, %v1561
    %v2026 = vpack.c.b16 %v1570, %v1562
    %v2027 = vpack.c.b16 %v1571, %v1563
    %v2028 = vpack.c.b16 %v1572, %v1564
    %v2029 = vpack.c.b16 %v1573, %v1565
    %v2030 = vpack.c.b16 %v1574, %v1566
    %v2031 = vpack.c.b16 %v1583, %v1575
    %v2032 = vpack.c.b16 %v1584, %v1576
    %v2033 = vpack.c.b16 %v1585, %v1577
    %v2034 = vpack.c.b16 %v1586, %v1578
    %v2035 = vpack.c.b16 %v1587, %v1579
    %v2036 = vpack.c.b16 %v1588, %v1580
    %v2037 = vpack.c.b16 %v1589, %v1581
    %v2038 = vpack.c.b16 %v1590, %v1582
    %v2039 = vpack.c.b16 %v1599, %v1591
    %v2040 = vpack.c.b16 %v1600, %v1592
    %v2041 = vpack.c.b16 %v1601, %v1593
    %v2042 = vpack.c.b16 %v1602, %v1594
    %v2043 = vpack.c.b16 %v1603, %v1595
    %v2044 = vpack.c.b16 %v1604, %v1596
    %v2045 = vpack.c.b16 %v1605, %v1597
    %v2046 = vpack.c.b16 %v1606, %v1598
    %v2047 = vpack.c.b16 %v1615, %v1607
    %v2048 = vpack.c.b16 %v1616, %v1608
    %v2049 = vpack.c.b16 %v1617, %v1609
    %v2050 = vpack.c.b16 %v1618, %v1610
    %v2051 = vpack.c.b16 %v1619, %v1611
    %v2052 = vpack.c.b16 %v1620, %v1612
    %v2053 = vpack.c.b16 %v1621, %v1613
    %v2054 = vpack.c.b16 %v1622, %v1614
    %v2055 = vpack.c.b16 %v1631, %v1623
    %v2056 = vpack.c.b16 %v1632, %v1624
    %v2057 = vpack.c.b16 %v1633, %v1625
    %v2058 = vpack.c.b16 %v1634, %v1626
    %v2059 = vpack.c.b16 %v1635, %v1627
    %v2060 = vpack.c.b16 %v1636, %v1628
    %v2061 = vpack.c.b16 %v1637, %v1629
    %v2062 = vpack.c.b16 %v1638, %v1630
    %v2063 = vpack.c.b16 %v1647, %v1639
    %v2064 = vpack.c.b16 %v1648, %v1640
    %v2065 = vpack.c.b16 %v1649, %v1641
    %v2066 = vpack.c.b16 %v1650, %v1642
    %v2067 = vpack.c.b16 %v1651, %v1643
    %v2068 = vpack.c.b16 %v1652, %v1644
    %v2069 = vpack.c.b16 %v1653, %v1645
    %v2070 = vpack.c.b16 %v1654, %v1646
    %v2071 = vpack.c.b16 %v1663, %v1655
    %v2072 = vpack.c.b16 %v1664, %v1656
    %v2073 = vpack.c.b16 %v1665, %v1657
    %v2074 = vpack.c.b16 %v1666, %v1658
    %v2075 = vpack.c.b16 %v1667, %v1659
    %v2076 = vpack.c.b16 %v1668, %v1660
    %v2077 = vpack.c.b16 %v1669, %v1661
    %v2078 = vpack.c.b16 %v1670, %v1662
    %v2079 = vpack.c.b16 %v1679, %v1671
    %v2080 = vpack.c.b16 %v1680, %v1672
    %v2081 = vpack.c.b16 %v1681, %v1673
    %v2082 = vpack.c.b16 %v1682, %v1674
    %v2083 = vpack.c.b16 %v1683, %v1675
    %v2084 = vpack.c.b16 %v1684, %v1676
    %v2085 = vpack.c.b16 %v1685, %v1677
    %v2086 = vpack.c.b16 %v1686, %v1678
    %v2087 = vpack.c.b16 %v1695, %v1687
    %v2088 = vpack.c.b16 %v1696, %v1688
    %v2089 = vpack.c.b16 %v1697, %v1689
    %v2090 = vpack.c.b16 %v1698, %v1690
    %v2091 = vpack.c.b16 %v1699, %v1691
    %v2092 = vpack.c.b16 %v1700, %v1692
    %v2093 = vpack.c.b16 %v1701, %v1693
    %v2094 = vpack.c.b16 %v1702, %v1694
    %vm2487 = vcmask 130048
    %v2489 = vsel %vm2487, %v92, 0
    %2491 = vmatprep.subr.bf16.mxu0 %v1704
    %2492 = vmatpush1.bf16.msra.mxu0 %v1703
    %2493 = vmatprep.subr.bf16.mxu0 %v1712
    %2494 = vmatpush1.bf16.msra.mxu0 %v1711
    %2495 = vmatprep.subr.bf16.mxu0 %v1720
    %2496 = vmatpush1.bf16.msra.mxu0 %v1719
    %2497 = vmatprep.subr.bf16.mxu0 %v1728
    %2498 = vmatpush1.bf16.msra.mxu0 %v1727
    %2499 = vmatprep.subr.bf16.mxu0 %v1736
    %2500 = vmatpush1.bf16.msra.mxu0 %v1735
    %2501 = vmatprep.subr.bf16.mxu0 %v1744
    %2502 = vmatpush1.bf16.msra.mxu0 %v1743
    %2503 = vmatprep.subr.bf16.mxu0 %v1752
    %2504 = vmatpush1.bf16.msra.mxu0 %v1751
    %2505 = vmatprep.subr.bf16.mxu0 %v1760
    %2506 = vmatpush1.bf16.msra.mxu0 %v1759
    %2507 = vmatprep.subr.bf16.mxu0 %v1768
    %2508 = vmatpush1.bf16.msra.mxu0 %v1767
    %2509 = vmatprep.subr.bf16.mxu0 %v1776
    %2510 = vmatpush1.bf16.msra.mxu0 %v1775
    %2511 = vmatprep.subr.bf16.mxu0 %v1784
    %2512 = vmatpush1.bf16.msra.mxu0 %v1783
    %2513 = vmatprep.subr.bf16.mxu0 %v1792
    %2514 = vmatpush1.bf16.msra.mxu0 %v1791
    %2515 = vmatprep.subr.bf16.mxu0 %v1800
    %2516 = vmatpush1.bf16.msra.mxu0 %v1799
    %2517 = vmatprep.subr.bf16.mxu0 %v1808
    %2518 = vmatpush1.bf16.msra.mxu0 %v1807
    %2519 = vmatprep.subr.bf16.mxu0 %v1816
    %2520 = vmatpush1.bf16.msra.mxu0 %v1815
    %2521 = vmatprep.subr.bf16.mxu0 %v1824
    %2522 = vmatpush1.bf16.msra.mxu0 %v1823
    %2523 = vmatprep.mubr.bf16.mxu0 %v87
    %2524 = vmatmul.mubr.bf16.gmra.mrb[0].mxu0 %v86
    %v2525 = vpop.f32.mrb[0].mxu0
    %v2526 = vadd.f32 %v490, %v2525
    %v2527 = vpop.f32.mrb[0].mxu0
    %v2528 = vadd.f32 %v494, %v2527
    %v2529 = vpop.f32.mrb[0].mxu0
    %v2530 = vadd.f32 %v490, %v2529
    %v2531 = vpop.f32.mrb[0].mxu0
    %v2532 = vadd.f32 %v494, %v2531
    %2533 = vdwg.mxu0
    %2534 = vmatprep.subr.bf16.mxu0 %v1832
    %2535 = vmatpush1.bf16.msra.mxu0 %v1831
    %2536 = vmatprep.subr.bf16.mxu0 %v1840
    %2537 = vmatpush1.bf16.msra.mxu0 %v1839
    %2538 = vmatprep.subr.bf16.mxu0 %v1848
    %2539 = vmatpush1.bf16.msra.mxu0 %v1847
    %2540 = vmatprep.subr.bf16.mxu0 %v1856
    %2541 = vmatpush1.bf16.msra.mxu0 %v1855
    %2542 = vmatprep.subr.bf16.mxu0 %v1864
    %2543 = vmatpush1.bf16.msra.mxu0 %v1863
    %2544 = vmatprep.subr.bf16.mxu0 %v1872
    %2545 = vmatpush1.bf16.msra.mxu0 %v1871
    %2546 = vmatprep.subr.bf16.mxu0 %v1880
    %2547 = vmatpush1.bf16.msra.mxu0 %v1879
    %2548 = vmatprep.subr.bf16.mxu0 %v1888
    %2549 = vmatpush1.bf16.msra.mxu0 %v1887
    %2550 = vmatprep.subr.bf16.mxu0 %v1896
    %2551 = vmatpush1.bf16.msra.mxu0 %v1895
    %2552 = vmatprep.subr.bf16.mxu0 %v1904
    %2553 = vmatpush1.bf16.msra.mxu0 %v1903
    %2554 = vmatprep.subr.bf16.mxu0 %v1912
    %2555 = vmatpush1.bf16.msra.mxu0 %v1911
    %2556 = vmatprep.subr.bf16.mxu0 %v1920
    %2557 = vmatpush1.bf16.msra.mxu0 %v1919
    %2558 = vmatprep.subr.bf16.mxu0 %v1928
    %2559 = vmatpush1.bf16.msra.mxu0 %v1927
    %2560 = vmatprep.subr.bf16.mxu0 %v1936
    %2561 = vmatpush1.bf16.msra.mxu0 %v1935
    %2562 = vmatprep.subr.bf16.mxu0 %v1944
    %2563 = vmatpush1.bf16.msra.mxu0 %v1943
    %2564 = vmatprep.subr.bf16.mxu0 %v1952
    %2565 = vmatpush1.bf16.msra.mxu0 %v1951
    %2566 = vmatprep.mubr.bf16.mxu0 %v89
    %2567 = vmatmul.mubr.bf16.gmra.mrb[0].mxu0 %v88
    %v2568 = vpop.f32.mrb[0].mxu0
    %v2569 = vadd.f32 %v2526, %v2568
    %v2570 = vpop.f32.mrb[0].mxu0
    %v2571 = vadd.f32 %v2528, %v2570
    %v2572 = vpop.f32.mrb[0].mxu0
    %v2573 = vadd.f32 %v2530, %v2572
    %v2574 = vpop.f32.mrb[0].mxu0
    %v2575 = vadd.f32 %v2532, %v2574
    %2576 = vdwg.mxu0
    %2577 = vmatprep.subr.bf16.mxu0 %v1960
    %2578 = vmatpush1.bf16.msra.mxu0 %v1959
    %2579 = vmatprep.subr.bf16.mxu0 %v1968
    %2580 = vmatpush1.bf16.msra.mxu0 %v1967
    %2581 = vmatprep.subr.bf16.mxu0 %v1976
    %2582 = vmatpush1.bf16.msra.mxu0 %v1975
    %2583 = vmatprep.subr.bf16.mxu0 %v1984
    %2584 = vmatpush1.bf16.msra.mxu0 %v1983
    %2585 = vmatprep.subr.bf16.mxu0 %v1992
    %2586 = vmatpush1.bf16.msra.mxu0 %v1991
    %2587 = vmatprep.subr.bf16.mxu0 %v2000
    %2588 = vmatpush1.bf16.msra.mxu0 %v1999
    %2589 = vmatprep.subr.bf16.mxu0 %v2008
    %2590 = vmatpush1.bf16.msra.mxu0 %v2007
    %2591 = vmatprep.subr.bf16.mxu0 %v2016
    %2592 = vmatpush1.bf16.msra.mxu0 %v2015
    %2593 = vmatprep.subr.bf16.mxu0 %v2024
    %2594 = vmatpush1.bf16.msra.mxu0 %v2023
    %2595 = vmatprep.subr.bf16.mxu0 %v2032
    %2596 = vmatpush1.bf16.msra.mxu0 %v2031
    %2597 = vmatprep.subr.bf16.mxu0 %v2040
    %2598 = vmatpush1.bf16.msra.mxu0 %v2039
    %2599 = vmatprep.subr.bf16.mxu0 %v2048
    %2600 = vmatpush1.bf16.msra.mxu0 %v2047
    %2601 = vmatprep.subr.bf16.mxu0 %v2056
    %2602 = vmatpush1.bf16.msra.mxu0 %v2055
    %2603 = vmatprep.subr.bf16.mxu0 %v2064
    %2604 = vmatpush1.bf16.msra.mxu0 %v2063
    %2605 = vmatprep.subr.bf16.mxu0 %v2072
    %2606 = vmatpush1.bf16.msra.mxu0 %v2071
    %2607 = vmatprep.subr.bf16.mxu0 %v2080
    %2608 = vmatpush1.bf16.msra.mxu0 %v2079
    %2609 = vmatprep.mubr.bf16.mxu0 %v91
    %2610 = vmatmul.mubr.bf16.gmra.mrb[0].mxu0 %v90
    %v2611 = vpop.f32.mrb[0].mxu0
    %v2612 = vadd.f32 %v2569, %v2611
    %v2613 = vpop.f32.mrb[0].mxu0
    %v2614 = vadd.f32 %v2571, %v2613
    %v2615 = vpop.f32.mrb[0].mxu0
    %v2616 = vadd.f32 %v2573, %v2615
    %v2617 = vpop.f32.mrb[0].mxu0
    %v2618 = vadd.f32 %v2575, %v2617
    %2619 = vdwg.mxu0
    %2620 = vmatprep.subr.bf16.mxu0 %v2088
    %2621 = vmatpush1.bf16.msra.mxu0 %v2087
    %2622 = vmatprep.subr.bf16.mxu0 0
    %2623 = vmatpush1.bf16.msra.mxu0 0
    %2624 = vmatprep.subr.bf16.mxu0 0
    %2625 = vmatpush1.bf16.msra.mxu0 0
    %2626 = vmatprep.subr.bf16.mxu0 0
    %2627 = vmatpush1.bf16.msra.mxu0 0
    %2628 = vmatprep.subr.bf16.mxu0 0
    %2629 = vmatpush1.bf16.msra.mxu0 0
    %2630 = vmatprep.subr.bf16.mxu0 0
    %2631 = vmatpush1.bf16.msra.mxu0 0
    %2632 = vmatprep.subr.bf16.mxu0 0
    %2633 = vmatpush1.bf16.msra.mxu0 0
    %2634 = vmatprep.subr.bf16.mxu0 0
    %2635 = vmatpush1.bf16.msra.mxu0 0
    %2636 = vmatprep.subr.bf16.mxu0 0
    %2637 = vmatpush1.bf16.msra.mxu0 0
    %2638 = vmatprep.subr.bf16.mxu0 0
    %2639 = vmatpush1.bf16.msra.mxu0 0
    %2640 = vmatprep.subr.bf16.mxu0 0
    %2641 = vmatpush1.bf16.msra.mxu0 0
    %2642 = vmatprep.subr.bf16.mxu0 0
    %2643 = vmatpush1.bf16.msra.mxu0 0
    %2644 = vmatprep.subr.bf16.mxu0 0
    %2645 = vmatpush1.bf16.msra.mxu0 0
    %2646 = vmatprep.subr.bf16.mxu0 0
    %2647 = vmatpush1.bf16.msra.mxu0 0
    %2648 = vmatprep.subr.bf16.mxu0 0
    %2649 = vmatpush1.bf16.msra.mxu0 0
    %2650 = vmatprep.subr.bf16.mxu0 0
    %2651 = vmatpush1.bf16.msra.mxu0 0
    %2652 = vmatprep.mubr.bf16.mxu0 0
    %2653 = vmatmul.mubr.bf16.gmra.mrb[0].mxu0 %v2489
    %v2654 = vpop.f32.mrb[0].mxu0
    %v2655 = vadd.f32 %v2612, %v2654
    %v2656 = vpop.f32.mrb[0].mxu0
    %v2657 = vadd.f32 %v2614, %v2656
    %v2658 = vpop.f32.mrb[0].mxu0
    %v2659 = vadd.f32 %v2616, %v2658
    %v2660 = vpop.f32.mrb[0].mxu0
    %v2661 = vadd.f32 %v2618, %v2660
    %2662 = vdwg.mxu0
    %2663 = vmatprep.subr.bf16.mxu0 %v1706
    %2664 = vmatpush1.bf16.msra.mxu0 %v1705
    %2665 = vmatprep.subr.bf16.mxu0 %v1714
    %2666 = vmatpush1.bf16.msra.mxu0 %v1713
    %2667 = vmatprep.subr.bf16.mxu0 %v1722
    %2668 = vmatpush1.bf16.msra.mxu0 %v1721
    %2669 = vmatprep.subr.bf16.mxu0 %v1730
    %2670 = vmatpush1.bf16.msra.mxu0 %v1729
    %2671 = vmatprep.subr.bf16.mxu0 %v1738
    %2672 = vmatpush1.bf16.msra.mxu0 %v1737
    %2673 = vmatprep.subr.bf16.mxu0 %v1746
    %2674 = vmatpush1.bf16.msra.mxu0 %v1745
    %2675 = vmatprep.subr.bf16.mxu0 %v1754
    %2676 = vmatpush1.bf16.msra.mxu0 %v1753
    %2677 = vmatprep.subr.bf16.mxu0 %v1762
    %2678 = vmatpush1.bf16.msra.mxu0 %v1761
    %2679 = vmatprep.subr.bf16.mxu0 %v1770
    %2680 = vmatpush1.bf16.msra.mxu0 %v1769
    %2681 = vmatprep.subr.bf16.mxu0 %v1778
    %2682 = vmatpush1.bf16.msra.mxu0 %v1777
    %2683 = vmatprep.subr.bf16.mxu0 %v1786
    %2684 = vmatpush1.bf16.msra.mxu0 %v1785
    %2685 = vmatprep.subr.bf16.mxu0 %v1794
    %2686 = vmatpush1.bf16.msra.mxu0 %v1793
    %2687 = vmatprep.subr.bf16.mxu0 %v1802
    %2688 = vmatpush1.bf16.msra.mxu0 %v1801
    %2689 = vmatprep.subr.bf16.mxu0 %v1810
    %2690 = vmatpush1.bf16.msra.mxu0 %v1809
    %2691 = vmatprep.subr.bf16.mxu0 %v1818
    %2692 = vmatpush1.bf16.msra.mxu0 %v1817
    %2693 = vmatprep.subr.bf16.mxu0 %v1826
    %2694 = vmatpush1.bf16.msra.mxu0 %v1825
    %2695 = vmatprep.mubr.bf16.mxu0 %v87
    %2696 = vmatmul.mubr.bf16.gmra.mrb[0].mxu0 %v86
    %v2697 = vpop.f32.mrb[0].mxu0
    %v2698 = vadd.f32 %v498, %v2697
    %v2699 = vpop.f32.mrb[0].mxu0
    %v2700 = vadd.f32 %v502, %v2699
    %v2701 = vpop.f32.mrb[0].mxu0
    %v2702 = vadd.f32 %v498, %v2701
    %v2703 = vpop.f32.mrb[0].mxu0
    %v2704 = vadd.f32 %v502, %v2703
    %2705 = vdwg.mxu0
    %2706 = vmatprep.subr.bf16.mxu0 %v1834
    %2707 = vmatpush1.bf16.msra.mxu0 %v1833
    %2708 = vmatprep.subr.bf16.mxu0 %v1842
    %2709 = vmatpush1.bf16.msra.mxu0 %v1841
    %2710 = vmatprep.subr.bf16.mxu0 %v1850
    %2711 = vmatpush1.bf16.msra.mxu0 %v1849
    %2712 = vmatprep.subr.bf16.mxu0 %v1858
    %2713 = vmatpush1.bf16.msra.mxu0 %v1857
    %2714 = vmatprep.subr.bf16.mxu0 %v1866
    %2715 = vmatpush1.bf16.msra.mxu0 %v1865
    %2716 = vmatprep.subr.bf16.mxu0 %v1874
    %2717 = vmatpush1.bf16.msra.mxu0 %v1873
    %2718 = vmatprep.subr.bf16.mxu0 %v1882
    %2719 = vmatpush1.bf16.msra.mxu0 %v1881
    %2720 = vmatprep.subr.bf16.mxu0 %v1890
    %2721 = vmatpush1.bf16.msra.mxu0 %v1889
    %2722 = vmatprep.subr.bf16.mxu0 %v1898
    %2723 = vmatpush1.bf16.msra.mxu0 %v1897
    %2724 = vmatprep.subr.bf16.mxu0 %v1906
    %2725 = vmatpush1.bf16.msra.mxu0 %v1905
    %2726 = vmatprep.subr.bf16.mxu0 %v1914
    %2727 = vmatpush1.bf16.msra.mxu0 %v1913
    %2728 = vmatprep.subr.bf16.mxu0 %v1922
    %2729 = vmatpush1.bf16.msra.mxu0 %v1921
    %2730 = vmatprep.subr.bf16.mxu0 %v1930
    %2731 = vmatpush1.bf16.msra.mxu0 %v1929
    %2732 = vmatprep.subr.bf16.mxu0 %v1938
    %2733 = vmatpush1.bf16.msra.mxu0 %v1937
    %2734 = vmatprep.subr.bf16.mxu0 %v1946
    %2735 = vmatpush1.bf16.msra.mxu0 %v1945
    %2736 = vmatprep.subr.bf16.mxu0 %v1954
    %2737 = vmatpush1.bf16.msra.mxu0 %v1953
    %2738 = vmatprep.mubr.bf16.mxu0 %v89
    %2739 = vmatmul.mubr.bf16.gmra.mrb[0].mxu0 %v88
    %v2740 = vpop.f32.mrb[0].mxu0
    %v2741 = vadd.f32 %v2698, %v2740
    %v2742 = vpop.f32.mrb[0].mxu0
    %v2743 = vadd.f32 %v2700, %v2742
    %v2744 = vpop.f32.mrb[0].mxu0
    %v2745 = vadd.f32 %v2702, %v2744
    %v2746 = vpop.f32.mrb[0].mxu0
    %v2747 = vadd.f32 %v2704, %v2746
    %2748 = vdwg.mxu0
    %2749 = vmatprep.subr.bf16.mxu0 %v1962
    %2750 = vmatpush1.bf16.msra.mxu0 %v1961
    %2751 = vmatprep.subr.bf16.mxu0 %v1970
    %2752 = vmatpush1.bf16.msra.mxu0 %v1969
    %2753 = vmatprep.subr.bf16.mxu0 %v1978
    %2754 = vmatpush1.bf16.msra.mxu0 %v1977
    %2755 = vmatprep.subr.bf16.mxu0 %v1986
    %2756 = vmatpush1.bf16.msra.mxu0 %v1985
    %2757 = vmatprep.subr.bf16.mxu0 %v1994
    %2758 = vmatpush1.bf16.msra.mxu0 %v1993
    %2759 = vmatprep.subr.bf16.mxu0 %v2002
    %2760 = vmatpush1.bf16.msra.mxu0 %v2001
    %2761 = vmatprep.subr.bf16.mxu0 %v2010
    %2762 = vmatpush1.bf16.msra.mxu0 %v2009
    %2763 = vmatprep.subr.bf16.mxu0 %v2018
    %2764 = vmatpush1.bf16.msra.mxu0 %v2017
    %2765 = vmatprep.subr.bf16.mxu0 %v2026
    %2766 = vmatpush1.bf16.msra.mxu0 %v2025
    %2767 = vmatprep.subr.bf16.mxu0 %v2034
    %2768 = vmatpush1.bf16.msra.mxu0 %v2033
    %2769 = vmatprep.subr.bf16.mxu0 %v2042
    %2770 = vmatpush1.bf16.msra.mxu0 %v2041
    %2771 = vmatprep.subr.bf16.mxu0 %v2050
    %2772 = vmatpush1.bf16.msra.mxu0 %v2049
    %2773 = vmatprep.subr.bf16.mxu0 %v2058
    %2774 = vmatpush1.bf16.msra.mxu0 %v2057
    %2775 = vmatprep.subr.bf16.mxu0 %v2066
    %2776 = vmatpush1.bf16.msra.mxu0 %v2065
    %2777 = vmatprep.subr.bf16.mxu0 %v2074
    %2778 = vmatpush1.bf16.msra.mxu0 %v2073
    %2779 = vmatprep.subr.bf16.mxu0 %v2082
    %2780 = vmatpush1.bf16.msra.mxu0 %v2081
    %2781 = vmatprep.mubr.bf16.mxu0 %v91
    %2782 = vmatmul.mubr.bf16.gmra.mrb[0].mxu0 %v90
    %v2783 = vpop.f32.mrb[0].mxu0
    %v2784 = vadd.f32 %v2741, %v2783
    %v2785 = vpop.f32.mrb[0].mxu0
    %v2786 = vadd.f32 %v2743, %v2785
    %v2787 = vpop.f32.mrb[0].mxu0
    %v2788 = vadd.f32 %v2745, %v2787
    %v2789 = vpop.f32.mrb[0].mxu0
    %v2790 = vadd.f32 %v2747, %v2789
    %2791 = vdwg.mxu0
    %2792 = vmatprep.subr.bf16.mxu0 %v2090
    %2793 = vmatpush1.bf16.msra.mxu0 %v2089
    %2794 = vmatprep.subr.bf16.mxu0 0
    %2795 = vmatpush1.bf16.msra.mxu0 0
    %2796 = vmatprep.subr.bf16.mxu0 0
    %2797 = vmatpush1.bf16.msra.mxu0 0
    %2798 = vmatprep.subr.bf16.mxu0 0
    %2799 = vmatpush1.bf16.msra.mxu0 0
    %2800 = vmatprep.subr.bf16.mxu0 0
    %2801 = vmatpush1.bf16.msra.mxu0 0
    %2802 = vmatprep.subr.bf16.mxu0 0
    %2803 = vmatpush1.bf16.msra.mxu0 0
    %2804 = vmatprep.subr.bf16.mxu0 0
    %2805 = vmatpush1.bf16.msra.mxu0 0
    %2806 = vmatprep.subr.bf16.mxu0 0
    %2807 = vmatpush1.bf16.msra.mxu0 0
    %2808 = vmatprep.subr.bf16.mxu0 0
    %2809 = vmatpush1.bf16.msra.mxu0 0
    %2810 = vmatprep.subr.bf16.mxu0 0
    %2811 = vmatpush1.bf16.msra.mxu0 0
    %2812 = vmatprep.subr.bf16.mxu0 0
    %2813 = vmatpush1.bf16.msra.mxu0 0
    %2814 = vmatprep.subr.bf16.mxu0 0
    %2815 = vmatpush1.bf16.msra.mxu0 0
    %2816 = vmatprep.subr.bf16.mxu0 0
    %2817 = vmatpush1.bf16.msra.mxu0 0
    %2818 = vmatprep.subr.bf16.mxu0 0
    %2819 = vmatpush1.bf16.msra.mxu0 0
    %2820 = vmatprep.subr.bf16.mxu0 0
    %2821 = vmatpush1.bf16.msra.mxu0 0
    %2822 = vmatprep.subr.bf16.mxu0 0
    %2823 = vmatpush1.bf16.msra.mxu0 0
    %2824 = vmatprep.mubr.bf16.mxu0 0
    %2825 = vmatmul.mubr.bf16.gmra.mrb[0].mxu0 %v2489
    %v2826 = vpop.f32.mrb[0].mxu0
    %v2827 = vadd.f32 %v2784, %v2826
    %v2828 = vpop.f32.mrb[0].mxu0
    %v2829 = vadd.f32 %v2786, %v2828
    %v2830 = vpop.f32.mrb[0].mxu0
    %v2831 = vadd.f32 %v2788, %v2830
    %v2832 = vpop.f32.mrb[0].mxu0
    %v2833 = vadd.f32 %v2790, %v2832
    %2834 = vdwg.mxu0
    %2835 = vmatprep.subr.bf16.mxu0 %v1708
    %2836 = vmatpush1.bf16.msra.mxu0 %v1707
    %2837 = vmatprep.subr.bf16.mxu0 %v1716
    %2838 = vmatpush1.bf16.msra.mxu0 %v1715
    %2839 = vmatprep.subr.bf16.mxu0 %v1724
    %2840 = vmatpush1.bf16.msra.mxu0 %v1723
    %2841 = vmatprep.subr.bf16.mxu0 %v1732
    %2842 = vmatpush1.bf16.msra.mxu0 %v1731
    %2843 = vmatprep.subr.bf16.mxu0 %v1740
    %2844 = vmatpush1.bf16.msra.mxu0 %v1739
    %2845 = vmatprep.subr.bf16.mxu0 %v1748
    %2846 = vmatpush1.bf16.msra.mxu0 %v1747
    %2847 = vmatprep.subr.bf16.mxu0 %v1756
    %2848 = vmatpush1.bf16.msra.mxu0 %v1755
    %2849 = vmatprep.subr.bf16.mxu0 %v1764
    %2850 = vmatpush1.bf16.msra.mxu0 %v1763
    %2851 = vmatprep.subr.bf16.mxu0 %v1772
    %2852 = vmatpush1.bf16.msra.mxu0 %v1771
    %2853 = vmatprep.subr.bf16.mxu0 %v1780
    %2854 = vmatpush1.bf16.msra.mxu0 %v1779
    %2855 = vmatprep.subr.bf16.mxu0 %v1788
    %2856 = vmatpush1.bf16.msra.mxu0 %v1787
    %2857 = vmatprep.subr.bf16.mxu0 %v1796
    %2858 = vmatpush1.bf16.msra.mxu0 %v1795
    %2859 = vmatprep.subr.bf16.mxu0 %v1804
    %2860 = vmatpush1.bf16.msra.mxu0 %v1803
    %2861 = vmatprep.subr.bf16.mxu0 %v1812
    %2862 = vmatpush1.bf16.msra.mxu0 %v1811
    %2863 = vmatprep.subr.bf16.mxu0 %v1820
    %2864 = vmatpush1.bf16.msra.mxu0 %v1819
    %2865 = vmatprep.subr.bf16.mxu0 %v1828
    %2866 = vmatpush1.bf16.msra.mxu0 %v1827
    %2867 = vmatprep.mubr.bf16.mxu0 %v87
    %2868 = vmatmul.mubr.bf16.gmra.mrb[0].mxu0 %v86
    %v2869 = vpop.f32.mrb[0].mxu0
    %v2870 = vadd.f32 %v506, %v2869
    %v2871 = vpop.f32.mrb[0].mxu0
    %v2872 = vadd.f32 %v510, %v2871
    %v2873 = vpop.f32.mrb[0].mxu0
    %v2874 = vadd.f32 %v506, %v2873
    %v2875 = vpop.f32.mrb[0].mxu0
    %v2876 = vadd.f32 %v510, %v2875
    %2877 = vdwg.mxu0
    %2878 = vmatprep.subr.bf16.mxu0 %v1836
    %2879 = vmatpush1.bf16.msra.mxu0 %v1835
    %2880 = vmatprep.subr.bf16.mxu0 %v1844
    %2881 = vmatpush1.bf16.msra.mxu0 %v1843
    %2882 = vmatprep.subr.bf16.mxu0 %v1852
    %2883 = vmatpush1.bf16.msra.mxu0 %v1851
    %2884 = vmatprep.subr.bf16.mxu0 %v1860
    %2885 = vmatpush1.bf16.msra.mxu0 %v1859
    %2886 = vmatprep.subr.bf16.mxu0 %v1868
    %2887 = vmatpush1.bf16.msra.mxu0 %v1867
    %2888 = vmatprep.subr.bf16.mxu0 %v1876
    %2889 = vmatpush1.bf16.msra.mxu0 %v1875
    %2890 = vmatprep.subr.bf16.mxu0 %v1884
    %2891 = vmatpush1.bf16.msra.mxu0 %v1883
    %2892 = vmatprep.subr.bf16.mxu0 %v1892
    %2893 = vmatpush1.bf16.msra.mxu0 %v1891
    %2894 = vmatprep.subr.bf16.mxu0 %v1900
    %2895 = vmatpush1.bf16.msra.mxu0 %v1899
    %2896 = vmatprep.subr.bf16.mxu0 %v1908
    %2897 = vmatpush1.bf16.msra.mxu0 %v1907
    %2898 = vmatprep.subr.bf16.mxu0 %v1916
    %2899 = vmatpush1.bf16.msra.mxu0 %v1915
    %2900 = vmatprep.subr.bf16.mxu0 %v1924
    %2901 = vmatpush1.bf16.msra.mxu0 %v1923
    %2902 = vmatprep.subr.bf16.mxu0 %v1932
    %2903 = vmatpush1.bf16.msra.mxu0 %v1931
    %2904 = vmatprep.subr.bf16.mxu0 %v1940
    %2905 = vmatpush1.bf16.msra.mxu0 %v1939
    %2906 = vmatprep.subr.bf16.mxu0 %v1948
    %2907 = vmatpush1.bf16.msra.mxu0 %v1947
    %2908 = vmatprep.subr.bf16.mxu0 %v1956
    %2909 = vmatpush1.bf16.msra.mxu0 %v1955
    %2910 = vmatprep.mubr.bf16.mxu0 %v89
    %2911 = vmatmul.mubr.bf16.gmra.mrb[0].mxu0 %v88
    %v2912 = vpop.f32.mrb[0].mxu0
    %v2913 = vadd.f32 %v2870, %v2912
    %v2914 = vpop.f32.mrb[0].mxu0
    %v2915 = vadd.f32 %v2872, %v2914
    %v2916 = vpop.f32.mrb[0].mxu0
    %v2917 = vadd.f32 %v2874, %v2916
    %v2918 = vpop.f32.mrb[0].mxu0
    %v2919 = vadd.f32 %v2876, %v2918
    %2920 = vdwg.mxu0
    %2921 = vmatprep.subr.bf16.mxu0 %v1964
    %2922 = vmatpush1.bf16.msra.mxu0 %v1963
    %2923 = vmatprep.subr.bf16.mxu0 %v1972
    %2924 = vmatpush1.bf16.msra.mxu0 %v1971
    %2925 = vmatprep.subr.bf16.mxu0 %v1980
    %2926 = vmatpush1.bf16.msra.mxu0 %v1979
    %2927 = vmatprep.subr.bf16.mxu0 %v1988
    %2928 = vmatpush1.bf16.msra.mxu0 %v1987
    %2929 = vmatprep.subr.bf16.mxu0 %v1996
    %2930 = vmatpush1.bf16.msra.mxu0 %v1995
    %2931 = vmatprep.subr.bf16.mxu0 %v2004
    %2932 = vmatpush1.bf16.msra.mxu0 %v2003
    %2933 = vmatprep.subr.bf16.mxu0 %v2012
    %2934 = vmatpush1.bf16.msra.mxu0 %v2011
    %2935 = vmatprep.subr.bf16.mxu0 %v2020
    %2936 = vmatpush1.bf16.msra.mxu0 %v2019
    %2937 = vmatprep.subr.bf16.mxu0 %v2028
    %2938 = vmatpush1.bf16.msra.mxu0 %v2027
    %2939 = vmatprep.subr.bf16.mxu0 %v2036
    %2940 = vmatpush1.bf16.msra.mxu0 %v2035
    %2941 = vmatprep.subr.bf16.mxu0 %v2044
    %2942 = vmatpush1.bf16.msra.mxu0 %v2043
    %2943 = vmatprep.subr.bf16.mxu0 %v2052
    %2944 = vmatpush1.bf16.msra.mxu0 %v2051
    %2945 = vmatprep.subr.bf16.mxu0 %v2060
    %2946 = vmatpush1.bf16.msra.mxu0 %v2059
    %2947 = vmatprep.subr.bf16.mxu0 %v2068
    %2948 = vmatpush1.bf16.msra.mxu0 %v2067
    %2949 = vmatprep.subr.bf16.mxu0 %v2076
    %2950 = vmatpush1.bf16.msra.mxu0 %v2075
    %2951 = vmatprep.subr.bf16.mxu0 %v2084
    %2952 = vmatpush1.bf16.msra.mxu0 %v2083
    %2953 = vmatprep.mubr.bf16.mxu0 %v91
    %2954 = vmatmul.mubr.bf16.gmra.mrb[0].mxu0 %v90
    %v2955 = vpop.f32.mrb[0].mxu0
    %v2956 = vadd.f32 %v2913, %v2955
    %v2957 = vpop.f32.mrb[0].mxu0
    %v2958 = vadd.f32 %v2915, %v2957
    %v2959 = vpop.f32.mrb[0].mxu0
    %v2960 = vadd.f32 %v2917, %v2959
    %v2961 = vpop.f32.mrb[0].mxu0
    %v2962 = vadd.f32 %v2919, %v2961
    %2963 = vdwg.mxu0
    %2964 = vmatprep.subr.bf16.mxu0 %v2092
    %2965 = vmatpush1.bf16.msra.mxu0 %v2091
    %2966 = vmatprep.subr.bf16.mxu0 0
    %2967 = vmatpush1.bf16.msra.mxu0 0
    %2968 = vmatprep.subr.bf16.mxu0 0
    %2969 = vmatpush1.bf16.msra.mxu0 0
    %2970 = vmatprep.subr.bf16.mxu0 0
    %2971 = vmatpush1.bf16.msra.mxu0 0
    %2972 = vmatprep.subr.bf16.mxu0 0
    %2973 = vmatpush1.bf16.msra.mxu0 0
    %2974 = vmatprep.subr.bf16.mxu0 0
    %2975 = vmatpush1.bf16.msra.mxu0 0
    %2976 = vmatprep.subr.bf16.mxu0 0
    %2977 = vmatpush1.bf16.msra.mxu0 0
    %2978 = vmatprep.subr.bf16.mxu0 0
    %2979 = vmatpush1.bf16.msra.mxu0 0
    %2980 = vmatprep.subr.bf16.mxu0 0
    %2981 = vmatpush1.bf16.msra.mxu0 0
    %2982 = vmatprep.subr.bf16.mxu0 0
    %2983 = vmatpush1.bf16.msra.mxu0 0
    %2984 = vmatprep.subr.bf16.mxu0 0
    %2985 = vmatpush1.bf16.msra.mxu0 0
    %2986 = vmatprep.subr.bf16.mxu0 0
    %2987 = vmatpush1.bf16.msra.mxu0 0
    %2988 = vmatprep.subr.bf16.mxu0 0
    %2989 = vmatpush1.bf16.msra.mxu0 0
    %2990 = vmatprep.subr.bf16.mxu0 0
    %2991 = vmatpush1.bf16.msra.mxu0 0
    %2992 = vmatprep.subr.bf16.mxu0 0
    %2993 = vmatpush1.bf16.msra.mxu0 0
    %2994 = vmatprep.subr.bf16.mxu0 0
    %2995 = vmatpush1.bf16.msra.mxu0 0
    %2996 = vmatprep.mubr.bf16.mxu0 0
    %2997 = vmatmul.mubr.bf16.gmra.mrb[0].mxu0 %v2489
    %v2998 = vpop.f32.mrb[0].mxu0
    %v2999 = vadd.f32 %v2956, %v2998
    %v3000 = vpop.f32.mrb[0].mxu0
    %v3001 = vadd.f32 %v2958, %v3000
    %v3002 = vpop.f32.mrb[0].mxu0
    %v3003 = vadd.f32 %v2960, %v3002
    %v3004 = vpop.f32.mrb[0].mxu0
    %v3005 = vadd.f32 %v2962, %v3004
    %3006 = vdwg.mxu0
    %3007 = vmatprep.subr.bf16.mxu0 %v1710
    %3008 = vmatpush1.bf16.msra.mxu0 %v1709
    %3009 = vmatprep.subr.bf16.mxu0 %v1718
    %3010 = vmatpush1.bf16.msra.mxu0 %v1717
    %3011 = vmatprep.subr.bf16.mxu0 %v1726
    %3012 = vmatpush1.bf16.msra.mxu0 %v1725
    %3013 = vmatprep.subr.bf16.mxu0 %v1734
    %3014 = vmatpush1.bf16.msra.mxu0 %v1733
    %3015 = vmatprep.subr.bf16.mxu0 %v1742
    %3016 = vmatpush1.bf16.msra.mxu0 %v1741
    %3017 = vmatprep.subr.bf16.mxu0 %v1750
    %3018 = vmatpush1.bf16.msra.mxu0 %v1749
    %3019 = vmatprep.subr.bf16.mxu0 %v1758
    %3020 = vmatpush1.bf16.msra.mxu0 %v1757
    %3021 = vmatprep.subr.bf16.mxu0 %v1766
    %3022 = vmatpush1.bf16.msra.mxu0 %v1765
    %3023 = vmatprep.subr.bf16.mxu0 %v1774
    %3024 = vmatpush1.bf16.msra.mxu0 %v1773
    %3025 = vmatprep.subr.bf16.mxu0 %v1782
    %3026 = vmatpush1.bf16.msra.mxu0 %v1781
    %3027 = vmatprep.subr.bf16.mxu0 %v1790
    %3028 = vmatpush1.bf16.msra.mxu0 %v1789
    %3029 = vmatprep.subr.bf16.mxu0 %v1798
    %3030 = vmatpush1.bf16.msra.mxu0 %v1797
    %3031 = vmatprep.subr.bf16.mxu0 %v1806
    %3032 = vmatpush1.bf16.msra.mxu0 %v1805
    %3033 = vmatprep.subr.bf16.mxu0 %v1814
    %3034 = vmatpush1.bf16.msra.mxu0 %v1813
    %3035 = vmatprep.subr.bf16.mxu0 %v1822
    %3036 = vmatpush1.bf16.msra.mxu0 %v1821
    %3037 = vmatprep.subr.bf16.mxu0 %v1830
    %3038 = vmatpush1.bf16.msra.mxu0 %v1829
    %3039 = vmatprep.mubr.bf16.mxu0 %v87
    %3040 = vmatmul.mubr.bf16.gmra.mrb[0].mxu0 %v86
    %v3041 = vpop.f32.mrb[0].mxu0
    %v3042 = vadd.f32 %v514, %v3041
    %v3043 = vpop.f32.mrb[0].mxu0
    %v3044 = vadd.f32 %v518, %v3043
    %v3045 = vpop.f32.mrb[0].mxu0
    %v3046 = vadd.f32 %v514, %v3045
    %v3047 = vpop.f32.mrb[0].mxu0
    %v3048 = vadd.f32 %v518, %v3047
    %3049 = vdwg.mxu0
    %3050 = vmatprep.subr.bf16.mxu0 %v1838
    %3051 = vmatpush1.bf16.msra.mxu0 %v1837
    %3052 = vmatprep.subr.bf16.mxu0 %v1846
    %3053 = vmatpush1.bf16.msra.mxu0 %v1845
    %3054 = vmatprep.subr.bf16.mxu0 %v1854
    %3055 = vmatpush1.bf16.msra.mxu0 %v1853
    %3056 = vmatprep.subr.bf16.mxu0 %v1862
    %3057 = vmatpush1.bf16.msra.mxu0 %v1861
    %3058 = vmatprep.subr.bf16.mxu0 %v1870
    %3059 = vmatpush1.bf16.msra.mxu0 %v1869
    %3060 = vmatprep.subr.bf16.mxu0 %v1878
    %3061 = vmatpush1.bf16.msra.mxu0 %v1877
    %3062 = vmatprep.subr.bf16.mxu0 %v1886
    %3063 = vmatpush1.bf16.msra.mxu0 %v1885
    %3064 = vmatprep.subr.bf16.mxu0 %v1894
    %3065 = vmatpush1.bf16.msra.mxu0 %v1893
    %3066 = vmatprep.subr.bf16.mxu0 %v1902
    %3067 = vmatpush1.bf16.msra.mxu0 %v1901
    %3068 = vmatprep.subr.bf16.mxu0 %v1910
    %3069 = vmatpush1.bf16.msra.mxu0 %v1909
    %3070 = vmatprep.subr.bf16.mxu0 %v1918
    %3071 = vmatpush1.bf16.msra.mxu0 %v1917
    %3072 = vmatprep.subr.bf16.mxu0 %v1926
    %3073 = vmatpush1.bf16.msra.mxu0 %v1925
    %3074 = vmatprep.subr.bf16.mxu0 %v1934
    %3075 = vmatpush1.bf16.msra.mxu0 %v1933
    %3076 = vmatprep.subr.bf16.mxu0 %v1942
    %3077 = vmatpush1.bf16.msra.mxu0 %v1941
    %3078 = vmatprep.subr.bf16.mxu0 %v1950
    %3079 = vmatpush1.bf16.msra.mxu0 %v1949
    %3080 = vmatprep.subr.bf16.mxu0 %v1958
    %3081 = vmatpush1.bf16.msra.mxu0 %v1957
    %3082 = vmatprep.mubr.bf16.mxu0 %v89
    %3083 = vmatmul.mubr.bf16.gmra.mrb[0].mxu0 %v88
    %v3084 = vpop.f32.mrb[0].mxu0
    %v3085 = vadd.f32 %v3042, %v3084
    %v3086 = vpop.f32.mrb[0].mxu0
    %v3087 = vadd.f32 %v3044, %v3086
    %v3088 = vpop.f32.mrb[0].mxu0
    %v3089 = vadd.f32 %v3046, %v3088
    %v3090 = vpop.f32.mrb[0].mxu0
    %v3091 = vadd.f32 %v3048, %v3090
    %3092 = vdwg.mxu0
    %3093 = vmatprep.subr.bf16.mxu0 %v1966
    %3094 = vmatpush1.bf16.msra.mxu0 %v1965
    %3095 = vmatprep.subr.bf16.mxu0 %v1974
    %3096 = vmatpush1.bf16.msra.mxu0 %v1973
    %3097 = vmatprep.subr.bf16.mxu0 %v1982
    %3098 = vmatpush1.bf16.msra.mxu0 %v1981
    %3099 = vmatprep.subr.bf16.mxu0 %v1990
    %3100 = vmatpush1.bf16.msra.mxu0 %v1989
    %3101 = vmatprep.subr.bf16.mxu0 %v1998
    %3102 = vmatpush1.bf16.msra.mxu0 %v1997
    %3103 = vmatprep.subr.bf16.mxu0 %v2006
    %3104 = vmatpush1.bf16.msra.mxu0 %v2005
    %3105 = vmatprep.subr.bf16.mxu0 %v2014
    %3106 = vmatpush1.bf16.msra.mxu0 %v2013
    %3107 = vmatprep.subr.bf16.mxu0 %v2022
    %3108 = vmatpush1.bf16.msra.mxu0 %v2021
    %3109 = vmatprep.subr.bf16.mxu0 %v2030
    %3110 = vmatpush1.bf16.msra.mxu0 %v2029
    %3111 = vmatprep.subr.bf16.mxu0 %v2038
    %3112 = vmatpush1.bf16.msra.mxu0 %v2037
    %3113 = vmatprep.subr.bf16.mxu0 %v2046
    %3114 = vmatpush1.bf16.msra.mxu0 %v2045
    %3115 = vmatprep.subr.bf16.mxu0 %v2054
    %3116 = vmatpush1.bf16.msra.mxu0 %v2053
    %3117 = vmatprep.subr.bf16.mxu0 %v2062
    %3118 = vmatpush1.bf16.msra.mxu0 %v2061
    %3119 = vmatprep.subr.bf16.mxu0 %v2070
    %3120 = vmatpush1.bf16.msra.mxu0 %v2069
    %3121 = vmatprep.subr.bf16.mxu0 %v2078
    %3122 = vmatpush1.bf16.msra.mxu0 %v2077
    %3123 = vmatprep.subr.bf16.mxu0 %v2086
    %3124 = vmatpush1.bf16.msra.mxu0 %v2085
    %3125 = vmatprep.mubr.bf16.mxu0 %v91
    %3126 = vmatmul.mubr.bf16.gmra.mrb[0].mxu0 %v90
    %v3127 = vpop.f32.mrb[0].mxu0
    %v3128 = vadd.f32 %v3085, %v3127
    %v3129 = vpop.f32.mrb[0].mxu0
    %v3130 = vadd.f32 %v3087, %v3129
    %v3131 = vpop.f32.mrb[0].mxu0
    %v3132 = vadd.f32 %v3089, %v3131
    %v3133 = vpop.f32.mrb[0].mxu0
    %v3134 = vadd.f32 %v3091, %v3133
    %3135 = vdwg.mxu0
    %3136 = vmatprep.subr.bf16.mxu0 %v2094
    %3137 = vmatpush1.bf16.msra.mxu0 %v2093
    %3138 = vmatprep.subr.bf16.mxu0 0
    %3139 = vmatpush1.bf16.msra.mxu0 0
    %3140 = vmatprep.subr.bf16.mxu0 0
    %3141 = vmatpush1.bf16.msra.mxu0 0
    %3142 = vmatprep.subr.bf16.mxu0 0
    %3143 = vmatpush1.bf16.msra.mxu0 0
    %3144 = vmatprep.subr.bf16.mxu0 0
    %3145 = vmatpush1.bf16.msra.mxu0 0
    %3146 = vmatprep.subr.bf16.mxu0 0
    %3147 = vmatpush1.bf16.msra.mxu0 0
    %3148 = vmatprep.subr.bf16.mxu0 0
    %3149 = vmatpush1.bf16.msra.mxu0 0
    %3150 = vmatprep.subr.bf16.mxu0 0
    %3151 = vmatpush1.bf16.msra.mxu0 0
    %3152 = vmatprep.subr.bf16.mxu0 0
    %3153 = vmatpush1.bf16.msra.mxu0 0
    %3154 = vmatprep.subr.bf16.mxu0 0
    %3155 = vmatpush1.bf16.msra.mxu0 0
    %3156 = vmatprep.subr.bf16.mxu0 0
    %3157 = vmatpush1.bf16.msra.mxu0 0
    %3158 = vmatprep.subr.bf16.mxu0 0
    %3159 = vmatpush1.bf16.msra.mxu0 0
    %3160 = vmatprep.subr.bf16.mxu0 0
    %3161 = vmatpush1.bf16.msra.mxu0 0
    %3162 = vmatprep.subr.bf16.mxu0 0
    %3163 = vmatpush1.bf16.msra.mxu0 0
    %3164 = vmatprep.subr.bf16.mxu0 0
    %3165 = vmatpush1.bf16.msra.mxu0 0
    %3166 = vmatprep.subr.bf16.mxu0 0
    %3167 = vmatpush1.bf16.msra.mxu0 0
    %3168 = vmatprep.mubr.bf16.mxu0 0
    %3169 = vmatmul.mubr.bf16.gmra.mrb[0].mxu0 %v2489
    %v3170 = vpop.f32.mrb[0].mxu0
    %v3171 = vadd.f32 %v3128, %v3170
    %v3172 = vpop.f32.mrb[0].mxu0
    %v3173 = vadd.f32 %v3130, %v3172
    %v3174 = vpop.f32.mrb[0].mxu0
    %v3175 = vadd.f32 %v3132, %v3174
    %v3176 = vpop.f32.mrb[0].mxu0
    %v3177 = vadd.f32 %v3134, %v3176
    %3178 = vdwg.mxu0
    %v3179 = vxor.u32 %v2655, 2147483648
    %v3180 = vxor.u32 %v2657, 2147483648
    %v3181 = vxor.u32 %v2827, 2147483648
    %v3182 = vxor.u32 %v2829, 2147483648
    %v3183 = vxor.u32 %v2999, 2147483648
    %v3184 = vxor.u32 %v3001, 2147483648
    %v3185 = vxor.u32 %v3171, 2147483648
    %v3186 = vxor.u32 %v3173, 2147483648
    %v3187 = vxor.u32 %v2659, 2147483648
    %v3188 = vxor.u32 %v2661, 2147483648
    %v3189 = vxor.u32 %v2831, 2147483648
    %v3190 = vxor.u32 %v2833, 2147483648
    %v3191 = vxor.u32 %v3003, 2147483648
    %v3192 = vxor.u32 %v3005, 2147483648
    %v3193 = vxor.u32 %v3175, 2147483648
    %v3194 = vxor.u32 %v3177, 2147483648
    %v3195 = vmul.f32 %v3179, 1.442695
    %v3196 = vpow.pop %v3195
    %v3197 = vmul.f32 %v3180, 1.442695
    %v3198 = vpow.pop %v3197
    %v3199 = vmul.f32 %v3181, 1.442695
    %v3200 = vpow.pop %v3199
    %v3201 = vmul.f32 %v3182, 1.442695
    %v3202 = vpow.pop %v3201
    %v3203 = vmul.f32 %v3183, 1.442695
    %v3204 = vpow.pop %v3203
    %v3205 = vmul.f32 %v3184, 1.442695
    %v3206 = vpow.pop %v3205
    %v3207 = vmul.f32 %v3185, 1.442695
    %v3208 = vpow.pop %v3207
    %v3209 = vmul.f32 %v3186, 1.442695
    %v3210 = vpow.pop %v3209
    %v3211 = vmul.f32 %v3187, 1.442695
    %v3212 = vpow.pop %v3211
    %v3213 = vmul.f32 %v3188, 1.442695
    %v3214 = vpow.pop %v3213
    %v3215 = vmul.f32 %v3189, 1.442695
    %v3216 = vpow.pop %v3215
    %v3217 = vmul.f32 %v3190, 1.442695
    %v3218 = vpow.pop %v3217
    %v3219 = vmul.f32 %v3191, 1.442695
    %v3220 = vpow.pop %v3219
    %v3221 = vmul.f32 %v3192, 1.442695
    %v3222 = vpow.pop %v3221
    %v3223 = vmul.f32 %v3193, 1.442695
    %v3224 = vpow.pop %v3223
    %v3225 = vmul.f32 %v3194, 1.442695
    %v3226 = vpow.pop %v3225
    %v3227 = vadd.f32 %v3196, 1.0
    %v3228 = vadd.f32 %v3198, 1.0
    %v3229 = vadd.f32 %v3200, 1.0
    %v3230 = vadd.f32 %v3202, 1.0
    %v3231 = vadd.f32 %v3204, 1.0
    %v3232 = vadd.f32 %v3206, 1.0
    %v3233 = vadd.f32 %v3208, 1.0
    %v3234 = vadd.f32 %v3210, 1.0
    %v3235 = vadd.f32 %v3212, 1.0
    %v3236 = vadd.f32 %v3214, 1.0
    %v3237 = vadd.f32 %v3216, 1.0
    %v3238 = vadd.f32 %v3218, 1.0
    %v3239 = vadd.f32 %v3220, 1.0
    %v3240 = vadd.f32 %v3222, 1.0
    %v3241 = vadd.f32 %v3224, 1.0
    %v3242 = vadd.f32 %v3226, 1.0
    %v3243 = vrcp.pop %v3227
    %v3244 = vmul.f32 1.0, %v3243
    %v3245 = vrcp.pop %v3228
    %v3246 = vmul.f32 1.0, %v3245
    %v3247 = vrcp.pop %v3229
    %v3248 = vmul.f32 1.0, %v3247
    %v3249 = vrcp.pop %v3230
    %v3250 = vmul.f32 1.0, %v3249
    %v3251 = vrcp.pop %v3231
    %v3252 = vmul.f32 1.0, %v3251
    %v3253 = vrcp.pop %v3232
    %v3254 = vmul.f32 1.0, %v3253
    %v3255 = vrcp.pop %v3233
    %v3256 = vmul.f32 1.0, %v3255
    %v3257 = vrcp.pop %v3234
    %v3258 = vmul.f32 1.0, %v3257
    %v3259 = vrcp.pop %v3235
    %v3260 = vmul.f32 1.0, %v3259
    %v3261 = vrcp.pop %v3236
    %v3262 = vmul.f32 1.0, %v3261
    %v3263 = vrcp.pop %v3237
    %v3264 = vmul.f32 1.0, %v3263
    %v3265 = vrcp.pop %v3238
    %v3266 = vmul.f32 1.0, %v3265
    %v3267 = vrcp.pop %v3239
    %v3268 = vmul.f32 1.0, %v3267
    %v3269 = vrcp.pop %v3240
    %v3270 = vmul.f32 1.0, %v3269
    %v3271 = vrcp.pop %v3241
    %v3272 = vmul.f32 1.0, %v3271
    %v3273 = vrcp.pop %v3242
    %v3274 = vmul.f32 1.0, %v3273
    %v3275 = vpack.c.bf16 %v3260, %v3244
    %v3276 = vpack.c.bf16 %v3262, %v3246
    %v3277 = vpack.c.bf16 %v3264, %v3248
    %v3278 = vpack.c.bf16 %v3266, %v3250
    %v3279 = vpack.c.bf16 %v3268, %v3252
    %v3280 = vpack.c.bf16 %v3270, %v3254
    %v3281 = vpack.c.bf16 %v3272, %v3256
    %v3282 = vpack.c.bf16 %v3274, %v3258
    %v3283 = vld [vmem:[#allocation6] sm:$0xf]
    %v3284 = vld [vmem:[#allocation6 + $0x4] sm:$0xf]
    %v3285 = vld [vmem:[#allocation6 + $0x8] sm:$0xf]
    %v3286 = vld [vmem:[#allocation6 + $0xc] sm:$0xf]
    %v3287 = vld [vmem:[#allocation6 + $0x10] sm:$0xf]
    %v3288 = vld [vmem:[#allocation6 + $0x14] sm:$0xf]
    %v3289 = vld [vmem:[#allocation6 + $0x18] sm:$0xf]
    %v3290 = vld [vmem:[#allocation6 + $0x1c] sm:$0xf]
    %v3291 = vld [vmem:[#allocation6 + $0x20] sm:$0xf]
    %v3292 = vld [vmem:[#allocation6 + $0x24] sm:$0xf]
    %v3293 = vld [vmem:[#allocation6 + $0x28] sm:$0xf]
    %v3294 = vld [vmem:[#allocation6 + $0x2c] sm:$0xf]
    %v3295 = vld [vmem:[#allocation6 + $0x30] sm:$0xf]
    %v3296 = vld [vmem:[#allocation6 + $0x34] sm:$0xf]
    %v3297 = vld [vmem:[#allocation6 + $0x38] sm:$0xf]
    %v3298 = vld [vmem:[#allocation6 + $0x3c] sm:$0xf]
    %v3299 = vld [vmem:[#allocation6 + $0x40] sm:$0xf]
    %v3300 = vld [vmem:[#allocation6 + $0x44] sm:$0xf]
    %v3301 = vld [vmem:[#allocation6 + $0x48] sm:$0xf]
    %v3302 = vld [vmem:[#allocation6 + $0x4c] sm:$0xf]
    %v3303 = vld [vmem:[#allocation6 + $0x50] sm:$0xf]
    %v3304 = vld [vmem:[#allocation6 + $0x54] sm:$0xf]
    %v3305 = vld [vmem:[#allocation6 + $0x58] sm:$0xf]
    %v3306 = vld [vmem:[#allocation6 + $0x5c] sm:$0xf]
    %v3307 = vld [vmem:[#allocation6 + $0x60] sm:$0xf]
    %v3308 = vld [vmem:[#allocation6 + $0x64] sm:$0xf]
    %v3309 = vld [vmem:[#allocation6 + $0x68] sm:$0xf]
    %v3310 = vld [vmem:[#allocation6 + $0x6c] sm:$0xf]
    %v3311 = vld [vmem:[#allocation6 + $0x70] sm:$0xf]
    %v3312 = vld [vmem:[#allocation6 + $0x74] sm:$0xf]
    %v3313 = vld [vmem:[#allocation6 + $0x78] sm:$0xf]
    %v3314 = vld [vmem:[#allocation6 + $0x7c] sm:$0xf]
    %v3315 = vld [vmem:[#allocation6 + $0x80] sm:$0xf]
    %v3316 = vld [vmem:[#allocation6 + $0x84] sm:$0xf]
    %v3317 = vld [vmem:[#allocation6 + $0x88] sm:$0xf]
    %v3318 = vld [vmem:[#allocation6 + $0x8c] sm:$0xf]
    %v3319 = vld [vmem:[#allocation6 + $0x90] sm:$0xf]
    %v3320 = vld [vmem:[#allocation6 + $0x94] sm:$0xf]
    %v3321 = vld [vmem:[#allocation6 + $0x98] sm:$0xf]
    %v3322 = vld [vmem:[#allocation6 + $0x9c] sm:$0xf]
    %v3323 = vld [vmem:[#allocation6 + $0xa0] sm:$0xf]
    %v3324 = vld [vmem:[#allocation6 + $0xa4] sm:$0xf]
    %v3325 = vld [vmem:[#allocation6 + $0xa8] sm:$0xf]
    %v3326 = vld [vmem:[#allocation6 + $0xac] sm:$0xf]
    %v3327 = vld [vmem:[#allocation6 + $0xb0] sm:$0xf]
    %v3328 = vld [vmem:[#allocation6 + $0xb4] sm:$0xf]
    %v3329 = vld [vmem:[#allocation6 + $0xb8] sm:$0xf]
    %v3330 = vld [vmem:[#allocation6 + $0xbc] sm:$0xf]
    %v3331 = vld [vmem:[#allocation6 + $0xc0] sm:$0xf]
    %v3332 = vld [vmem:[#allocation6 + $0xc4] sm:$0xf]
    %v3333 = vld [vmem:[#allocation6 + $0xc8] sm:$0xf]
    %v3334 = vld [vmem:[#allocation6 + $0xcc] sm:$0xf]
    %v3335 = vld [vmem:[#allocation6 + $0xd0] sm:$0xf]
    %v3336 = vld [vmem:[#allocation6 + $0xd4] sm:$0xf]
    %v3337 = vld [vmem:[#allocation6 + $0xd8] sm:$0xf]
    %v3338 = vld [vmem:[#allocation6 + $0xdc] sm:$0xf]
    %v3339 = vld [vmem:[#allocation6 + $0xe0] sm:$0xf]
    %v3340 = vld [vmem:[#allocation6 + $0xe4] sm:$0xf]
    %v3341 = vld [vmem:[#allocation6 + $0xe8] sm:$0xf]
    %v3342 = vld [vmem:[#allocation6 + $0xec] sm:$0xf]
    %v3343 = vld [vmem:[#allocation6 + $0xf0] sm:$0xf]
    %v3344 = vld [vmem:[#allocation6 + $0xf4] sm:$0xf]
    %v3345 = vld [vmem:[#allocation6 + $0xf8] sm:$0xf]
    %v3346 = vld [vmem:[#allocation6 + $0xfc] sm:$0xf]
    %v3347 = vld [vmem:[#allocation6 + $0x100] sm:$0xf]
    %v3348 = vld [vmem:[#allocation6 + $0x104] sm:$0xf]
    %v3349 = vld [vmem:[#allocation6 + $0x108] sm:$0xf]
    %v3350 = vld [vmem:[#allocation6 + $0x10c] sm:$0xf]
    %v3351 = vld [vmem:[#allocation6 + $0x110] sm:$0xf]
    %v3352 = vld [vmem:[#allocation6 + $0x114] sm:$0xf]
    %v3353 = vld [vmem:[#allocation6 + $0x118] sm:$0xf]
    %v3354 = vld [vmem:[#allocation6 + $0x11c] sm:$0xf]
    %v3355 = vld [vmem:[#allocation6 + $0x120] sm:$0xf]
    %v3356 = vld [vmem:[#allocation6 + $0x124] sm:$0xf]
    %v3357 = vld [vmem:[#allocation6 + $0x128] sm:$0xf]
    %v3358 = vld [vmem:[#allocation6 + $0x12c] sm:$0xf]
    %v3359 = vld [vmem:[#allocation6 + $0x130] sm:$0xf]
    %v3360 = vld [vmem:[#allocation6 + $0x134] sm:$0xf]
    %v3361 = vld [vmem:[#allocation6 + $0x138] sm:$0xf]
    %v3362 = vld [vmem:[#allocation6 + $0x13c] sm:$0xf]
    %v3363 = vld [vmem:[#allocation6 + $0x140] sm:$0xf]
    %v3364 = vld [vmem:[#allocation6 + $0x144] sm:$0xf]
    %v3365 = vld [vmem:[#allocation6 + $0x148] sm:$0xf]
    %v3366 = vld [vmem:[#allocation6 + $0x14c] sm:$0xf]
    %v3367 = vld [vmem:[#allocation6 + $0x150] sm:$0xf]
    %v3368 = vld [vmem:[#allocation6 + $0x154] sm:$0xf]
    %v3369 = vld [vmem:[#allocation6 + $0x158] sm:$0xf]
    %v3370 = vld [vmem:[#allocation6 + $0x15c] sm:$0xf]
    %v3371 = vld [vmem:[#allocation6 + $0x160] sm:$0xf]
    %v3372 = vld [vmem:[#allocation6 + $0x164] sm:$0xf]
    %v3373 = vld [vmem:[#allocation6 + $0x168] sm:$0xf]
    %v3374 = vld [vmem:[#allocation6 + $0x16c] sm:$0xf]
    %v3375 = vld [vmem:[#allocation6 + $0x170] sm:$0xf]
    %v3376 = vld [vmem:[#allocation6 + $0x174] sm:$0xf]
    %v3377 = vld [vmem:[#allocation6 + $0x178] sm:$0xf]
    %v3378 = vld [vmem:[#allocation6 + $0x17c] sm:$0xf]
    %v3379 = vld [vmem:[#allocation6 + $0x180] sm:$0xf]
    %v3380 = vld [vmem:[#allocation6 + $0x184] sm:$0xf]
    %v3381 = vld [vmem:[#allocation6 + $0x188] sm:$0xf]
    %v3382 = vld [vmem:[#allocation6 + $0x18c] sm:$0xf]
    %v3383 = vld [vmem:[#allocation6 + $0x190] sm:$0xf]
    %v3384 = vld [vmem:[#allocation6 + $0x194] sm:$0xf]
    %v3385 = vld [vmem:[#allocation6 + $0x198] sm:$0xf]
    %v3386 = vld [vmem:[#allocation6 + $0x19c] sm:$0xf]
    %v3387 = vld [vmem:[#allocation6 + $0x1a0] sm:$0xf]
    %v3388 = vld [vmem:[#allocation6 + $0x1a4] sm:$0xf]
    %v3389 = vld [vmem:[#allocation6 + $0x1a8] sm:$0xf]
    %v3390 = vld [vmem:[#allocation6 + $0x1ac] sm:$0xf]
    %v3391 = vld [vmem:[#allocation6 + $0x1b0] sm:$0xf]
    %v3392 = vld [vmem:[#allocation6 + $0x1b4] sm:$0xf]
    %v3393 = vld [vmem:[#allocation6 + $0x1b8] sm:$0xf]
    %v3394 = vld [vmem:[#allocation6 + $0x1bc] sm:$0xf]
    %v3395 = vld [vmem:[#allocation6 + $0x1c0] sm:$0xf]
    %v3396 = vld [vmem:[#allocation6 + $0x1c4] sm:$0xf]
    %v3397 = vld [vmem:[#allocation6 + $0x1c8] sm:$0xf]
    %v3398 = vld [vmem:[#allocation6 + $0x1cc] sm:$0xf]
    %v3399 = vld [vmem:[#allocation6 + $0x1d0] sm:$0xf]
    %v3400 = vld [vmem:[#allocation6 + $0x1d4] sm:$0xf]
    %v3401 = vld [vmem:[#allocation6 + $0x1d8] sm:$0xf]
    %v3402 = vld [vmem:[#allocation6 + $0x1dc] sm:$0xf]
    %v3403 = vld [vmem:[#allocation6 + $0x1e0] sm:$0xf]
    %v3404 = vld [vmem:[#allocation6 + $0x1e4] sm:$0xf]
    %v3405 = vld [vmem:[#allocation6 + $0x1e8] sm:$0xf]
    %v3406 = vld [vmem:[#allocation6 + $0x1ec] sm:$0xf]
    %v3407 = vld [vmem:[#allocation6 + $0x1f0] sm:$0xf]
    %v3408 = vld [vmem:[#allocation6 + $0x1f4] sm:$0xf]
    %v3409 = vld [vmem:[#allocation6 + $0x1f8] sm:$0xf]
    %v3410 = vld [vmem:[#allocation6 + $0x1fc] sm:$0xf]
    %v3411 = vld [vmem:[#allocation7] sm:$0x1]
    %v3413 = vlaneseq
    %v3414 = vshrl.u32 %v3413, 7
    %v3415 = vsub.s32 0, %v3414
    %v3416 = vrot.slane %v3411, %v3415
    %v3546 = vunpack.c.l.b16 %v3283
    %v3547 = vunpack.c.l.b16 %v3284
    %v3548 = vunpack.c.l.b16 %v3285
    %v3549 = vunpack.c.l.b16 %v3286
    %v3550 = vunpack.c.l.b16 %v3287
    %v3551 = vunpack.c.l.b16 %v3288
    %v3552 = vunpack.c.l.b16 %v3289
    %v3553 = vunpack.c.l.b16 %v3290
    %v3554 = vunpack.c.l.b16 %v3291
    %v3555 = vunpack.c.l.b16 %v3292
    %v3556 = vunpack.c.l.b16 %v3293
    %v3557 = vunpack.c.l.b16 %v3294
    %v3558 = vunpack.c.l.b16 %v3295
    %v3559 = vunpack.c.l.b16 %v3296
    %v3560 = vunpack.c.l.b16 %v3297
    %v3561 = vunpack.c.l.b16 %v3298
    %v3562 = vunpack.c.l.b16 %v3299
    %v3563 = vunpack.c.l.b16 %v3300
    %v3564 = vunpack.c.l.b16 %v3301
    %v3565 = vunpack.c.l.b16 %v3302
    %v3566 = vunpack.c.l.b16 %v3303
    %v3567 = vunpack.c.l.b16 %v3304
    %v3568 = vunpack.c.l.b16 %v3305
    %v3569 = vunpack.c.l.b16 %v3306
    %v3570 = vunpack.c.l.b16 %v3307
    %v3571 = vunpack.c.l.b16 %v3308
    %v3572 = vunpack.c.l.b16 %v3309
    %v3573 = vunpack.c.l.b16 %v3310
    %v3574 = vunpack.c.l.b16 %v3311
    %v3575 = vunpack.c.l.b16 %v3312
    %v3576 = vunpack.c.l.b16 %v3313
    %v3577 = vunpack.c.l.b16 %v3314
    %v3578 = vunpack.c.l.b16 %v3315
    %v3579 = vunpack.c.l.b16 %v3316
    %v3580 = vunpack.c.l.b16 %v3317
    %v3581 = vunpack.c.l.b16 %v3318
    %v3582 = vunpack.c.l.b16 %v3319
    %v3583 = vunpack.c.l.b16 %v3320
    %v3584 = vunpack.c.l.b16 %v3321
    %v3585 = vunpack.c.l.b16 %v3322
    %v3586 = vunpack.c.l.b16 %v3323
    %v3587 = vunpack.c.l.b16 %v3324
    %v3588 = vunpack.c.l.b16 %v3325
    %v3589 = vunpack.c.l.b16 %v3326
    %v3590 = vunpack.c.l.b16 %v3327
    %v3591 = vunpack.c.l.b16 %v3328
    %v3592 = vunpack.c.l.b16 %v3329
    %v3593 = vunpack.c.l.b16 %v3330
    %v3594 = vunpack.c.l.b16 %v3331
    %v3595 = vunpack.c.l.b16 %v3332
    %v3596 = vunpack.c.l.b16 %v3333
    %v3597 = vunpack.c.l.b16 %v3334
    %v3598 = vunpack.c.l.b16 %v3335
    %v3599 = vunpack.c.l.b16 %v3336
    %v3600 = vunpack.c.l.b16 %v3337
    %v3601 = vunpack.c.l.b16 %v3338
    %v3602 = vunpack.c.l.b16 %v3339
    %v3603 = vunpack.c.l.b16 %v3340
    %v3604 = vunpack.c.l.b16 %v3341
    %v3605 = vunpack.c.l.b16 %v3342
    %v3606 = vunpack.c.l.b16 %v3343
    %v3607 = vunpack.c.l.b16 %v3344
    %v3608 = vunpack.c.l.b16 %v3345
    %v3609 = vunpack.c.l.b16 %v3346
    %v3610 = vunpack.c.l.b16 %v3347
    %v3611 = vunpack.c.l.b16 %v3348
    %v3612 = vunpack.c.l.b16 %v3349
    %v3613 = vunpack.c.l.b16 %v3350
    %v3614 = vunpack.c.l.b16 %v3351
    %v3615 = vunpack.c.l.b16 %v3352
    %v3616 = vunpack.c.l.b16 %v3353
    %v3617 = vunpack.c.l.b16 %v3354
    %v3618 = vunpack.c.l.b16 %v3355
    %v3619 = vunpack.c.l.b16 %v3356
    %v3620 = vunpack.c.l.b16 %v3357
    %v3621 = vunpack.c.l.b16 %v3358
    %v3622 = vunpack.c.l.b16 %v3359
    %v3623 = vunpack.c.l.b16 %v3360
    %v3624 = vunpack.c.l.b16 %v3361
    %v3625 = vunpack.c.l.b16 %v3362
    %v3626 = vunpack.c.l.b16 %v3363
    %v3627 = vunpack.c.l.b16 %v3364
    %v3628 = vunpack.c.l.b16 %v3365
    %v3629 = vunpack.c.l.b16 %v3366
    %v3630 = vunpack.c.l.b16 %v3367
    %v3631 = vunpack.c.l.b16 %v3368
    %v3632 = vunpack.c.l.b16 %v3369
    %v3633 = vunpack.c.l.b16 %v3370
    %v3634 = vunpack.c.l.b16 %v3371
    %v3635 = vunpack.c.l.b16 %v3372
    %v3636 = vunpack.c.l.b16 %v3373
    %v3637 = vunpack.c.l.b16 %v3374
    %v3638 = vunpack.c.l.b16 %v3375
    %v3639 = vunpack.c.l.b16 %v3376
    %v3640 = vunpack.c.l.b16 %v3377
    %v3641 = vunpack.c.l.b16 %v3378
    %v3642 = vunpack.c.l.b16 %v3379
    %v3643 = vunpack.c.l.b16 %v3380
    %v3644 = vunpack.c.l.b16 %v3381
    %v3645 = vunpack.c.l.b16 %v3382
    %v3646 = vunpack.c.l.b16 %v3383
    %v3647 = vunpack.c.l.b16 %v3384
    %v3648 = vunpack.c.l.b16 %v3385
    %v3649 = vunpack.c.l.b16 %v3386
    %v3650 = vunpack.c.l.b16 %v3387
    %v3651 = vunpack.c.l.b16 %v3388
    %v3652 = vunpack.c.l.b16 %v3389
    %v3653 = vunpack.c.l.b16 %v3390
    %v3654 = vunpack.c.l.b16 %v3391
    %v3655 = vunpack.c.l.b16 %v3392
    %v3656 = vunpack.c.l.b16 %v3393
    %v3657 = vunpack.c.l.b16 %v3394
    %v3658 = vunpack.c.l.b16 %v3395
    %v3659 = vunpack.c.l.b16 %v3396
    %v3660 = vunpack.c.l.b16 %v3397
    %v3661 = vunpack.c.l.b16 %v3398
    %v3662 = vunpack.c.l.b16 %v3399
    %v3663 = vunpack.c.l.b16 %v3400
    %v3664 = vunpack.c.l.b16 %v3401
    %v3665 = vunpack.c.l.b16 %v3402
    %v3666 = vunpack.c.l.b16 %v3403
    %v3667 = vunpack.c.l.b16 %v3404
    %v3668 = vunpack.c.l.b16 %v3405
    %v3669 = vunpack.c.l.b16 %v3406
    %v3670 = vunpack.c.l.b16 %v3407
    %v3671 = vunpack.c.l.b16 %v3408
    %v3672 = vunpack.c.l.b16 %v3409
    %v3673 = vunpack.c.l.b16 %v3410
    %v3674 = vpack.c.b16 %v3547, %v3546
    %v3675 = vpack.c.b16 %v3549, %v3548
    %v3676 = vpack.c.b16 %v3551, %v3550
    %v3677 = vpack.c.b16 %v3553, %v3552
    %v3678 = vpack.c.b16 %v3555, %v3554
    %v3679 = vpack.c.b16 %v3557, %v3556
    %v3680 = vpack.c.b16 %v3559, %v3558
    %v3681 = vpack.c.b16 %v3561, %v3560
    %v3682 = vpack.c.b16 %v3563, %v3562
    %v3683 = vpack.c.b16 %v3565, %v3564
    %v3684 = vpack.c.b16 %v3567, %v3566
    %v3685 = vpack.c.b16 %v3569, %v3568
    %v3686 = vpack.c.b16 %v3571, %v3570
    %v3687 = vpack.c.b16 %v3573, %v3572
    %v3688 = vpack.c.b16 %v3575, %v3574
    %v3689 = vpack.c.b16 %v3577, %v3576
    %v3690 = vpack.c.b16 %v3579, %v3578
    %v3691 = vpack.c.b16 %v3581, %v3580
    %v3692 = vpack.c.b16 %v3583, %v3582
    %v3693 = vpack.c.b16 %v3585, %v3584
    %v3694 = vpack.c.b16 %v3587, %v3586
    %v3695 = vpack.c.b16 %v3589, %v3588
    %v3696 = vpack.c.b16 %v3591, %v3590
    %v3697 = vpack.c.b16 %v3593, %v3592
    %v3698 = vpack.c.b16 %v3595, %v3594
    %v3699 = vpack.c.b16 %v3597, %v3596
    %v3700 = vpack.c.b16 %v3599, %v3598
    %v3701 = vpack.c.b16 %v3601, %v3600
    %v3702 = vpack.c.b16 %v3603, %v3602
    %v3703 = vpack.c.b16 %v3605, %v3604
    %v3704 = vpack.c.b16 %v3607, %v3606
    %v3705 = vpack.c.b16 %v3609, %v3608
    %v3706 = vpack.c.b16 %v3611, %v3610
    %v3707 = vpack.c.b16 %v3613, %v3612
    %v3708 = vpack.c.b16 %v3615, %v3614
    %v3709 = vpack.c.b16 %v3617, %v3616
    %v3710 = vpack.c.b16 %v3619, %v3618
    %v3711 = vpack.c.b16 %v3621, %v3620
    %v3712 = vpack.c.b16 %v3623, %v3622
    %v3713 = vpack.c.b16 %v3625, %v3624
    %v3714 = vpack.c.b16 %v3627, %v3626
    %v3715 = vpack.c.b16 %v3629, %v3628
    %v3716 = vpack.c.b16 %v3631, %v3630
    %v3717 = vpack.c.b16 %v3633, %v3632
    %v3718 = vpack.c.b16 %v3635, %v3634
    %v3719 = vpack.c.b16 %v3637, %v3636
    %v3720 = vpack.c.b16 %v3639, %v3638
    %v3721 = vpack.c.b16 %v3641, %v3640
    %v3722 = vpack.c.b16 %v3643, %v3642
    %v3723 = vpack.c.b16 %v3645, %v3644
    %v3724 = vpack.c.b16 %v3647, %v3646
    %v3725 = vpack.c.b16 %v3649, %v3648
    %v3726 = vpack.c.b16 %v3651, %v3650
    %v3727 = vpack.c.b16 %v3653, %v3652
    %v3728 = vpack.c.b16 %v3655, %v3654
    %v3729 = vpack.c.b16 %v3657, %v3656
    %v3730 = vpack.c.b16 %v3659, %v3658
    %v3731 = vpack.c.b16 %v3661, %v3660
    %v3732 = vpack.c.b16 %v3663, %v3662
    %v3733 = vpack.c.b16 %v3665, %v3664
    %v3734 = vpack.c.b16 %v3667, %v3666
    %v3735 = vpack.c.b16 %v3669, %v3668
    %v3736 = vpack.c.b16 %v3671, %v3670
    %v3737 = vpack.c.b16 %v3673, %v3672
    %3802 = vmatprep.subr.bf16.mxu0 0
    %3803 = vmatpush1.bf16.msra.mxu0 %v3674
    %3804 = vmatprep.subr.bf16.mxu0 0
    %3805 = vmatpush1.bf16.msra.mxu0 %v3675
    %3806 = vmatprep.subr.bf16.mxu0 0
    %3807 = vmatpush1.bf16.msra.mxu0 %v3676
    %3808 = vmatprep.subr.bf16.mxu0 0
    %3809 = vmatpush1.bf16.msra.mxu0 %v3677
    %3810 = vmatprep.subr.bf16.mxu0 0
    %3811 = vmatpush1.bf16.msra.mxu0 %v3678
    %3812 = vmatprep.subr.bf16.mxu0 0
    %3813 = vmatpush1.bf16.msra.mxu0 %v3679
    %3814 = vmatprep.subr.bf16.mxu0 0
    %3815 = vmatpush1.bf16.msra.mxu0 %v3680
    %3816 = vmatprep.subr.bf16.mxu0 0
    %3817 = vmatpush1.bf16.msra.mxu0 %v3681
    %3818 = vmatprep.subr.bf16.mxu0 0
    %3819 = vmatpush1.bf16.msra.mxu0 %v3682
    %3820 = vmatprep.subr.bf16.mxu0 0
    %3821 = vmatpush1.bf16.msra.mxu0 %v3683
    %3822 = vmatprep.subr.bf16.mxu0 0
    %3823 = vmatpush1.bf16.msra.mxu0 %v3684
    %3824 = vmatprep.subr.bf16.mxu0 0
    %3825 = vmatpush1.bf16.msra.mxu0 %v3685
    %3826 = vmatprep.subr.bf16.mxu0 0
    %3827 = vmatpush1.bf16.msra.mxu0 %v3686
    %3828 = vmatprep.subr.bf16.mxu0 0
    %3829 = vmatpush1.bf16.msra.mxu0 %v3687
    %3830 = vmatprep.subr.bf16.mxu0 0
    %3831 = vmatpush1.bf16.msra.mxu0 %v3688
    %3832 = vmatprep.subr.bf16.mxu0 0
    %3833 = vmatpush1.bf16.msra.mxu0 %v3689
    %3834 = vmatprep.mubr.bf16.mxu0 %v3276
    %3835 = vmatmul.mubr.bf16.gmra.mrb[0].mxu0 %v3275
    %v3836 = vpop.f32.mrb[0].mxu0
    %v3837 = vadd.f32 %v3416, %v3836
    %v3838 = vpop.f32.mrb[0].mxu0
    %v3839 = vpop.f32.mrb[0].mxu0
    %v3840 = vadd.f32 %v3416, %v3839
    %v3841 = vpop.f32.mrb[0].mxu0
    %3842 = vdwg.mxu0
    %3843 = vmatprep.subr.bf16.mxu0 0
    %3844 = vmatpush1.bf16.msra.mxu0 %v3690
    %3845 = vmatprep.subr.bf16.mxu0 0
    %3846 = vmatpush1.bf16.msra.mxu0 %v3691
    %3847 = vmatprep.subr.bf16.mxu0 0
    %3848 = vmatpush1.bf16.msra.mxu0 %v3692
    %3849 = vmatprep.subr.bf16.mxu0 0
    %3850 = vmatpush1.bf16.msra.mxu0 %v3693
    %3851 = vmatprep.subr.bf16.mxu0 0
    %3852 = vmatpush1.bf16.msra.mxu0 %v3694
    %3853 = vmatprep.subr.bf16.mxu0 0
    %3854 = vmatpush1.bf16.msra.mxu0 %v3695
    %3855 = vmatprep.subr.bf16.mxu0 0
    %3856 = vmatpush1.bf16.msra.mxu0 %v3696
    %3857 = vmatprep.subr.bf16.mxu0 0
    %3858 = vmatpush1.bf16.msra.mxu0 %v3697
    %3859 = vmatprep.subr.bf16.mxu0 0
    %3860 = vmatpush1.bf16.msra.mxu0 %v3698
    %3861 = vmatprep.subr.bf16.mxu0 0
    %3862 = vmatpush1.bf16.msra.mxu0 %v3699
    %3863 = vmatprep.subr.bf16.mxu0 0
    %3864 = vmatpush1.bf16.msra.mxu0 %v3700
    %3865 = vmatprep.subr.bf16.mxu0 0
    %3866 = vmatpush1.bf16.msra.mxu0 %v3701
    %3867 = vmatprep.subr.bf16.mxu0 0
    %3868 = vmatpush1.bf16.msra.mxu0 %v3702
    %3869 = vmatprep.subr.bf16.mxu0 0
    %3870 = vmatpush1.bf16.msra.mxu0 %v3703
    %3871 = vmatprep.subr.bf16.mxu0 0
    %3872 = vmatpush1.bf16.msra.mxu0 %v3704
    %3873 = vmatprep.subr.bf16.mxu0 0
    %3874 = vmatpush1.bf16.msra.mxu0 %v3705
    %3875 = vmatprep.mubr.bf16.mxu0 %v3278
    %3876 = vmatmul.mubr.bf16.gmra.mrb[0].mxu0 %v3277
    %v3877 = vpop.f32.mrb[0].mxu0
    %v3878 = vadd.f32 %v3837, %v3877
    %v3879 = vpop.f32.mrb[0].mxu0
    %v3880 = vpop.f32.mrb[0].mxu0
    %v3881 = vadd.f32 %v3840, %v3880
    %v3882 = vpop.f32.mrb[0].mxu0
    %3883 = vdwg.mxu0
    %3884 = vmatprep.subr.bf16.mxu0 0
    %3885 = vmatpush1.bf16.msra.mxu0 %v3706
    %3886 = vmatprep.subr.bf16.mxu0 0
    %3887 = vmatpush1.bf16.msra.mxu0 %v3707
    %3888 = vmatprep.subr.bf16.mxu0 0
    %3889 = vmatpush1.bf16.msra.mxu0 %v3708
    %3890 = vmatprep.subr.bf16.mxu0 0
    %3891 = vmatpush1.bf16.msra.mxu0 %v3709
    %3892 = vmatprep.subr.bf16.mxu0 0
    %3893 = vmatpush1.bf16.msra.mxu0 %v3710
    %3894 = vmatprep.subr.bf16.mxu0 0
    %3895 = vmatpush1.bf16.msra.mxu0 %v3711
    %3896 = vmatprep.subr.bf16.mxu0 0
    %3897 = vmatpush1.bf16.msra.mxu0 %v3712
    %3898 = vmatprep.subr.bf16.mxu0 0
    %3899 = vmatpush1.bf16.msra.mxu0 %v3713
    %3900 = vmatprep.subr.bf16.mxu0 0
    %3901 = vmatpush1.bf16.msra.mxu0 %v3714
    %3902 = vmatprep.subr.bf16.mxu0 0
    %3903 = vmatpush1.bf16.msra.mxu0 %v3715
    %3904 = vmatprep.subr.bf16.mxu0 0
    %3905 = vmatpush1.bf16.msra.mxu0 %v3716
    %3906 = vmatprep.subr.bf16.mxu0 0
    %3907 = vmatpush1.bf16.msra.mxu0 %v3717
    %3908 = vmatprep.subr.bf16.mxu0 0
    %3909 = vmatpush1.bf16.msra.mxu0 %v3718
    %3910 = vmatprep.subr.bf16.mxu0 0
    %3911 = vmatpush1.bf16.msra.mxu0 %v3719
    %3912 = vmatprep.subr.bf16.mxu0 0
    %3913 = vmatpush1.bf16.msra.mxu0 %v3720
    %3914 = vmatprep.subr.bf16.mxu0 0
    %3915 = vmatpush1.bf16.msra.mxu0 %v3721
    %3916 = vmatprep.mubr.bf16.mxu0 %v3280
    %3917 = vmatmul.mubr.bf16.gmra.mrb[0].mxu0 %v3279
    %v3918 = vpop.f32.mrb[0].mxu0
    %v3919 = vadd.f32 %v3878, %v3918
    %v3920 = vpop.f32.mrb[0].mxu0
    %v3921 = vpop.f32.mrb[0].mxu0
    %v3922 = vadd.f32 %v3881, %v3921
    %v3923 = vpop.f32.mrb[0].mxu0
    %3924 = vdwg.mxu0
    %3925 = vmatprep.subr.bf16.mxu0 0
    %3926 = vmatpush1.bf16.msra.mxu0 %v3722
    %3927 = vmatprep.subr.bf16.mxu0 0
    %3928 = vmatpush1.bf16.msra.mxu0 %v3723
    %3929 = vmatprep.subr.bf16.mxu0 0
    %3930 = vmatpush1.bf16.msra.mxu0 %v3724
    %3931 = vmatprep.subr.bf16.mxu0 0
    %3932 = vmatpush1.bf16.msra.mxu0 %v3725
    %3933 = vmatprep.subr.bf16.mxu0 0
    %3934 = vmatpush1.bf16.msra.mxu0 %v3726
    %3935 = vmatprep.subr.bf16.mxu0 0
    %3936 = vmatpush1.bf16.msra.mxu0 %v3727
    %3937 = vmatprep.subr.bf16.mxu0 0
    %3938 = vmatpush1.bf16.msra.mxu0 %v3728
    %3939 = vmatprep.subr.bf16.mxu0 0
    %3940 = vmatpush1.bf16.msra.mxu0 %v3729
    %3941 = vmatprep.subr.bf16.mxu0 0
    %3942 = vmatpush1.bf16.msra.mxu0 %v3730
    %3943 = vmatprep.subr.bf16.mxu0 0
    %3944 = vmatpush1.bf16.msra.mxu0 %v3731
    %3945 = vmatprep.subr.bf16.mxu0 0
    %3946 = vmatpush1.bf16.msra.mxu0 %v3732
    %3947 = vmatprep.subr.bf16.mxu0 0
    %3948 = vmatpush1.bf16.msra.mxu0 %v3733
    %3949 = vmatprep.subr.bf16.mxu0 0
    %3950 = vmatpush1.bf16.msra.mxu0 %v3734
    %3951 = vmatprep.subr.bf16.mxu0 0
    %3952 = vmatpush1.bf16.msra.mxu0 %v3735
    %3953 = vmatprep.subr.bf16.mxu0 0
    %3954 = vmatpush1.bf16.msra.mxu0 %v3736
    %3955 = vmatprep.subr.bf16.mxu0 0
    %3956 = vmatpush1.bf16.msra.mxu0 %v3737
    %3957 = vmatprep.mubr.bf16.mxu0 %v3282
    %3958 = vmatmul.mubr.bf16.gmra.mrb[0].mxu0 %v3281
    %v3959 = vpop.f32.mrb[0].mxu0
    %v3960 = vadd.f32 %v3919, %v3959
    %v3961 = vpop.f32.mrb[0].mxu0
    %v3962 = vpop.f32.mrb[0].mxu0
    %v3963 = vadd.f32 %v3922, %v3962
    %v3964 = vpop.f32.mrb[0].mxu0
    %3965 = vdwg.mxu0
    %3966 = vmax.xlane.f32.xlu0 %v3960
    %v3967 = vpop.xlane.xlu0 %3966
    %3968 = vmax.xlane.f32.xlu0 %v3963
    %v3969 = vpop.xlane.xlu0 %3968
    %v3970 = vsub.f32 %v3960, %v3967
    %v3971 = vsub.f32 %v3963, %v3969
    %v3972 = vmul.f32 %v3970, 1.442695
    %v3973 = vpow.pop %v3972
    %v3974 = vmul.f32 %v3971, 1.442695
    %v3975 = vpow.pop %v3974
    %3976 = vadd.xlane.f32.xlu0 %v3973
    %v3977 = vpop.xlane.xlu0 %3976
    %3978 = vadd.xlane.f32.xlu0 %v3975
    %v3979 = vpop.xlane.xlu0 %3978
    %v3980 = vlog2.pop %v3977
    %v3981 = vmul.f32 %v3980, 0.6931472
    %v3982 = vlog2.pop %v3979
    %v3983 = vmul.f32 %v3982, 0.6931472
    %v3984 = vsub.f32 %v3970, %v3981
    %v3985 = vsub.f32 %v3971, %v3983
    %3986 = vst [vmem:[%s5] sm:$0xff] %v3984
    %3987 = vst [vmem:[%s5 + $0x8] sm:$0xff] %v3985
    // Predicated region
    $region38: #{mynet_forward.1} parent=1 // pred_check
      _
    $region39: #{mynet_forward.1} parent=1 // pred_check_branch
      %3989 = sbr.rel (0) target = $region41
    $region40: #{mynet_forward.1} parent=1 // pred_region
      _
    $region41: #{mynet_forward.1} parent=1 // pred_fallthru
      _
    // Predicated region
    $region42: #{mynet_forward.1} parent=1 // pred_check
      _
    $region43: #{mynet_forward.1} parent=1 // pred_check_branch
      %3991 = sbr.rel (0) target = $region45
    $region44: #{mynet_forward.1} parent=1 // pred_region
      _
    $region45: #{mynet_forward.1} parent=1 // pred_fallthru
      _
    %3992 = vsyncpa [#allocation3], 1
    %3993 = vsyncpa [#allocation5], 1
    %3994 = vsyncpa [#allocation8], 1

</llo_original>
